<compile_context>
chip_gen: v7x
topology: tpu7x:2x2x1
jax: 0.10.0
libtpu: 0.0.40
codegen_flags: <defaults>
</compile_context>

<pallas_src>
import functools

import jax
import jax.numpy as jnp
from jax.experimental import pallas as pl
from jax.experimental.pallas import tpu as pltpu

# ----------------------------- module config -------------------------------
NF = 4                                              # input channels
NUM_FRAMES = 1                                      # must be 1
IMAGE_SIZE = 16
PATCH_SIZE = 4
HEADS = max(1, PATCH_SIZE // 2)                     # 2
NUM_PATCHES = (IMAGE_SIZE // PATCH_SIZE) ** 2       # 16
PATCH_DIM = NF * PATCH_SIZE * PATCH_SIZE            # 64
DIM = PATCH_DIM // 16                               # 4
DH = DIM // HEADS                                   # 2
SCALE = (DIM / HEADS) ** -0.5                       # torch: (dim/heads)**-0.5
QKV_DIM = 3 * DIM                                   # 12


# ------------------------------ Pallas kernel ------------------------------
def _vit_spatial_kernel(x_ref, wqkv_ref, bqkv_ref, wout_ref, bout_ref, o_ref):
    """Batch-on-lanes ViT spatial attention for one tile of TB batch elements.

    x_ref    : (Np, patch_dim, TB)   [patch n, patch element p, batch b] - batch on lanes
    wqkv_ref : (Np, 12, patch_dim)   fused embed+pos+QKV weight, broadcast over patches
    bqkv_ref : (Np, 12, 1)           fused bias ((embed bias + pos) through QKV)
    wout_ref : (Np, patch_dim, dim)  output projection weight, broadcast over patches
    bout_ref : (1, patch_dim, 1)     output projection bias
    o_ref    : (Np, patch_dim, TB)
    """
    # Fused embed + pos + Q/K/V: patch-batched (12,64)@(64,TB) MXU matmuls.
    qkv = jax.lax.dot_general(
        wqkv_ref[...], x_ref[...],
        dimension_numbers=(((2,), (1,)), ((0,), (0,))),
        preferred_element_type=jnp.float32)                        # (Np, 12, TB)
    qkv = qkv + bqkv_ref[...]

    # Per-channel (Np, TB) slabs: patches on sublanes, batch on lanes (lane-dense VPU).
    q = [qkv[:, c, :] for c in range(DIM)]                         # scale folded into W
    k = [qkv[:, DIM + c, :] for c in range(DIM)]
    v = [qkv[:, 2 * DIM + c, :] for c in range(DIM)]

    outs = []
    for h in range(HEADS):                                         # static unroll (2)
        c0 = h * DH
        # scores s[n, m, b] = sum_d q[n, c0+d, b] * k[m, c0+d, b]   (VPU broadcasts)
        s = q[c0][:, None, :] * k[c0][None, :, :]                  # (Np, Np, TB)
        for d in range(1, DH):
            s = s + q[c0 + d][:, None, :] * k[c0 + d][None, :, :]
        # softmax over m (axis=1); exact division (denominator is only (Np, 1, TB)).
        s = s - jnp.max(s, axis=1, keepdims=True)
        p = jnp.exp(s)
        attn = p * (1.0 / jnp.sum(p, axis=1, keepdims=True))
        # out[n, c, b] = sum_m attn[n, m, b] * v[m, c, b]           (VPU + sublane reduce)
        for d in range(DH):
            outs.append(jnp.sum(attn * v[c0 + d][None, :, :], axis=1))   # (Np, TB)

    out = jnp.concatenate([oc[:, None, :] for oc in outs], axis=1)       # (Np, dim, TB)

    # linear_out: patch-batched (64,4)@(4,TB) MXU matmuls; batch stays on lanes -> the
    # store is fully lane-dense.
    y = jax.lax.dot_general(
        wout_ref[...], out,
        dimension_numbers=(((2,), (1,)), ((0,), (0,))),
        preferred_element_type=jnp.float32)                         # (Np, patch_dim, TB)
    o_ref[...] = (y + bout_ref[...]).astype(o_ref.dtype)


# ------------------------------ pallas_call wrapper -------------------------
def _choose_tb(bn, block_bn):
    """Batch tile (lane) size: multiple of 128, and >= 2 grid blocks when possible."""
    if bn <= 128:
        return bn                          # full-extent lane block (allowed)
    half = -(-bn // 2)                     # cdiv(bn, 2): give both v7x TCs work
    half_up = -(-half // 128) * 128
    return max(128, min(block_bn, half_up))


def _vit_spatial_patches(xt, w_qkv_b, b_qkv_b, w_out_b, b_out_b, *, block_bn):
    """xt: (Np, patch_dim, BN) -> y: (Np, patch_dim, BN), batch on lanes."""
    bn = xt.shape[-1]
    tb = _choose_tb(bn, block_bn)
    n_blocks = pl.cdiv(bn, tb)             # ragged last block masked by Pallas (no pad)

    return pl.pallas_call(
        _vit_spatial_kernel,
        out_shape=jax.ShapeDtypeStruct((NUM_PATCHES, PATCH_DIM, bn), jnp.float32),
        grid=(n_blocks,),
        in_specs=[
            pl.BlockSpec((NUM_PATCHES, PATCH_DIM, tb), lambda i: (0, 0, i)),   # x tile
            pl.BlockSpec((NUM_PATCHES, QKV_DIM, PATCH_DIM), lambda i: (0, 0, 0)),
            pl.BlockSpec((NUM_PATCHES, QKV_DIM, 1), lambda i: (0, 0, 0)),
            pl.BlockSpec((NUM_PATCHES, PATCH_DIM, DIM), lambda i: (0, 0, 0)),
            pl.BlockSpec((1, PATCH_DIM, 1), lambda i: (0, 0, 0)),
        ],
        out_specs=pl.BlockSpec((NUM_PATCHES, PATCH_DIM, tb), lambda i: (0, 0, i)),
        compiler_params=pltpu.CompilerParams(
            dimension_semantics=("parallel",),          # batch blocks shard across TCs
            vmem_limit_bytes=40 * 1024 * 1024),         # headroom for TB=512 (v5e)
    )(xt, w_qkv_b, b_qkv_b, w_out_b, b_out_b)


# --------------------------- weight fusion (wrapper) ------------------------
def _fuse_params(params):
    """Fold embed + pos + Q/K/V (scale into Q) and lay weights out for the kernel."""
    wcat = jnp.concatenate(
        [params["wq"] * SCALE, params["wk"], params["wv"]], axis=1)          # (4, 12)
    w_qkv = params["we"] @ wcat                                              # (64, 12)
    b_qkv = (params["be"] + params["pos"]) @ wcat                            # (16, 12)
    w_qkv_b = jnp.broadcast_to(w_qkv.T[None], (NUM_PATCHES, QKV_DIM, PATCH_DIM))
    b_qkv_b = b_qkv[:, :, None]                                              # (16, 12, 1)
    w_out_b = jnp.broadcast_to(params["wo"].T[None], (NUM_PATCHES, PATCH_DIM, DIM))
    b_out_b = params["bo"].reshape(1, PATCH_DIM, 1)                          # (1, 64, 1)
    return w_qkv_b, b_qkv_b, w_out_b, b_out_b


# ------------------------------ JAX wrapper --------------------------------
@functools.partial(jax.jit, static_argnames=("block_bn",))
def vit_spatial_forward(x, params, block_bn=512):
    """x: (B, N, C, H, W) float32, N == 1."""
    B, N, C, H, W = x.shape
    assert N == NUM_FRAMES and H == W == IMAGE_SIZE and C == NF
    P = PATCH_SIZE
    hp = H // P
    BN = B * N

    # F.unfold(kernel=P, stride=P) + permute, with the batch axis moved LAST so the
    # kernel sees batch on lanes (the extra transpose is fused into the unfold permute).
    xt = x.reshape(BN, C, hp, P, hp, P).transpose(2, 4, 1, 3, 5, 0)
    xt = xt.reshape(NUM_PATCHES, PATCH_DIM, BN)          # [n, p, b]

    w_qkv_b, b_qkv_b, w_out_b, b_out_b = _fuse_params(params)
    yt = _vit_spatial_patches(xt, w_qkv_b, b_qkv_b, w_out_b, b_out_b, block_bn=block_bn)

    # permute back + F.fold(output_size=(H,W), kernel=P, stride=P)
    out = yt.reshape(hp, hp, C, P, P, BN).transpose(5, 2, 0, 3, 1, 4)
    return out.reshape(BN, C, H, W).reshape(B, N, C, H, W)


# --------------------------- pure-JAX reference ----------------------------
def vit_spatial_reference(x, params):
    B, N, C, H, W = x.shape
    P = PATCH_SIZE
    hp = H // P
    BN = B * N
    xp = x.reshape(BN, C, hp, P, hp, P).transpose(0, 2, 4, 1, 3, 5)
    xp = xp.reshape(BN, NUM_PATCHES, PATCH_DIM)
    emb = xp @ params["we"] + params["be"] + params["pos"]
    q = (emb @ params["wq"]).reshape(BN, NUM_PATCHES, HEADS, DH).transpose(0, 2, 1, 3)
    k = (emb @ params["wk"]).reshape(BN, NUM_PATCHES, HEADS, DH).transpose(0, 2, 1, 3)
    v = (emb @ params["wv"]).reshape(BN, NUM_PATCHES, HEADS, DH).transpose(0, 2, 1, 3)
    dots = jnp.einsum("bhnd,bhmd->bhnm", q, k) * SCALE
    attn = jax.nn.softmax(dots, axis=-1)
    o = jnp.einsum("bhnm,bhmd->bhnd", attn, v)
    o = o.transpose(0, 2, 1, 3).reshape(BN, NUM_PATCHES, DIM)
    o = o @ params["wo"] + params["bo"]
    o = o.reshape(BN, hp, hp, C, P, P).transpose(0, 3, 1, 4, 2, 5)
    return o.reshape(B, N, C, H, W)


# ------------------------------- parameters --------------------------------
def init_params(key):
    ks = jax.random.split(key, 8)
    s = lambda fan_in: 1.0 / jnp.sqrt(fan_in)
    return {
        # stored as (in, out): y = x @ W + b  (equivalent to torch x @ W_t.T + b)
        "we": jax.random.normal(ks[0], (PATCH_DIM, DIM), jnp.float32) * s(PATCH_DIM),
        "be": jax.random.normal(ks[1], (1, DIM), jnp.float32) * s(PATCH_DIM),
        "pos": jax.random.normal(ks[2], (NUM_PATCHES, DIM), jnp.float32),
        "wq": jax.random.normal(ks[3], (DIM, DIM), jnp.float32) * s(DIM),
        "wk": jax.random.normal(ks[4], (DIM, DIM), jnp.float32) * s(DIM),
        "wv": jax.random.normal(ks[5], (DIM, DIM), jnp.float32) * s(DIM),
        "wo": jax.random.normal(ks[6], (DIM, PATCH_DIM), jnp.float32) * s(DIM),
        "bo": jax.random.normal(ks[7], (1, PATCH_DIM), jnp.float32) * s(DIM),
    }


# TODO(synk): the attn_visual branch (dumping dots/attn rows to a text file) has no
# Pallas equivalent and is disabled in the reference module (attn_visual=False); skipped.

if __name__ == "__main__":
    key = jax.random.PRNGKey(0)
    kx, kp = jax.random.split(key)
    params = init_params(kp)

    # Primary small case: B=2 (single grid block, full-extent lane tile).
    x = jax.random.normal(kx, (2, NUM_FRAMES, NF, IMAGE_SIZE, IMAGE_SIZE), jnp.float32)
    out = jax.block_until_ready(vit_spatial_forward(x, params))
    ref = jax.block_until_ready(vit_spatial_reference(x, params))
    assert out.shape == x.shape
    err = float(jnp.max(jnp.abs(out - ref)))
    # softmax is exact now; tolerance only covers MXU-vs-XLA f32 matmul pass differences
    assert err < 1e-2, f"max abs err {err}"

    # Secondary case: B=130 exercises multi-block grid + ragged (masked) final block.
    x2 = jax.random.normal(jax.random.PRNGKey(1),
                           (130, NUM_FRAMES, NF, IMAGE_SIZE, IMAGE_SIZE), jnp.float32)
    out2 = jax.block_until_ready(vit_spatial_forward(x2, params))
    ref2 = jax.block_until_ready(vit_spatial_reference(x2, params))
    err2 = float(jnp.max(jnp.abs(out2 - ref2)))
    assert err2 < 1e-2, f"max abs err {err2}"

    print("KERNEL_OK")
</pallas_src>

<mosaic_0001>
module attributes {stable_mosaic.version = 11 : i64} {
  func.func @_vit_spatial_kernel(%arg0: i32, %arg1: memref<16x64x2xf32, #tpu.memory_space<vmem>>, %arg2: memref<16x12x64xf32, #tpu.memory_space<vmem>>, %arg3: memref<16x12x1xf32, #tpu.memory_space<vmem>>, %arg4: memref<16x64x4xf32, #tpu.memory_space<vmem>>, %arg5: memref<1x64x1xf32, #tpu.memory_space<vmem>>, %arg6: memref<16x64x2xf32, #tpu.memory_space<vmem>>) attributes {dimension_semantics = [#tpu.dimension_semantics<parallel>], iteration_bounds = array<i64: 1>, scalar_prefetch = 0 : i64, scratch_operands = 0 : i64, tpu.core_type = #tpu.core_type<tc>, window_params = [{transform_indices = @transform_0, window_bounds = array<i64: 16, 64, 2>}, {pipeline_mode = #tpu.pipeline_mode<synchronous>, transform_indices = @transform_1, window_bounds = array<i64: 16, 12, 64>}, {pipeline_mode = #tpu.pipeline_mode<synchronous>, transform_indices = @transform_2, window_bounds = array<i64: 16, 12, 1>}, {pipeline_mode = #tpu.pipeline_mode<synchronous>, transform_indices = @transform_3, window_bounds = array<i64: 16, 64, 4>}, {pipeline_mode = #tpu.pipeline_mode<synchronous>, transform_indices = @transform_4, window_bounds = array<i64: 1, 64, 1>}, {transform_indices = @transform_5, window_bounds = array<i64: 16, 64, 2>}]} {
    %c0 = arith.constant 0 : index
    %c0_0 = arith.constant 0 : index
    %c0_1 = arith.constant 0 : index
    %0 = vector.load %arg2[%c0, %c0_0, %c0_1] : memref<16x12x64xf32, #tpu.memory_space<vmem>>, vector<16x12x64xf32>
    %c0_2 = arith.constant 0 : index
    %c0_3 = arith.constant 0 : index
    %c0_4 = arith.constant 0 : index
    %1 = vector.load %arg1[%c0_2, %c0_3, %c0_4] : memref<16x64x2xf32, #tpu.memory_space<vmem>>, vector<16x64x2xf32>
    %cst = arith.constant dense<0.000000e+00> : vector<16x12x2xf32>
    %2 = tpu.matmul %0, %1, %cst {dimension_numbers = #tpu.dot_dimension_numbers<[2], [1], [1], [2], [0, 0, 0, 1, 1, 2], [0], [0]>} : vector<16x12x64xf32>, vector<16x64x2xf32>, vector<16x12x2xf32> -> vector<16x12x2xf32>
    %c0_5 = arith.constant 0 : index
    %c0_6 = arith.constant 0 : index
    %c0_7 = arith.constant 0 : index
    %3 = vector.load %arg3[%c0_5, %c0_6, %c0_7] : memref<16x12x1xf32, #tpu.memory_space<vmem>>, vector<16x12x1xf32>
    %4 = vector.broadcast %3 : vector<16x12x1xf32> to vector<16x12x2xf32>
    %5 = arith.addf %2, %4 : vector<16x12x2xf32>
    %6 = vector.extract_strided_slice %5 {offsets = [0, 0, 0], sizes = [16, 1, 2], strides = [1, 1, 1]} : vector<16x12x2xf32> to vector<16x1x2xf32>
    %7 = vector.shape_cast %6 : vector<16x1x2xf32> to vector<16x2xf32>
    %8 = vector.extract_strided_slice %5 {offsets = [0, 1, 0], sizes = [16, 1, 2], strides = [1, 1, 1]} : vector<16x12x2xf32> to vector<16x1x2xf32>
    %9 = vector.shape_cast %8 : vector<16x1x2xf32> to vector<16x2xf32>
    %10 = vector.extract_strided_slice %5 {offsets = [0, 2, 0], sizes = [16, 1, 2], strides = [1, 1, 1]} : vector<16x12x2xf32> to vector<16x1x2xf32>
    %11 = vector.shape_cast %10 : vector<16x1x2xf32> to vector<16x2xf32>
    %12 = vector.extract_strided_slice %5 {offsets = [0, 3, 0], sizes = [16, 1, 2], strides = [1, 1, 1]} : vector<16x12x2xf32> to vector<16x1x2xf32>
    %13 = vector.shape_cast %12 : vector<16x1x2xf32> to vector<16x2xf32>
    %14 = vector.extract_strided_slice %5 {offsets = [0, 4, 0], sizes = [16, 1, 2], strides = [1, 1, 1]} : vector<16x12x2xf32> to vector<16x1x2xf32>
    %15 = vector.shape_cast %14 : vector<16x1x2xf32> to vector<16x2xf32>
    %16 = vector.extract_strided_slice %5 {offsets = [0, 5, 0], sizes = [16, 1, 2], strides = [1, 1, 1]} : vector<16x12x2xf32> to vector<16x1x2xf32>
    %17 = vector.shape_cast %16 : vector<16x1x2xf32> to vector<16x2xf32>
    %18 = vector.extract_strided_slice %5 {offsets = [0, 6, 0], sizes = [16, 1, 2], strides = [1, 1, 1]} : vector<16x12x2xf32> to vector<16x1x2xf32>
    %19 = vector.shape_cast %18 : vector<16x1x2xf32> to vector<16x2xf32>
    %20 = vector.extract_strided_slice %5 {offsets = [0, 7, 0], sizes = [16, 1, 2], strides = [1, 1, 1]} : vector<16x12x2xf32> to vector<16x1x2xf32>
    %21 = vector.shape_cast %20 : vector<16x1x2xf32> to vector<16x2xf32>
    %22 = vector.extract_strided_slice %5 {offsets = [0, 8, 0], sizes = [16, 1, 2], strides = [1, 1, 1]} : vector<16x12x2xf32> to vector<16x1x2xf32>
    %23 = vector.shape_cast %22 : vector<16x1x2xf32> to vector<16x2xf32>
    %24 = vector.extract_strided_slice %5 {offsets = [0, 9, 0], sizes = [16, 1, 2], strides = [1, 1, 1]} : vector<16x12x2xf32> to vector<16x1x2xf32>
    %25 = vector.shape_cast %24 : vector<16x1x2xf32> to vector<16x2xf32>
    %26 = vector.extract_strided_slice %5 {offsets = [0, 10, 0], sizes = [16, 1, 2], strides = [1, 1, 1]} : vector<16x12x2xf32> to vector<16x1x2xf32>
    %27 = vector.shape_cast %26 : vector<16x1x2xf32> to vector<16x2xf32>
    %28 = vector.extract_strided_slice %5 {offsets = [0, 11, 0], sizes = [16, 1, 2], strides = [1, 1, 1]} : vector<16x12x2xf32> to vector<16x1x2xf32>
    %29 = vector.shape_cast %28 : vector<16x1x2xf32> to vector<16x2xf32>
    %30 = vector.shape_cast %7 : vector<16x2xf32> to vector<16x1x2xf32>
    %31 = vector.shape_cast %15 : vector<16x2xf32> to vector<1x16x2xf32>
    %32 = vector.broadcast %30 : vector<16x1x2xf32> to vector<16x16x2xf32>
    %33 = vector.broadcast %31 : vector<1x16x2xf32> to vector<16x16x2xf32>
    %34 = arith.mulf %32, %33 : vector<16x16x2xf32>
    %35 = vector.shape_cast %9 : vector<16x2xf32> to vector<16x1x2xf32>
    %36 = vector.shape_cast %17 : vector<16x2xf32> to vector<1x16x2xf32>
    %37 = vector.broadcast %35 : vector<16x1x2xf32> to vector<16x16x2xf32>
    %38 = vector.broadcast %36 : vector<1x16x2xf32> to vector<16x16x2xf32>
    %39 = arith.mulf %37, %38 : vector<16x16x2xf32>
    %40 = arith.addf %34, %39 : vector<16x16x2xf32>
    %cst_8 = arith.constant dense<0xFF800000> : vector<16x2xf32>
    %41 = vector.multi_reduction <maximumf>, %40, %cst_8 [1] : vector<16x16x2xf32> to vector<16x2xf32>
    %42 = vector.shape_cast %41 : vector<16x2xf32> to vector<16x1x2xf32>
    %43 = vector.broadcast %42 : vector<16x1x2xf32> to vector<16x16x2xf32>
    %44 = arith.subf %40, %43 : vector<16x16x2xf32>
    %45 = math.exp %44 : vector<16x16x2xf32>
    %cst_9 = arith.constant dense<0.000000e+00> : vector<16x2xf32>
    %46 = vector.multi_reduction <add>, %45, %cst_9 [1] : vector<16x16x2xf32> to vector<16x2xf32>
    %47 = vector.shape_cast %46 : vector<16x2xf32> to vector<16x1x2xf32>
    %cst_10 = arith.constant 1.000000e+00 : f32
    %48 = vector.broadcast %cst_10 : f32 to vector<16x1x2xf32>
    %49 = arith.divf %48, %47 : vector<16x1x2xf32>
    %50 = vector.broadcast %49 : vector<16x1x2xf32> to vector<16x16x2xf32>
    %51 = arith.mulf %45, %50 : vector<16x16x2xf32>
    %52 = vector.shape_cast %23 : vector<16x2xf32> to vector<1x16x2xf32>
    %53 = vector.broadcast %52 : vector<1x16x2xf32> to vector<16x16x2xf32>
    %54 = arith.mulf %51, %53 : vector<16x16x2xf32>
    %cst_11 = arith.constant dense<0.000000e+00> : vector<16x2xf32>
    %55 = vector.multi_reduction <add>, %54, %cst_11 [1] : vector<16x16x2xf32> to vector<16x2xf32>
    %56 = vector.shape_cast %25 : vector<16x2xf32> to vector<1x16x2xf32>
    %57 = vector.broadcast %56 : vector<1x16x2xf32> to vector<16x16x2xf32>
    %58 = arith.mulf %51, %57 : vector<16x16x2xf32>
    %cst_12 = arith.constant dense<0.000000e+00> : vector<16x2xf32>
    %59 = vector.multi_reduction <add>, %58, %cst_12 [1] : vector<16x16x2xf32> to vector<16x2xf32>
    %60 = vector.shape_cast %11 : vector<16x2xf32> to vector<16x1x2xf32>
    %61 = vector.shape_cast %19 : vector<16x2xf32> to vector<1x16x2xf32>
    %62 = vector.broadcast %60 : vector<16x1x2xf32> to vector<16x16x2xf32>
    %63 = vector.broadcast %61 : vector<1x16x2xf32> to vector<16x16x2xf32>
    %64 = arith.mulf %62, %63 : vector<16x16x2xf32>
    %65 = vector.shape_cast %13 : vector<16x2xf32> to vector<16x1x2xf32>
    %66 = vector.shape_cast %21 : vector<16x2xf32> to vector<1x16x2xf32>
    %67 = vector.broadcast %65 : vector<16x1x2xf32> to vector<16x16x2xf32>
    %68 = vector.broadcast %66 : vector<1x16x2xf32> to vector<16x16x2xf32>
    %69 = arith.mulf %67, %68 : vector<16x16x2xf32>
    %70 = arith.addf %64, %69 : vector<16x16x2xf32>
    %cst_13 = arith.constant dense<0xFF800000> : vector<16x2xf32>
    %71 = vector.multi_reduction <maximumf>, %70, %cst_13 [1] : vector<16x16x2xf32> to vector<16x2xf32>
    %72 = vector.shape_cast %71 : vector<16x2xf32> to vector<16x1x2xf32>
    %73 = vector.broadcast %72 : vector<16x1x2xf32> to vector<16x16x2xf32>
    %74 = arith.subf %70, %73 : vector<16x16x2xf32>
    %75 = math.exp %74 : vector<16x16x2xf32>
    %cst_14 = arith.constant dense<0.000000e+00> : vector<16x2xf32>
    %76 = vector.multi_reduction <add>, %75, %cst_14 [1] : vector<16x16x2xf32> to vector<16x2xf32>
    %77 = vector.shape_cast %76 : vector<16x2xf32> to vector<16x1x2xf32>
    %cst_15 = arith.constant 1.000000e+00 : f32
    %78 = vector.broadcast %cst_15 : f32 to vector<16x1x2xf32>
    %79 = arith.divf %78, %77 : vector<16x1x2xf32>
    %80 = vector.broadcast %79 : vector<16x1x2xf32> to vector<16x16x2xf32>
    %81 = arith.mulf %75, %80 : vector<16x16x2xf32>
    %82 = vector.shape_cast %27 : vector<16x2xf32> to vector<1x16x2xf32>
    %83 = vector.broadcast %82 : vector<1x16x2xf32> to vector<16x16x2xf32>
    %84 = arith.mulf %81, %83 : vector<16x16x2xf32>
    %cst_16 = arith.constant dense<0.000000e+00> : vector<16x2xf32>
    %85 = vector.multi_reduction <add>, %84, %cst_16 [1] : vector<16x16x2xf32> to vector<16x2xf32>
    %86 = vector.shape_cast %29 : vector<16x2xf32> to vector<1x16x2xf32>
    %87 = vector.broadcast %86 : vector<1x16x2xf32> to vector<16x16x2xf32>
    %88 = arith.mulf %81, %87 : vector<16x16x2xf32>
    %cst_17 = arith.constant dense<0.000000e+00> : vector<16x2xf32>
    %89 = vector.multi_reduction <add>, %88, %cst_17 [1] : vector<16x16x2xf32> to vector<16x2xf32>
    %90 = vector.shape_cast %55 : vector<16x2xf32> to vector<16x1x2xf32>
    %91 = vector.shape_cast %59 : vector<16x2xf32> to vector<16x1x2xf32>
    %92 = vector.shape_cast %85 : vector<16x2xf32> to vector<16x1x2xf32>
    %93 = vector.shape_cast %89 : vector<16x2xf32> to vector<16x1x2xf32>
    %94 = tpu.concatenate %90, %91, %92, %93 in 1 : vector<16x1x2xf32>, vector<16x1x2xf32>, vector<16x1x2xf32>, vector<16x1x2xf32> -> vector<16x4x2xf32>
    %c0_18 = arith.constant 0 : index
    %c0_19 = arith.constant 0 : index
    %c0_20 = arith.constant 0 : index
    %95 = vector.load %arg4[%c0_18, %c0_19, %c0_20] : memref<16x64x4xf32, #tpu.memory_space<vmem>>, vector<16x64x4xf32>
    %cst_21 = arith.constant dense<0.000000e+00> : vector<16x64x2xf32>
    %96 = tpu.matmul %95, %94, %cst_21 {dimension_numbers = #tpu.dot_dimension_numbers<[2], [1], [1], [2], [0, 0, 0, 1, 1, 2], [0], [0]>} : vector<16x64x4xf32>, vector<16x4x2xf32>, vector<16x64x2xf32> -> vector<16x64x2xf32>
    %c0_22 = arith.constant 0 : index
    %c0_23 = arith.constant 0 : index
    %c0_24 = arith.constant 0 : index
    %97 = vector.load %arg5[%c0_22, %c0_23, %c0_24] : memref<1x64x1xf32, #tpu.memory_space<vmem>>, vector<1x64x1xf32>
    %98 = vector.broadcast %97 : vector<1x64x1xf32> to vector<16x64x2xf32>
    %99 = arith.addf %96, %98 : vector<16x64x2xf32>
    %c0_25 = arith.constant 0 : index
    %c0_26 = arith.constant 0 : index
    %c0_27 = arith.constant 0 : index
    %100 = vector.load %arg6[%c0_25, %c0_26, %c0_27] : memref<16x64x2xf32, #tpu.memory_space<vmem>>, vector<16x64x2xf32>
    tpu.vector_store %arg6[%c0_25, %c0_26, %c0_27], %99 {strides = array<i32>} : memref<16x64x2xf32, #tpu.memory_space<vmem>>, vector<16x64x2xf32>,
    return
  }
  func.func @transform_0(%arg0: i32) -> (i32, i32, i32) {
    %c0_i32 = arith.constant 0 : i32
    %c0_i32_0 = arith.constant 0 : i32
    %c0_i32_1 = arith.constant 0 : i32
    return %c0_i32, %c0_i32_0, %arg0 : i32, i32, i32
  }
  func.func @transform_1(%arg0: i32) -> (i32, i32, i32) {
    %c0_i32 = arith.constant 0 : i32
    %c0_i32_0 = arith.constant 0 : i32
    %c0_i32_1 = arith.constant 0 : i32
    %c0_i32_2 = arith.constant 0 : i32
    return %c0_i32, %c0_i32_0, %c0_i32_1 : i32, i32, i32
  }
  func.func @transform_2(%arg0: i32) -> (i32, i32, i32) {
    %c0_i32 = arith.constant 0 : i32
    %c0_i32_0 = arith.constant 0 : i32
    %c0_i32_1 = arith.constant 0 : i32
    %c0_i32_2 = arith.constant 0 : i32
    return %c0_i32, %c0_i32_0, %c0_i32_1 : i32, i32, i32
  }
  func.func @transform_3(%arg0: i32) -> (i32, i32, i32) {
    %c0_i32 = arith.constant 0 : i32
    %c0_i32_0 = arith.constant 0 : i32
    %c0_i32_1 = arith.constant 0 : i32
    %c0_i32_2 = arith.constant 0 : i32
    return %c0_i32, %c0_i32_0, %c0_i32_1 : i32, i32, i32
  }
  func.func @transform_4(%arg0: i32) -> (i32, i32, i32) {
    %c0_i32 = arith.constant 0 : i32
    %c0_i32_0 = arith.constant 0 : i32
    %c0_i32_1 = arith.constant 0 : i32
    %c0_i32_2 = arith.constant 0 : i32
    return %c0_i32, %c0_i32_0, %c0_i32_1 : i32, i32, i32
  }
  func.func @transform_5(%arg0: i32) -> (i32, i32, i32) {
    %c0_i32 = arith.constant 0 : i32
    %c0_i32_0 = arith.constant 0 : i32
    %c0_i32_1 = arith.constant 0 : i32
    return %c0_i32, %c0_i32_0, %arg0 : i32, i32, i32
  }
}

</mosaic_0001>

<llo_original>
// kernel: vit_spatial_forward.1
$region0: #{vit_spatial_forward.1}
  #allocation0 [shape = 'u32[]', space=smem, size = 0x4, offset = 0x4, fixed_abs, tag = 'smem constant byte address 0x4 - core index']
  #allocation1 [shape = 'u32[144,128]{1,0:T(1,128)}', space=vmem, size = 0x12000, scoped, tag = 'internal scratch']
  %s0 = inlined_call_operand.vmem [shape: f32[16,64,2], index: 0, kind: input, shape index: {}]
  %s1 = inlined_call_operand.vmem [shape: f32[16,12,64], index: 1, kind: input, shape index: {}]
  %s2 = inlined_call_operand.vmem [shape: f32[16,12,1], index: 2, kind: input, shape index: {}]
  %s3 = inlined_call_operand.vmem [shape: f32[16,64,4], index: 3, kind: input, shape index: {}]
  %s4 = inlined_call_operand.vmem [shape: f32[1,64,1], index: 4, kind: input, shape index: {}]
  %s5 = inlined_call_operand.vmem [shape: f32[16,64,2], index: 5, kind: output, shape index: {}]
  %s6 = sld [smem:[#allocation0]]
  $region30: #{vit_spatial_forward.1} parent=0
    _
  %s8 = ssub.s32 1, %s6
  %s9 = scalar_select 0, %s8, %s6
  // Predicated region
  $region2: #{vit_spatial_forward.1} parent=0 // pred_check
    _
  $region3: #{vit_spatial_forward.1} parent=0 // pred_check_branch
    %11 = sbr.rel (0) target = $region5
  $region4: #{vit_spatial_forward.1} parent=0 // pred_region
    _
  $region5: #{vit_spatial_forward.1} parent=0 // pred_fallthru
    _
  // Predicated region
  $region6: #{vit_spatial_forward.1} parent=0 // pred_check
    _
  $region7: #{vit_spatial_forward.1} parent=0 // pred_check_branch
    %13 = sbr.rel (0) target = $region9
  $region8: #{vit_spatial_forward.1} parent=0 // pred_region
    _
  $region9: #{vit_spatial_forward.1} parent=0 // pred_fallthru
    _
  // Predicated region
  $region10: #{vit_spatial_forward.1} parent=0 // pred_check
    _
  $region11: #{vit_spatial_forward.1} parent=0 // pred_check_branch
    %15 = sbr.rel (0) target = $region13
  $region12: #{vit_spatial_forward.1} parent=0 // pred_region
    _
  $region13: #{vit_spatial_forward.1} parent=0 // pred_fallthru
    _
  // Predicated region
  $region14: #{vit_spatial_forward.1} parent=0 // pred_check
    _
  $region15: #{vit_spatial_forward.1} parent=0 // pred_check_branch
    %17 = sbr.rel (0) target = $region17
  $region16: #{vit_spatial_forward.1} parent=0 // pred_region
    _
  $region17: #{vit_spatial_forward.1} parent=0 // pred_fallthru
    _
  // Predicated region
  $region18: #{vit_spatial_forward.1} parent=0 // pred_check
    _
  $region19: #{vit_spatial_forward.1} parent=0 // pred_check_branch
    %19 = sbr.rel (0) target = $region21
  $region20: #{vit_spatial_forward.1} parent=0 // pred_region
    _
  $region21: #{vit_spatial_forward.1} parent=0 // pred_fallthru
    _
  %v20 = vld [vmem:[%s1] sm:$0xff]
  %v21 = vld [vmem:[%s1 + $0x8] sm:$0xf]
  %v22 = vld [vmem:[%s1 + $0x10] sm:$0xff]
  %v23 = vld [vmem:[%s1 + $0x18] sm:$0xf]
  %v24 = vld [vmem:[%s1 + $0x20] sm:$0xff]
  %v25 = vld [vmem:[%s1 + $0x28] sm:$0xf]
  %v26 = vld [vmem:[%s1 + $0x30] sm:$0xff]
  %v27 = vld [vmem:[%s1 + $0x38] sm:$0xf]
  %v28 = vld [vmem:[%s1 + $0x40] sm:$0xff]
  %v29 = vld [vmem:[%s1 + $0x48] sm:$0xf]
  %v30 = vld [vmem:[%s1 + $0x50] sm:$0xff]
  %v31 = vld [vmem:[%s1 + $0x58] sm:$0xf]
  %v32 = vld [vmem:[%s1 + $0x60] sm:$0xff]
  %v33 = vld [vmem:[%s1 + $0x68] sm:$0xf]
  %v34 = vld [vmem:[%s1 + $0x70] sm:$0xff]
  %v35 = vld [vmem:[%s1 + $0x78] sm:$0xf]
  %v36 = vld [vmem:[%s1 + $0x80] sm:$0xff]
  %v37 = vld [vmem:[%s1 + $0x88] sm:$0xf]
  %v38 = vld [vmem:[%s1 + $0x90] sm:$0xff]
  %v39 = vld [vmem:[%s1 + $0x98] sm:$0xf]
  %v40 = vld [vmem:[%s1 + $0xa0] sm:$0xff]
  %v41 = vld [vmem:[%s1 + $0xa8] sm:$0xf]
  %v42 = vld [vmem:[%s1 + $0xb0] sm:$0xff]
  %v43 = vld [vmem:[%s1 + $0xb8] sm:$0xf]
  %v44 = vld [vmem:[%s1 + $0xc0] sm:$0xff]
  %v45 = vld [vmem:[%s1 + $0xc8] sm:$0xf]
  %v46 = vld [vmem:[%s1 + $0xd0] sm:$0xff]
  %v47 = vld [vmem:[%s1 + $0xd8] sm:$0xf]
  %v48 = vld [vmem:[%s1 + $0xe0] sm:$0xff]
  %v49 = vld [vmem:[%s1 + $0xe8] sm:$0xf]
  %v50 = vld [vmem:[%s1 + $0xf0] sm:$0xff]
  %v51 = vld [vmem:[%s1 + $0xf8] sm:$0xf]
  %v52 = vld [vmem:[%s0] sm:$0xff]
  %v53 = vld [vmem:[%s0 + $0x8] sm:$0xff]
  %v54 = vld [vmem:[%s0 + $0x10] sm:$0xff]
  %v55 = vld [vmem:[%s0 + $0x18] sm:$0xff]
  %v56 = vld [vmem:[%s0 + $0x20] sm:$0xff]
  %v57 = vld [vmem:[%s0 + $0x28] sm:$0xff]
  %v58 = vld [vmem:[%s0 + $0x30] sm:$0xff]
  %v59 = vld [vmem:[%s0 + $0x38] sm:$0xff]
  %v60 = vld [vmem:[%s0 + $0x40] sm:$0xff]
  %v61 = vld [vmem:[%s0 + $0x48] sm:$0xff]
  %v62 = vld [vmem:[%s0 + $0x50] sm:$0xff]
  %v63 = vld [vmem:[%s0 + $0x58] sm:$0xff]
  %v64 = vld [vmem:[%s0 + $0x60] sm:$0xff]
  %v65 = vld [vmem:[%s0 + $0x68] sm:$0xff]
  %v66 = vld [vmem:[%s0 + $0x70] sm:$0xff]
  %v67 = vld [vmem:[%s0 + $0x78] sm:$0xff]
  %v68 = vld [vmem:[%s0 + $0x80] sm:$0xff]
  %v69 = vld [vmem:[%s0 + $0x88] sm:$0xff]
  %v70 = vld [vmem:[%s0 + $0x90] sm:$0xff]
  %v71 = vld [vmem:[%s0 + $0x98] sm:$0xff]
  %v72 = vld [vmem:[%s0 + $0xa0] sm:$0xff]
  %v73 = vld [vmem:[%s0 + $0xa8] sm:$0xff]
  %v74 = vld [vmem:[%s0 + $0xb0] sm:$0xff]
  %v75 = vld [vmem:[%s0 + $0xb8] sm:$0xff]
  %v76 = vld [vmem:[%s0 + $0xc0] sm:$0xff]
  %v77 = vld [vmem:[%s0 + $0xc8] sm:$0xff]
  %v78 = vld [vmem:[%s0 + $0xd0] sm:$0xff]
  %v79 = vld [vmem:[%s0 + $0xd8] sm:$0xff]
  %v80 = vld [vmem:[%s0 + $0xe0] sm:$0xff]
  %v81 = vld [vmem:[%s0 + $0xe8] sm:$0xff]
  %v82 = vld [vmem:[%s0 + $0xf0] sm:$0xff]
  %v83 = vld [vmem:[%s0 + $0xf8] sm:$0xff]
  %v84 = vld [vmem:[%s0 + $0x100] sm:$0xff]
  %v85 = vld [vmem:[%s0 + $0x108] sm:$0xff]
  %v86 = vld [vmem:[%s0 + $0x110] sm:$0xff]
  %v87 = vld [vmem:[%s0 + $0x118] sm:$0xff]
  %v88 = vld [vmem:[%s0 + $0x120] sm:$0xff]
  %v89 = vld [vmem:[%s0 + $0x128] sm:$0xff]
  %v90 = vld [vmem:[%s0 + $0x130] sm:$0xff]
  %v91 = vld [vmem:[%s0 + $0x138] sm:$0xff]
  %v92 = vld [vmem:[%s0 + $0x140] sm:$0xff]
  %v93 = vld [vmem:[%s0 + $0x148] sm:$0xff]
  %v94 = vld [vmem:[%s0 + $0x150] sm:$0xff]
  %v95 = vld [vmem:[%s0 + $0x158] sm:$0xff]
  %v96 = vld [vmem:[%s0 + $0x160] sm:$0xff]
  %v97 = vld [vmem:[%s0 + $0x168] sm:$0xff]
  %v98 = vld [vmem:[%s0 + $0x170] sm:$0xff]
  %v99 = vld [vmem:[%s0 + $0x178] sm:$0xff]
  %v100 = vld [vmem:[%s0 + $0x180] sm:$0xff]
  %v101 = vld [vmem:[%s0 + $0x188] sm:$0xff]
  %v102 = vld [vmem:[%s0 + $0x190] sm:$0xff]
  %v103 = vld [vmem:[%s0 + $0x198] sm:$0xff]
  %v104 = vld [vmem:[%s0 + $0x1a0] sm:$0xff]
  %v105 = vld [vmem:[%s0 + $0x1a8] sm:$0xff]
  %v106 = vld [vmem:[%s0 + $0x1b0] sm:$0xff]
  %v107 = vld [vmem:[%s0 + $0x1b8] sm:$0xff]
  %v108 = vld [vmem:[%s0 + $0x1c0] sm:$0xff]
  %v109 = vld [vmem:[%s0 + $0x1c8] sm:$0xff]
  %v110 = vld [vmem:[%s0 + $0x1d0] sm:$0xff]
  %v111 = vld [vmem:[%s0 + $0x1d8] sm:$0xff]
  %v112 = vld [vmem:[%s0 + $0x1e0] sm:$0xff]
  %v113 = vld [vmem:[%s0 + $0x1e8] sm:$0xff]
  %v114 = vld [vmem:[%s0 + $0x1f0] sm:$0xff]
  %v115 = vld [vmem:[%s0 + $0x1f8] sm:$0xff]
  %v116 = vld [vmem:[%s0 + $0x200] sm:$0xff]
  %v117 = vld [vmem:[%s0 + $0x208] sm:$0xff]
  %v118 = vld [vmem:[%s0 + $0x210] sm:$0xff]
  %v119 = vld [vmem:[%s0 + $0x218] sm:$0xff]
  %v120 = vld [vmem:[%s0 + $0x220] sm:$0xff]
  %v121 = vld [vmem:[%s0 + $0x228] sm:$0xff]
  %v122 = vld [vmem:[%s0 + $0x230] sm:$0xff]
  %v123 = vld [vmem:[%s0 + $0x238] sm:$0xff]
  %v124 = vld [vmem:[%s0 + $0x240] sm:$0xff]
  %v125 = vld [vmem:[%s0 + $0x248] sm:$0xff]
  %v126 = vld [vmem:[%s0 + $0x250] sm:$0xff]
  %v127 = vld [vmem:[%s0 + $0x258] sm:$0xff]
  %v128 = vld [vmem:[%s0 + $0x260] sm:$0xff]
  %v129 = vld [vmem:[%s0 + $0x268] sm:$0xff]
  %v130 = vld [vmem:[%s0 + $0x270] sm:$0xff]
  %v131 = vld [vmem:[%s0 + $0x278] sm:$0xff]
  %v132 = vld [vmem:[%s0 + $0x280] sm:$0xff]
  %v133 = vld [vmem:[%s0 + $0x288] sm:$0xff]
  %v134 = vld [vmem:[%s0 + $0x290] sm:$0xff]
  %v135 = vld [vmem:[%s0 + $0x298] sm:$0xff]
  %v136 = vld [vmem:[%s0 + $0x2a0] sm:$0xff]
  %v137 = vld [vmem:[%s0 + $0x2a8] sm:$0xff]
  %v138 = vld [vmem:[%s0 + $0x2b0] sm:$0xff]
  %v139 = vld [vmem:[%s0 + $0x2b8] sm:$0xff]
  %v140 = vld [vmem:[%s0 + $0x2c0] sm:$0xff]
  %v141 = vld [vmem:[%s0 + $0x2c8] sm:$0xff]
  %v142 = vld [vmem:[%s0 + $0x2d0] sm:$0xff]
  %v143 = vld [vmem:[%s0 + $0x2d8] sm:$0xff]
  %v144 = vld [vmem:[%s0 + $0x2e0] sm:$0xff]
  %v145 = vld [vmem:[%s0 + $0x2e8] sm:$0xff]
  %v146 = vld [vmem:[%s0 + $0x2f0] sm:$0xff]
  %v147 = vld [vmem:[%s0 + $0x2f8] sm:$0xff]
  %v148 = vld [vmem:[%s0 + $0x300] sm:$0xff]
  %v149 = vld [vmem:[%s0 + $0x308] sm:$0xff]
  %v150 = vld [vmem:[%s0 + $0x310] sm:$0xff]
  %v151 = vld [vmem:[%s0 + $0x318] sm:$0xff]
  %v152 = vld [vmem:[%s0 + $0x320] sm:$0xff]
  %v153 = vld [vmem:[%s0 + $0x328] sm:$0xff]
  %v154 = vld [vmem:[%s0 + $0x330] sm:$0xff]
  %v155 = vld [vmem:[%s0 + $0x338] sm:$0xff]
  %v156 = vld [vmem:[%s0 + $0x340] sm:$0xff]
  %v157 = vld [vmem:[%s0 + $0x348] sm:$0xff]
  %v158 = vld [vmem:[%s0 + $0x350] sm:$0xff]
  %v159 = vld [vmem:[%s0 + $0x358] sm:$0xff]
  %v160 = vld [vmem:[%s0 + $0x360] sm:$0xff]
  %v161 = vld [vmem:[%s0 + $0x368] sm:$0xff]
  %v162 = vld [vmem:[%s0 + $0x370] sm:$0xff]
  %v163 = vld [vmem:[%s0 + $0x378] sm:$0xff]
  %v164 = vld [vmem:[%s0 + $0x380] sm:$0xff]
  %v165 = vld [vmem:[%s0 + $0x388] sm:$0xff]
  %v166 = vld [vmem:[%s0 + $0x390] sm:$0xff]
  %v167 = vld [vmem:[%s0 + $0x398] sm:$0xff]
  %v168 = vld [vmem:[%s0 + $0x3a0] sm:$0xff]
  %v169 = vld [vmem:[%s0 + $0x3a8] sm:$0xff]
  %v170 = vld [vmem:[%s0 + $0x3b0] sm:$0xff]
  %v171 = vld [vmem:[%s0 + $0x3b8] sm:$0xff]
  %v172 = vld [vmem:[%s0 + $0x3c0] sm:$0xff]
  %v173 = vld [vmem:[%s0 + $0x3c8] sm:$0xff]
  %v174 = vld [vmem:[%s0 + $0x3d0] sm:$0xff]
  %v175 = vld [vmem:[%s0 + $0x3d8] sm:$0xff]
  %v176 = vld [vmem:[%s0 + $0x3e0] sm:$0xff]
  %v177 = vld [vmem:[%s0 + $0x3e8] sm:$0xff]
  %v178 = vld [vmem:[%s0 + $0x3f0] sm:$0xff]
  %v179 = vld [vmem:[%s0 + $0x3f8] sm:$0xff]
  %v180 = vld [vmem:[%s2] sm:$0xff]
  %v181 = vld [vmem:[%s2 + $0x8] sm:$0xf]
  %v182 = vld [vmem:[%s2 + $0x10] sm:$0xff]
  %v183 = vld [vmem:[%s2 + $0x18] sm:$0xf]
  %v184 = vld [vmem:[%s2 + $0x20] sm:$0xff]
  %v185 = vld [vmem:[%s2 + $0x28] sm:$0xf]
  %v186 = vld [vmem:[%s2 + $0x30] sm:$0xff]
  %v187 = vld [vmem:[%s2 + $0x38] sm:$0xf]
  %v188 = vld [vmem:[%s2 + $0x40] sm:$0xff]
  %v189 = vld [vmem:[%s2 + $0x48] sm:$0xf]
  %v190 = vld [vmem:[%s2 + $0x50] sm:$0xff]
  %v191 = vld [vmem:[%s2 + $0x58] sm:$0xf]
  %v192 = vld [vmem:[%s2 + $0x60] sm:$0xff]
  %v193 = vld [vmem:[%s2 + $0x68] sm:$0xf]
  %v194 = vld [vmem:[%s2 + $0x70] sm:$0xff]
  %v195 = vld [vmem:[%s2 + $0x78] sm:$0xf]
  %v196 = vld [vmem:[%s2 + $0x80] sm:$0xff]
  %v197 = vld [vmem:[%s2 + $0x88] sm:$0xf]
  %v198 = vld [vmem:[%s2 + $0x90] sm:$0xff]
  %v199 = vld [vmem:[%s2 + $0x98] sm:$0xf]
  %v200 = vld [vmem:[%s2 + $0xa0] sm:$0xff]
  %v201 = vld [vmem:[%s2 + $0xa8] sm:$0xf]
  %v202 = vld [vmem:[%s2 + $0xb0] sm:$0xff]
  %v203 = vld [vmem:[%s2 + $0xb8] sm:$0xf]
  %v204 = vld [vmem:[%s2 + $0xc0] sm:$0xff]
  %v205 = vld [vmem:[%s2 + $0xc8] sm:$0xf]
  %v206 = vld [vmem:[%s2 + $0xd0] sm:$0xff]
  %v207 = vld [vmem:[%s2 + $0xd8] sm:$0xf]
  %v208 = vld [vmem:[%s2 + $0xe0] sm:$0xff]
  %v209 = vld [vmem:[%s2 + $0xe8] sm:$0xf]
  %v210 = vld [vmem:[%s2 + $0xf0] sm:$0xff]
  %v211 = vld [vmem:[%s2 + $0xf8] sm:$0xf]
  %213 = vset.pattern.permute.xlu0 0
  %214 = vperm.xlu0 %213, %v180
  %v215 = vpop.permute.xlu0 %214
  %218 = vset.pattern.permute.xlu0 0
  %219 = vperm.xlu0 %218, %v181
  %v220 = vpop.permute.xlu0 %219
  %223 = vset.pattern.permute.xlu0 0
  %224 = vperm.xlu0 %223, %v182
  %v225 = vpop.permute.xlu0 %224
  %228 = vset.pattern.permute.xlu0 0
  %229 = vperm.xlu0 %228, %v183
  %v230 = vpop.permute.xlu0 %229
  %233 = vset.pattern.permute.xlu0 0
  %234 = vperm.xlu0 %233, %v184
  %v235 = vpop.permute.xlu0 %234
  %238 = vset.pattern.permute.xlu0 0
  %239 = vperm.xlu0 %238, %v185
  %v240 = vpop.permute.xlu0 %239
  %243 = vset.pattern.permute.xlu0 0
  %244 = vperm.xlu0 %243, %v186
  %v245 = vpop.permute.xlu0 %244
  %248 = vset.pattern.permute.xlu0 0
  %249 = vperm.xlu0 %248, %v187
  %v250 = vpop.permute.xlu0 %249
  %253 = vset.pattern.permute.xlu0 0
  %254 = vperm.xlu0 %253, %v188
  %v255 = vpop.permute.xlu0 %254
  %258 = vset.pattern.permute.xlu0 0
  %259 = vperm.xlu0 %258, %v189
  %v260 = vpop.permute.xlu0 %259
  %263 = vset.pattern.permute.xlu0 0
  %264 = vperm.xlu0 %263, %v190
  %v265 = vpop.permute.xlu0 %264
  %268 = vset.pattern.permute.xlu0 0
  %269 = vperm.xlu0 %268, %v191
  %v270 = vpop.permute.xlu0 %269
  %273 = vset.pattern.permute.xlu0 0
  %274 = vperm.xlu0 %273, %v192
  %v275 = vpop.permute.xlu0 %274
  %278 = vset.pattern.permute.xlu0 0
  %279 = vperm.xlu0 %278, %v193
  %v280 = vpop.permute.xlu0 %279
  %283 = vset.pattern.permute.xlu0 0
  %284 = vperm.xlu0 %283, %v194
  %v285 = vpop.permute.xlu0 %284
  %288 = vset.pattern.permute.xlu0 0
  %289 = vperm.xlu0 %288, %v195
  %v290 = vpop.permute.xlu0 %289
  %293 = vset.pattern.permute.xlu0 0
  %294 = vperm.xlu0 %293, %v196
  %v295 = vpop.permute.xlu0 %294
  %298 = vset.pattern.permute.xlu0 0
  %299 = vperm.xlu0 %298, %v197
  %v300 = vpop.permute.xlu0 %299
  %303 = vset.pattern.permute.xlu0 0
  %304 = vperm.xlu0 %303, %v198
  %v305 = vpop.permute.xlu0 %304
  %308 = vset.pattern.permute.xlu0 0
  %309 = vperm.xlu0 %308, %v199
  %v310 = vpop.permute.xlu0 %309
  %313 = vset.pattern.permute.xlu0 0
  %314 = vperm.xlu0 %313, %v200
  %v315 = vpop.permute.xlu0 %314
  %318 = vset.pattern.permute.xlu0 0
  %319 = vperm.xlu0 %318, %v201
  %v320 = vpop.permute.xlu0 %319
  %323 = vset.pattern.permute.xlu0 0
  %324 = vperm.xlu0 %323, %v202
  %v325 = vpop.permute.xlu0 %324
  %328 = vset.pattern.permute.xlu0 0
  %329 = vperm.xlu0 %328, %v203
  %v330 = vpop.permute.xlu0 %329
  %333 = vset.pattern.permute.xlu0 0
  %334 = vperm.xlu0 %333, %v204
  %v335 = vpop.permute.xlu0 %334
  %338 = vset.pattern.permute.xlu0 0
  %339 = vperm.xlu0 %338, %v205
  %v340 = vpop.permute.xlu0 %339
  %343 = vset.pattern.permute.xlu0 0
  %344 = vperm.xlu0 %343, %v206
  %v345 = vpop.permute.xlu0 %344
  %348 = vset.pattern.permute.xlu0 0
  %349 = vperm.xlu0 %348, %v207
  %v350 = vpop.permute.xlu0 %349
  %353 = vset.pattern.permute.xlu0 0
  %354 = vperm.xlu0 %353, %v208
  %v355 = vpop.permute.xlu0 %354
  %358 = vset.pattern.permute.xlu0 0
  %359 = vperm.xlu0 %358, %v209
  %v360 = vpop.permute.xlu0 %359
  %363 = vset.pattern.permute.xlu0 0
  %364 = vperm.xlu0 %363, %v210
  %v365 = vpop.permute.xlu0 %364
  %368 = vset.pattern.permute.xlu0 0
  %369 = vperm.xlu0 %368, %v211
  %v370 = vpop.permute.xlu0 %369
  %vm372 = vcmask 523264
  %v374 = vsel %vm372, %v20, 0
  %v377 = vsel %vm372, %v21, 0
  %379 = vmatprep.subr.mxu0 0.0
  %380 = vmatpush1.msra.mxu0 %v52
  %381 = vmatprep.subr.mxu0 0.0
  %382 = vmatpush1.msra.mxu0 %v53
  %383 = vmatprep.subr.mxu0 0.0
  %384 = vmatpush1.msra.mxu0 %v54
  %385 = vmatprep.subr.mxu0 0.0
  %386 = vmatpush1.msra.mxu0 %v55
  %387 = vmatprep.subr.mxu0 0.0
  %388 = vmatpush1.msra.mxu0 %v56
  %389 = vmatprep.subr.mxu0 0.0
  %390 = vmatpush1.msra.mxu0 %v57
  %391 = vmatprep.subr.mxu0 0.0
  %392 = vmatpush1.msra.mxu0 %v58
  %393 = vmatprep.subr.mxu0 0.0
  %394 = vmatpush1.msra.mxu0 %v59
  %395 = vmatprep.subr.mxu0 0.0
  %396 = vmatpush1.msra.mxu0 0.0
  %397 = vmatprep.subr.mxu0 0.0
  %398 = vmatpush1.msra.mxu0 0.0
  %399 = vmatprep.subr.mxu0 0.0
  %400 = vmatpush1.msra.mxu0 0.0
  %401 = vmatprep.subr.mxu0 0.0
  %402 = vmatpush1.msra.mxu0 0.0
  %403 = vmatprep.subr.mxu0 0.0
  %404 = vmatpush1.msra.mxu0 0.0
  %405 = vmatprep.subr.mxu0 0.0
  %406 = vmatpush1.msra.mxu0 0.0
  %407 = vmatprep.subr.mxu0 0.0
  %408 = vmatpush1.msra.mxu0 0.0
  %409 = vmatprep.subr.mxu0 0.0
  %410 = vmatpush1.msra.mxu0 0.0
  %411 = vmatprep.subr.mxu0 0.0
  %412 = vmatpush1.msra.mxu0 0.0
  %413 = vmatprep.subr.mxu0 0.0
  %414 = vmatpush1.msra.mxu0 0.0
  %415 = vmatprep.subr.mxu0 0.0
  %416 = vmatpush1.msra.mxu0 0.0
  %417 = vmatprep.subr.mxu0 0.0
  %418 = vmatpush1.msra.mxu0 0.0
  %419 = vmatprep.subr.mxu0 0.0
  %420 = vmatpush1.msra.mxu0 0.0
  %421 = vmatprep.subr.mxu0 0.0
  %422 = vmatpush1.msra.mxu0 0.0
  %423 = vmatprep.subr.mxu0 0.0
  %424 = vmatpush1.msra.mxu0 0.0
  %425 = vmatprep.subr.mxu0 0.0
  %426 = vmatpush1.msra.mxu0 0.0
  %427 = vmatprep.subr.mxu0 0.0
  %428 = vmatpush1.msra.mxu0 0.0
  %429 = vmatprep.subr.mxu0 0.0
  %430 = vmatpush1.msra.mxu0 0.0
  %431 = vmatprep.subr.mxu0 0.0
  %432 = vmatpush1.msra.mxu0 0.0
  %433 = vmatprep.subr.mxu0 0.0
  %434 = vmatpush1.msra.mxu0 0.0
  %435 = vmatprep.subr.mxu0 0.0
  %436 = vmatpush1.msra.mxu0 0.0
  %437 = vmatprep.subr.mxu0 0.0
  %438 = vmatpush1.msra.mxu0 0.0
  %439 = vmatprep.subr.mxu0 0.0
  %440 = vmatpush1.msra.mxu0 0.0
  %441 = vmatprep.subr.mxu0 0.0
  %442 = vmatpush1.msra.mxu0 0.0
  %443 = vmatprep.mubr.f32.mxu0 0.0
  %444 = vmatmul.mubr.f32.gmra.mrb[0].mxu0 %v374
  %v445 = vpop.f32.mrb[0].mxu0
  %v446 = vadd.f32 %v215, %v445
  %v447 = vpop.f32.mrb[0].mxu0
  %448 = vmatprep.mubr.f32.mxu0 0.0
  %449 = vmatmul.mubr.f32.gmra.mrb[0].mxu0 %v377
  %v450 = vpop.f32.mrb[0].mxu0
  %v451 = vadd.f32 %v220, %v450
  %v452 = vpop.f32.mrb[0].mxu0
  %453 = vdwg.mxu0
  %v455 = vsel %vm372, %v22, 0
  %v458 = vsel %vm372, %v23, 0
  %460 = vmatprep.subr.mxu0 0.0
  %461 = vmatpush1.msra.mxu0 %v60
  %462 = vmatprep.subr.mxu0 0.0
  %463 = vmatpush1.msra.mxu0 %v61
  %464 = vmatprep.subr.mxu0 0.0
  %465 = vmatpush1.msra.mxu0 %v62
  %466 = vmatprep.subr.mxu0 0.0
  %467 = vmatpush1.msra.mxu0 %v63
  %468 = vmatprep.subr.mxu0 0.0
  %469 = vmatpush1.msra.mxu0 %v64
  %470 = vmatprep.subr.mxu0 0.0
  %471 = vmatpush1.msra.mxu0 %v65
  %472 = vmatprep.subr.mxu0 0.0
  %473 = vmatpush1.msra.mxu0 %v66
  %474 = vmatprep.subr.mxu0 0.0
  %475 = vmatpush1.msra.mxu0 %v67
  %476 = vmatprep.subr.mxu0 0.0
  %477 = vmatpush1.msra.mxu0 0.0
  %478 = vmatprep.subr.mxu0 0.0
  %479 = vmatpush1.msra.mxu0 0.0
  %480 = vmatprep.subr.mxu0 0.0
  %481 = vmatpush1.msra.mxu0 0.0
  %482 = vmatprep.subr.mxu0 0.0
  %483 = vmatpush1.msra.mxu0 0.0
  %484 = vmatprep.subr.mxu0 0.0
  %485 = vmatpush1.msra.mxu0 0.0
  %486 = vmatprep.subr.mxu0 0.0
  %487 = vmatpush1.msra.mxu0 0.0
  %488 = vmatprep.subr.mxu0 0.0
  %489 = vmatpush1.msra.mxu0 0.0
  %490 = vmatprep.subr.mxu0 0.0
  %491 = vmatpush1.msra.mxu0 0.0
  %492 = vmatprep.subr.mxu0 0.0
  %493 = vmatpush1.msra.mxu0 0.0
  %494 = vmatprep.subr.mxu0 0.0
  %495 = vmatpush1.msra.mxu0 0.0
  %496 = vmatprep.subr.mxu0 0.0
  %497 = vmatpush1.msra.mxu0 0.0
  %498 = vmatprep.subr.mxu0 0.0
  %499 = vmatpush1.msra.mxu0 0.0
  %500 = vmatprep.subr.mxu0 0.0
  %501 = vmatpush1.msra.mxu0 0.0
  %502 = vmatprep.subr.mxu0 0.0
  %503 = vmatpush1.msra.mxu0 0.0
  %504 = vmatprep.subr.mxu0 0.0
  %505 = vmatpush1.msra.mxu0 0.0
  %506 = vmatprep.subr.mxu0 0.0
  %507 = vmatpush1.msra.mxu0 0.0
  %508 = vmatprep.subr.mxu0 0.0
  %509 = vmatpush1.msra.mxu0 0.0
  %510 = vmatprep.subr.mxu0 0.0
  %511 = vmatpush1.msra.mxu0 0.0
  %512 = vmatprep.subr.mxu0 0.0
  %513 = vmatpush1.msra.mxu0 0.0
  %514 = vmatprep.subr.mxu0 0.0
  %515 = vmatpush1.msra.mxu0 0.0
  %516 = vmatprep.subr.mxu0 0.0
  %517 = vmatpush1.msra.mxu0 0.0
  %518 = vmatprep.subr.mxu0 0.0
  %519 = vmatpush1.msra.mxu0 0.0
  %520 = vmatprep.subr.mxu0 0.0
  %521 = vmatpush1.msra.mxu0 0.0
  %522 = vmatprep.subr.mxu0 0.0
  %523 = vmatpush1.msra.mxu0 0.0
  %524 = vmatprep.mubr.f32.mxu0 0.0
  %525 = vmatmul.mubr.f32.gmra.mrb[0].mxu0 %v455
  %v526 = vpop.f32.mrb[0].mxu0
  %v527 = vadd.f32 %v225, %v526
  %v528 = vpop.f32.mrb[0].mxu0
  %529 = vmatprep.mubr.f32.mxu0 0.0
  %530 = vmatmul.mubr.f32.gmra.mrb[0].mxu0 %v458
  %v531 = vpop.f32.mrb[0].mxu0
  %v532 = vadd.f32 %v230, %v531
  %v533 = vpop.f32.mrb[0].mxu0
  %534 = vdwg.mxu0
  %v536 = vsel %vm372, %v24, 0
  %v539 = vsel %vm372, %v25, 0
  %541 = vmatprep.subr.mxu0 0.0
  %542 = vmatpush1.msra.mxu0 %v68
  %543 = vmatprep.subr.mxu0 0.0
  %544 = vmatpush1.msra.mxu0 %v69
  %545 = vmatprep.subr.mxu0 0.0
  %546 = vmatpush1.msra.mxu0 %v70
  %547 = vmatprep.subr.mxu0 0.0
  %548 = vmatpush1.msra.mxu0 %v71
  %549 = vmatprep.subr.mxu0 0.0
  %550 = vmatpush1.msra.mxu0 %v72
  %551 = vmatprep.subr.mxu0 0.0
  %552 = vmatpush1.msra.mxu0 %v73
  %553 = vmatprep.subr.mxu0 0.0
  %554 = vmatpush1.msra.mxu0 %v74
  %555 = vmatprep.subr.mxu0 0.0
  %556 = vmatpush1.msra.mxu0 %v75
  %557 = vmatprep.subr.mxu0 0.0
  %558 = vmatpush1.msra.mxu0 0.0
  %559 = vmatprep.subr.mxu0 0.0
  %560 = vmatpush1.msra.mxu0 0.0
  %561 = vmatprep.subr.mxu0 0.0
  %562 = vmatpush1.msra.mxu0 0.0
  %563 = vmatprep.subr.mxu0 0.0
  %564 = vmatpush1.msra.mxu0 0.0
  %565 = vmatprep.subr.mxu0 0.0
  %566 = vmatpush1.msra.mxu0 0.0
  %567 = vmatprep.subr.mxu0 0.0
  %568 = vmatpush1.msra.mxu0 0.0
  %569 = vmatprep.subr.mxu0 0.0
  %570 = vmatpush1.msra.mxu0 0.0
  %571 = vmatprep.subr.mxu0 0.0
  %572 = vmatpush1.msra.mxu0 0.0
  %573 = vmatprep.subr.mxu0 0.0
  %574 = vmatpush1.msra.mxu0 0.0
  %575 = vmatprep.subr.mxu0 0.0
  %576 = vmatpush1.msra.mxu0 0.0
  %577 = vmatprep.subr.mxu0 0.0
  %578 = vmatpush1.msra.mxu0 0.0
  %579 = vmatprep.subr.mxu0 0.0
  %580 = vmatpush1.msra.mxu0 0.0
  %581 = vmatprep.subr.mxu0 0.0
  %582 = vmatpush1.msra.mxu0 0.0
  %583 = vmatprep.subr.mxu0 0.0
  %584 = vmatpush1.msra.mxu0 0.0
  %585 = vmatprep.subr.mxu0 0.0
  %586 = vmatpush1.msra.mxu0 0.0
  %587 = vmatprep.subr.mxu0 0.0
  %588 = vmatpush1.msra.mxu0 0.0
  %589 = vmatprep.subr.mxu0 0.0
  %590 = vmatpush1.msra.mxu0 0.0
  %591 = vmatprep.subr.mxu0 0.0
  %592 = vmatpush1.msra.mxu0 0.0
  %593 = vmatprep.subr.mxu0 0.0
  %594 = vmatpush1.msra.mxu0 0.0
  %595 = vmatprep.subr.mxu0 0.0
  %596 = vmatpush1.msra.mxu0 0.0
  %597 = vmatprep.subr.mxu0 0.0
  %598 = vmatpush1.msra.mxu0 0.0
  %599 = vmatprep.subr.mxu0 0.0
  %600 = vmatpush1.msra.mxu0 0.0
  %601 = vmatprep.subr.mxu0 0.0
  %602 = vmatpush1.msra.mxu0 0.0
  %603 = vmatprep.subr.mxu0 0.0
  %604 = vmatpush1.msra.mxu0 0.0
  %605 = vmatprep.mubr.f32.mxu0 0.0
  %606 = vmatmul.mubr.f32.gmra.mrb[0].mxu0 %v536
  %v607 = vpop.f32.mrb[0].mxu0
  %v608 = vadd.f32 %v235, %v607
  %v609 = vpop.f32.mrb[0].mxu0
  %610 = vmatprep.mubr.f32.mxu0 0.0
  %611 = vmatmul.mubr.f32.gmra.mrb[0].mxu0 %v539
  %v612 = vpop.f32.mrb[0].mxu0
  %v613 = vadd.f32 %v240, %v612
  %v614 = vpop.f32.mrb[0].mxu0
  %615 = vdwg.mxu0
  %v617 = vsel %vm372, %v26, 0
  %v620 = vsel %vm372, %v27, 0
  %622 = vmatprep.subr.mxu0 0.0
  %623 = vmatpush1.msra.mxu0 %v76
  %624 = vmatprep.subr.mxu0 0.0
  %625 = vmatpush1.msra.mxu0 %v77
  %626 = vmatprep.subr.mxu0 0.0
  %627 = vmatpush1.msra.mxu0 %v78
  %628 = vmatprep.subr.mxu0 0.0
  %629 = vmatpush1.msra.mxu0 %v79
  %630 = vmatprep.subr.mxu0 0.0
  %631 = vmatpush1.msra.mxu0 %v80
  %632 = vmatprep.subr.mxu0 0.0
  %633 = vmatpush1.msra.mxu0 %v81
  %634 = vmatprep.subr.mxu0 0.0
  %635 = vmatpush1.msra.mxu0 %v82
  %636 = vmatprep.subr.mxu0 0.0
  %637 = vmatpush1.msra.mxu0 %v83
  %638 = vmatprep.subr.mxu0 0.0
  %639 = vmatpush1.msra.mxu0 0.0
  %640 = vmatprep.subr.mxu0 0.0
  %641 = vmatpush1.msra.mxu0 0.0
  %642 = vmatprep.subr.mxu0 0.0
  %643 = vmatpush1.msra.mxu0 0.0
  %644 = vmatprep.subr.mxu0 0.0
  %645 = vmatpush1.msra.mxu0 0.0
  %646 = vmatprep.subr.mxu0 0.0
  %647 = vmatpush1.msra.mxu0 0.0
  %648 = vmatprep.subr.mxu0 0.0
  %649 = vmatpush1.msra.mxu0 0.0
  %650 = vmatprep.subr.mxu0 0.0
  %651 = vmatpush1.msra.mxu0 0.0
  %652 = vmatprep.subr.mxu0 0.0
  %653 = vmatpush1.msra.mxu0 0.0
  %654 = vmatprep.subr.mxu0 0.0
  %655 = vmatpush1.msra.mxu0 0.0
  %656 = vmatprep.subr.mxu0 0.0
  %657 = vmatpush1.msra.mxu0 0.0
  %658 = vmatprep.subr.mxu0 0.0
  %659 = vmatpush1.msra.mxu0 0.0
  %660 = vmatprep.subr.mxu0 0.0
  %661 = vmatpush1.msra.mxu0 0.0
  %662 = vmatprep.subr.mxu0 0.0
  %663 = vmatpush1.msra.mxu0 0.0
  %664 = vmatprep.subr.mxu0 0.0
  %665 = vmatpush1.msra.mxu0 0.0
  %666 = vmatprep.subr.mxu0 0.0
  %667 = vmatpush1.msra.mxu0 0.0
  %668 = vmatprep.subr.mxu0 0.0
  %669 = vmatpush1.msra.mxu0 0.0
  %670 = vmatprep.subr.mxu0 0.0
  %671 = vmatpush1.msra.mxu0 0.0
  %672 = vmatprep.subr.mxu0 0.0
  %673 = vmatpush1.msra.mxu0 0.0
  %674 = vmatprep.subr.mxu0 0.0
  %675 = vmatpush1.msra.mxu0 0.0
  %676 = vmatprep.subr.mxu0 0.0
  %677 = vmatpush1.msra.mxu0 0.0
  %678 = vmatprep.subr.mxu0 0.0
  %679 = vmatpush1.msra.mxu0 0.0
  %680 = vmatprep.subr.mxu0 0.0
  %681 = vmatpush1.msra.mxu0 0.0
  %682 = vmatprep.subr.mxu0 0.0
  %683 = vmatpush1.msra.mxu0 0.0
  %684 = vmatprep.subr.mxu0 0.0
  %685 = vmatpush1.msra.mxu0 0.0
  %686 = vmatprep.mubr.f32.mxu0 0.0
  %687 = vmatmul.mubr.f32.gmra.mrb[0].mxu0 %v617
  %v688 = vpop.f32.mrb[0].mxu0
  %v689 = vadd.f32 %v245, %v688
  %v690 = vpop.f32.mrb[0].mxu0
  %691 = vmatprep.mubr.f32.mxu0 0.0
  %692 = vmatmul.mubr.f32.gmra.mrb[0].mxu0 %v620
  %v693 = vpop.f32.mrb[0].mxu0
  %v694 = vadd.f32 %v250, %v693
  %v695 = vpop.f32.mrb[0].mxu0
  %696 = vdwg.mxu0
  %v698 = vsel %vm372, %v28, 0
  %v701 = vsel %vm372, %v29, 0
  %703 = vmatprep.subr.mxu0 0.0
  %704 = vmatpush1.msra.mxu0 %v84
  %705 = vmatprep.subr.mxu0 0.0
  %706 = vmatpush1.msra.mxu0 %v85
  %707 = vmatprep.subr.mxu0 0.0
  %708 = vmatpush1.msra.mxu0 %v86
  %709 = vmatprep.subr.mxu0 0.0
  %710 = vmatpush1.msra.mxu0 %v87
  %711 = vmatprep.subr.mxu0 0.0
  %712 = vmatpush1.msra.mxu0 %v88
  %713 = vmatprep.subr.mxu0 0.0
  %714 = vmatpush1.msra.mxu0 %v89
  %715 = vmatprep.subr.mxu0 0.0
  %716 = vmatpush1.msra.mxu0 %v90
  %717 = vmatprep.subr.mxu0 0.0
  %718 = vmatpush1.msra.mxu0 %v91
  %719 = vmatprep.subr.mxu0 0.0
  %720 = vmatpush1.msra.mxu0 0.0
  %721 = vmatprep.subr.mxu0 0.0
  %722 = vmatpush1.msra.mxu0 0.0
  %723 = vmatprep.subr.mxu0 0.0
  %724 = vmatpush1.msra.mxu0 0.0
  %725 = vmatprep.subr.mxu0 0.0
  %726 = vmatpush1.msra.mxu0 0.0
  %727 = vmatprep.subr.mxu0 0.0
  %728 = vmatpush1.msra.mxu0 0.0
  %729 = vmatprep.subr.mxu0 0.0
  %730 = vmatpush1.msra.mxu0 0.0
  %731 = vmatprep.subr.mxu0 0.0
  %732 = vmatpush1.msra.mxu0 0.0
  %733 = vmatprep.subr.mxu0 0.0
  %734 = vmatpush1.msra.mxu0 0.0
  %735 = vmatprep.subr.mxu0 0.0
  %736 = vmatpush1.msra.mxu0 0.0
  %737 = vmatprep.subr.mxu0 0.0
  %738 = vmatpush1.msra.mxu0 0.0
  %739 = vmatprep.subr.mxu0 0.0
  %740 = vmatpush1.msra.mxu0 0.0
  %741 = vmatprep.subr.mxu0 0.0
  %742 = vmatpush1.msra.mxu0 0.0
  %743 = vmatprep.subr.mxu0 0.0
  %744 = vmatpush1.msra.mxu0 0.0
  %745 = vmatprep.subr.mxu0 0.0
  %746 = vmatpush1.msra.mxu0 0.0
  %747 = vmatprep.subr.mxu0 0.0
  %748 = vmatpush1.msra.mxu0 0.0
  %749 = vmatprep.subr.mxu0 0.0
  %750 = vmatpush1.msra.mxu0 0.0
  %751 = vmatprep.subr.mxu0 0.0
  %752 = vmatpush1.msra.mxu0 0.0
  %753 = vmatprep.subr.mxu0 0.0
  %754 = vmatpush1.msra.mxu0 0.0
  %755 = vmatprep.subr.mxu0 0.0
  %756 = vmatpush1.msra.mxu0 0.0
  %757 = vmatprep.subr.mxu0 0.0
  %758 = vmatpush1.msra.mxu0 0.0
  %759 = vmatprep.subr.mxu0 0.0
  %760 = vmatpush1.msra.mxu0 0.0
  %761 = vmatprep.subr.mxu0 0.0
  %762 = vmatpush1.msra.mxu0 0.0
  %763 = vmatprep.subr.mxu0 0.0
  %764 = vmatpush1.msra.mxu0 0.0
  %765 = vmatprep.subr.mxu0 0.0
  %766 = vmatpush1.msra.mxu0 0.0
  %767 = vmatprep.mubr.f32.mxu0 0.0
  %768 = vmatmul.mubr.f32.gmra.mrb[0].mxu0 %v698
  %v769 = vpop.f32.mrb[0].mxu0
  %v770 = vadd.f32 %v255, %v769
  %v771 = vpop.f32.mrb[0].mxu0
  %772 = vmatprep.mubr.f32.mxu0 0.0
  %773 = vmatmul.mubr.f32.gmra.mrb[0].mxu0 %v701
  %v774 = vpop.f32.mrb[0].mxu0
  %v775 = vadd.f32 %v260, %v774
  %v776 = vpop.f32.mrb[0].mxu0
  %777 = vdwg.mxu0
  %v779 = vsel %vm372, %v30, 0
  %v782 = vsel %vm372, %v31, 0
  %784 = vmatprep.subr.mxu0 0.0
  %785 = vmatpush1.msra.mxu0 %v92
  %786 = vmatprep.subr.mxu0 0.0
  %787 = vmatpush1.msra.mxu0 %v93
  %788 = vmatprep.subr.mxu0 0.0
  %789 = vmatpush1.msra.mxu0 %v94
  %790 = vmatprep.subr.mxu0 0.0
  %791 = vmatpush1.msra.mxu0 %v95
  %792 = vmatprep.subr.mxu0 0.0
  %793 = vmatpush1.msra.mxu0 %v96
  %794 = vmatprep.subr.mxu0 0.0
  %795 = vmatpush1.msra.mxu0 %v97
  %796 = vmatprep.subr.mxu0 0.0
  %797 = vmatpush1.msra.mxu0 %v98
  %798 = vmatprep.subr.mxu0 0.0
  %799 = vmatpush1.msra.mxu0 %v99
  %800 = vmatprep.subr.mxu0 0.0
  %801 = vmatpush1.msra.mxu0 0.0
  %802 = vmatprep.subr.mxu0 0.0
  %803 = vmatpush1.msra.mxu0 0.0
  %804 = vmatprep.subr.mxu0 0.0
  %805 = vmatpush1.msra.mxu0 0.0
  %806 = vmatprep.subr.mxu0 0.0
  %807 = vmatpush1.msra.mxu0 0.0
  %808 = vmatprep.subr.mxu0 0.0
  %809 = vmatpush1.msra.mxu0 0.0
  %810 = vmatprep.subr.mxu0 0.0
  %811 = vmatpush1.msra.mxu0 0.0
  %812 = vmatprep.subr.mxu0 0.0
  %813 = vmatpush1.msra.mxu0 0.0
  %814 = vmatprep.subr.mxu0 0.0
  %815 = vmatpush1.msra.mxu0 0.0
  %816 = vmatprep.subr.mxu0 0.0
  %817 = vmatpush1.msra.mxu0 0.0
  %818 = vmatprep.subr.mxu0 0.0
  %819 = vmatpush1.msra.mxu0 0.0
  %820 = vmatprep.subr.mxu0 0.0
  %821 = vmatpush1.msra.mxu0 0.0
  %822 = vmatprep.subr.mxu0 0.0
  %823 = vmatpush1.msra.mxu0 0.0
  %824 = vmatprep.subr.mxu0 0.0
  %825 = vmatpush1.msra.mxu0 0.0
  %826 = vmatprep.subr.mxu0 0.0
  %827 = vmatpush1.msra.mxu0 0.0
  %828 = vmatprep.subr.mxu0 0.0
  %829 = vmatpush1.msra.mxu0 0.0
  %830 = vmatprep.subr.mxu0 0.0
  %831 = vmatpush1.msra.mxu0 0.0
  %832 = vmatprep.subr.mxu0 0.0
  %833 = vmatpush1.msra.mxu0 0.0
  %834 = vmatprep.subr.mxu0 0.0
  %835 = vmatpush1.msra.mxu0 0.0
  %836 = vmatprep.subr.mxu0 0.0
  %837 = vmatpush1.msra.mxu0 0.0
  %838 = vmatprep.subr.mxu0 0.0
  %839 = vmatpush1.msra.mxu0 0.0
  %840 = vmatprep.subr.mxu0 0.0
  %841 = vmatpush1.msra.mxu0 0.0
  %842 = vmatprep.subr.mxu0 0.0
  %843 = vmatpush1.msra.mxu0 0.0
  %844 = vmatprep.subr.mxu0 0.0
  %845 = vmatpush1.msra.mxu0 0.0
  %846 = vmatprep.subr.mxu0 0.0
  %847 = vmatpush1.msra.mxu0 0.0
  %848 = vmatprep.mubr.f32.mxu0 0.0
  %849 = vmatmul.mubr.f32.gmra.mrb[0].mxu0 %v779
  %v850 = vpop.f32.mrb[0].mxu0
  %v851 = vadd.f32 %v265, %v850
  %v852 = vpop.f32.mrb[0].mxu0
  %853 = vmatprep.mubr.f32.mxu0 0.0
  %854 = vmatmul.mubr.f32.gmra.mrb[0].mxu0 %v782
  %v855 = vpop.f32.mrb[0].mxu0
  %v856 = vadd.f32 %v270, %v855
  %v857 = vpop.f32.mrb[0].mxu0
  %858 = vdwg.mxu0
  %v860 = vsel %vm372, %v32, 0
  %v863 = vsel %vm372, %v33, 0
  %865 = vmatprep.subr.mxu0 0.0
  %866 = vmatpush1.msra.mxu0 %v100
  %867 = vmatprep.subr.mxu0 0.0
  %868 = vmatpush1.msra.mxu0 %v101
  %869 = vmatprep.subr.mxu0 0.0
  %870 = vmatpush1.msra.mxu0 %v102
  %871 = vmatprep.subr.mxu0 0.0
  %872 = vmatpush1.msra.mxu0 %v103
  %873 = vmatprep.subr.mxu0 0.0
  %874 = vmatpush1.msra.mxu0 %v104
  %875 = vmatprep.subr.mxu0 0.0
  %876 = vmatpush1.msra.mxu0 %v105
  %877 = vmatprep.subr.mxu0 0.0
  %878 = vmatpush1.msra.mxu0 %v106
  %879 = vmatprep.subr.mxu0 0.0
  %880 = vmatpush1.msra.mxu0 %v107
  %881 = vmatprep.subr.mxu0 0.0
  %882 = vmatpush1.msra.mxu0 0.0
  %883 = vmatprep.subr.mxu0 0.0
  %884 = vmatpush1.msra.mxu0 0.0
  %885 = vmatprep.subr.mxu0 0.0
  %886 = vmatpush1.msra.mxu0 0.0
  %887 = vmatprep.subr.mxu0 0.0
  %888 = vmatpush1.msra.mxu0 0.0
  %889 = vmatprep.subr.mxu0 0.0
  %890 = vmatpush1.msra.mxu0 0.0
  %891 = vmatprep.subr.mxu0 0.0
  %892 = vmatpush1.msra.mxu0 0.0
  %893 = vmatprep.subr.mxu0 0.0
  %894 = vmatpush1.msra.mxu0 0.0
  %895 = vmatprep.subr.mxu0 0.0
  %896 = vmatpush1.msra.mxu0 0.0
  %897 = vmatprep.subr.mxu0 0.0
  %898 = vmatpush1.msra.mxu0 0.0
  %899 = vmatprep.subr.mxu0 0.0
  %900 = vmatpush1.msra.mxu0 0.0
  %901 = vmatprep.subr.mxu0 0.0
  %902 = vmatpush1.msra.mxu0 0.0
  %903 = vmatprep.subr.mxu0 0.0
  %904 = vmatpush1.msra.mxu0 0.0
  %905 = vmatprep.subr.mxu0 0.0
  %906 = vmatpush1.msra.mxu0 0.0
  %907 = vmatprep.subr.mxu0 0.0
  %908 = vmatpush1.msra.mxu0 0.0
  %909 = vmatprep.subr.mxu0 0.0
  %910 = vmatpush1.msra.mxu0 0.0
  %911 = vmatprep.subr.mxu0 0.0
  %912 = vmatpush1.msra.mxu0 0.0
  %913 = vmatprep.subr.mxu0 0.0
  %914 = vmatpush1.msra.mxu0 0.0
  %915 = vmatprep.subr.mxu0 0.0
  %916 = vmatpush1.msra.mxu0 0.0
  %917 = vmatprep.subr.mxu0 0.0
  %918 = vmatpush1.msra.mxu0 0.0
  %919 = vmatprep.subr.mxu0 0.0
  %920 = vmatpush1.msra.mxu0 0.0
  %921 = vmatprep.subr.mxu0 0.0
  %922 = vmatpush1.msra.mxu0 0.0
  %923 = vmatprep.subr.mxu0 0.0
  %924 = vmatpush1.msra.mxu0 0.0
  %925 = vmatprep.subr.mxu0 0.0
  %926 = vmatpush1.msra.mxu0 0.0
  %927 = vmatprep.subr.mxu0 0.0
  %928 = vmatpush1.msra.mxu0 0.0
  %929 = vmatprep.mubr.f32.mxu0 0.0
  %930 = vmatmul.mubr.f32.gmra.mrb[0].mxu0 %v860
  %v931 = vpop.f32.mrb[0].mxu0
  %v932 = vadd.f32 %v275, %v931
  %v933 = vpop.f32.mrb[0].mxu0
  %934 = vmatprep.mubr.f32.mxu0 0.0
  %935 = vmatmul.mubr.f32.gmra.mrb[0].mxu0 %v863
  %v936 = vpop.f32.mrb[0].mxu0
  %v937 = vadd.f32 %v280, %v936
  %v938 = vpop.f32.mrb[0].mxu0
  %939 = vdwg.mxu0
  %v941 = vsel %vm372, %v34, 0
  %v944 = vsel %vm372, %v35, 0
  %946 = vmatprep.subr.mxu0 0.0
  %947 = vmatpush1.msra.mxu0 %v108
  %948 = vmatprep.subr.mxu0 0.0
  %949 = vmatpush1.msra.mxu0 %v109
  %950 = vmatprep.subr.mxu0 0.0
  %951 = vmatpush1.msra.mxu0 %v110
  %952 = vmatprep.subr.mxu0 0.0
  %953 = vmatpush1.msra.mxu0 %v111
  %954 = vmatprep.subr.mxu0 0.0
  %955 = vmatpush1.msra.mxu0 %v112
  %956 = vmatprep.subr.mxu0 0.0
  %957 = vmatpush1.msra.mxu0 %v113
  %958 = vmatprep.subr.mxu0 0.0
  %959 = vmatpush1.msra.mxu0 %v114
  %960 = vmatprep.subr.mxu0 0.0
  %961 = vmatpush1.msra.mxu0 %v115
  %962 = vmatprep.subr.mxu0 0.0
  %963 = vmatpush1.msra.mxu0 0.0
  %964 = vmatprep.subr.mxu0 0.0
  %965 = vmatpush1.msra.mxu0 0.0
  %966 = vmatprep.subr.mxu0 0.0
  %967 = vmatpush1.msra.mxu0 0.0
  %968 = vmatprep.subr.mxu0 0.0
  %969 = vmatpush1.msra.mxu0 0.0
  %970 = vmatprep.subr.mxu0 0.0
  %971 = vmatpush1.msra.mxu0 0.0
  %972 = vmatprep.subr.mxu0 0.0
  %973 = vmatpush1.msra.mxu0 0.0
  %974 = vmatprep.subr.mxu0 0.0
  %975 = vmatpush1.msra.mxu0 0.0
  %976 = vmatprep.subr.mxu0 0.0
  %977 = vmatpush1.msra.mxu0 0.0
  %978 = vmatprep.subr.mxu0 0.0
  %979 = vmatpush1.msra.mxu0 0.0
  %980 = vmatprep.subr.mxu0 0.0
  %981 = vmatpush1.msra.mxu0 0.0
  %982 = vmatprep.subr.mxu0 0.0
  %983 = vmatpush1.msra.mxu0 0.0
  %984 = vmatprep.subr.mxu0 0.0
  %985 = vmatpush1.msra.mxu0 0.0
  %986 = vmatprep.subr.mxu0 0.0
  %987 = vmatpush1.msra.mxu0 0.0
  %988 = vmatprep.subr.mxu0 0.0
  %989 = vmatpush1.msra.mxu0 0.0
  %990 = vmatprep.subr.mxu0 0.0
  %991 = vmatpush1.msra.mxu0 0.0
  %992 = vmatprep.subr.mxu0 0.0
  %993 = vmatpush1.msra.mxu0 0.0
  %994 = vmatprep.subr.mxu0 0.0
  %995 = vmatpush1.msra.mxu0 0.0
  %996 = vmatprep.subr.mxu0 0.0
  %997 = vmatpush1.msra.mxu0 0.0
  %998 = vmatprep.subr.mxu0 0.0
  %999 = vmatpush1.msra.mxu0 0.0
  %1000 = vmatprep.subr.mxu0 0.0
  %1001 = vmatpush1.msra.mxu0 0.0
  %1002 = vmatprep.subr.mxu0 0.0
  %1003 = vmatpush1.msra.mxu0 0.0
  %1004 = vmatprep.subr.mxu0 0.0
  %1005 = vmatpush1.msra.mxu0 0.0
  %1006 = vmatprep.subr.mxu0 0.0
  %1007 = vmatpush1.msra.mxu0 0.0
  %1008 = vmatprep.subr.mxu0 0.0
  %1009 = vmatpush1.msra.mxu0 0.0
  %1010 = vmatprep.mubr.f32.mxu0 0.0
  %1011 = vmatmul.mubr.f32.gmra.mrb[0].mxu0 %v941
  %v1012 = vpop.f32.mrb[0].mxu0
  %v1013 = vadd.f32 %v285, %v1012
  %v1014 = vpop.f32.mrb[0].mxu0
  %1015 = vmatprep.mubr.f32.mxu0 0.0
  %1016 = vmatmul.mubr.f32.gmra.mrb[0].mxu0 %v944
  %v1017 = vpop.f32.mrb[0].mxu0
  %v1018 = vadd.f32 %v290, %v1017
  %v1019 = vpop.f32.mrb[0].mxu0
  %1020 = vdwg.mxu0
  %v1022 = vsel %vm372, %v36, 0
  %v1025 = vsel %vm372, %v37, 0
  %1027 = vmatprep.subr.mxu0 0.0
  %1028 = vmatpush1.msra.mxu0 %v116
  %1029 = vmatprep.subr.mxu0 0.0
  %1030 = vmatpush1.msra.mxu0 %v117
  %1031 = vmatprep.subr.mxu0 0.0
  %1032 = vmatpush1.msra.mxu0 %v118
  %1033 = vmatprep.subr.mxu0 0.0
  %1034 = vmatpush1.msra.mxu0 %v119
  %1035 = vmatprep.subr.mxu0 0.0
  %1036 = vmatpush1.msra.mxu0 %v120
  %1037 = vmatprep.subr.mxu0 0.0
  %1038 = vmatpush1.msra.mxu0 %v121
  %1039 = vmatprep.subr.mxu0 0.0
  %1040 = vmatpush1.msra.mxu0 %v122
  %1041 = vmatprep.subr.mxu0 0.0
  %1042 = vmatpush1.msra.mxu0 %v123
  %1043 = vmatprep.subr.mxu0 0.0
  %1044 = vmatpush1.msra.mxu0 0.0
  %1045 = vmatprep.subr.mxu0 0.0
  %1046 = vmatpush1.msra.mxu0 0.0
  %1047 = vmatprep.subr.mxu0 0.0
  %1048 = vmatpush1.msra.mxu0 0.0
  %1049 = vmatprep.subr.mxu0 0.0
  %1050 = vmatpush1.msra.mxu0 0.0
  %1051 = vmatprep.subr.mxu0 0.0
  %1052 = vmatpush1.msra.mxu0 0.0
  %1053 = vmatprep.subr.mxu0 0.0
  %1054 = vmatpush1.msra.mxu0 0.0
  %1055 = vmatprep.subr.mxu0 0.0
  %1056 = vmatpush1.msra.mxu0 0.0
  %1057 = vmatprep.subr.mxu0 0.0
  %1058 = vmatpush1.msra.mxu0 0.0
  %1059 = vmatprep.subr.mxu0 0.0
  %1060 = vmatpush1.msra.mxu0 0.0
  %1061 = vmatprep.subr.mxu0 0.0
  %1062 = vmatpush1.msra.mxu0 0.0
  %1063 = vmatprep.subr.mxu0 0.0
  %1064 = vmatpush1.msra.mxu0 0.0
  %1065 = vmatprep.subr.mxu0 0.0
  %1066 = vmatpush1.msra.mxu0 0.0
  %1067 = vmatprep.subr.mxu0 0.0
  %1068 = vmatpush1.msra.mxu0 0.0
  %1069 = vmatprep.subr.mxu0 0.0
  %1070 = vmatpush1.msra.mxu0 0.0
  %1071 = vmatprep.subr.mxu0 0.0
  %1072 = vmatpush1.msra.mxu0 0.0
  %1073 = vmatprep.subr.mxu0 0.0
  %1074 = vmatpush1.msra.mxu0 0.0
  %1075 = vmatprep.subr.mxu0 0.0
  %1076 = vmatpush1.msra.mxu0 0.0
  %1077 = vmatprep.subr.mxu0 0.0
  %1078 = vmatpush1.msra.mxu0 0.0
  %1079 = vmatprep.subr.mxu0 0.0
  %1080 = vmatpush1.msra.mxu0 0.0
  %1081 = vmatprep.subr.mxu0 0.0
  %1082 = vmatpush1.msra.mxu0 0.0
  %1083 = vmatprep.subr.mxu0 0.0
  %1084 = vmatpush1.msra.mxu0 0.0
  %1085 = vmatprep.subr.mxu0 0.0
  %1086 = vmatpush1.msra.mxu0 0.0
  %1087 = vmatprep.subr.mxu0 0.0
  %1088 = vmatpush1.msra.mxu0 0.0
  %1089 = vmatprep.subr.mxu0 0.0
  %1090 = vmatpush1.msra.mxu0 0.0
  %1091 = vmatprep.mubr.f32.mxu0 0.0
  %1092 = vmatmul.mubr.f32.gmra.mrb[0].mxu0 %v1022
  %v1093 = vpop.f32.mrb[0].mxu0
  %v1094 = vadd.f32 %v295, %v1093
  %v1095 = vpop.f32.mrb[0].mxu0
  %1096 = vmatprep.mubr.f32.mxu0 0.0
  %1097 = vmatmul.mubr.f32.gmra.mrb[0].mxu0 %v1025
  %v1098 = vpop.f32.mrb[0].mxu0
  %v1099 = vadd.f32 %v300, %v1098
  %v1100 = vpop.f32.mrb[0].mxu0
  %1101 = vdwg.mxu0
  %v1103 = vsel %vm372, %v38, 0
  %v1106 = vsel %vm372, %v39, 0
  %1108 = vmatprep.subr.mxu0 0.0
  %1109 = vmatpush1.msra.mxu0 %v124
  %1110 = vmatprep.subr.mxu0 0.0
  %1111 = vmatpush1.msra.mxu0 %v125
  %1112 = vmatprep.subr.mxu0 0.0
  %1113 = vmatpush1.msra.mxu0 %v126
  %1114 = vmatprep.subr.mxu0 0.0
  %1115 = vmatpush1.msra.mxu0 %v127
  %1116 = vmatprep.subr.mxu0 0.0
  %1117 = vmatpush1.msra.mxu0 %v128
  %1118 = vmatprep.subr.mxu0 0.0
  %1119 = vmatpush1.msra.mxu0 %v129
  %1120 = vmatprep.subr.mxu0 0.0
  %1121 = vmatpush1.msra.mxu0 %v130
  %1122 = vmatprep.subr.mxu0 0.0
  %1123 = vmatpush1.msra.mxu0 %v131
  %1124 = vmatprep.subr.mxu0 0.0
  %1125 = vmatpush1.msra.mxu0 0.0
  %1126 = vmatprep.subr.mxu0 0.0
  %1127 = vmatpush1.msra.mxu0 0.0
  %1128 = vmatprep.subr.mxu0 0.0
  %1129 = vmatpush1.msra.mxu0 0.0
  %1130 = vmatprep.subr.mxu0 0.0
  %1131 = vmatpush1.msra.mxu0 0.0
  %1132 = vmatprep.subr.mxu0 0.0
  %1133 = vmatpush1.msra.mxu0 0.0
  %1134 = vmatprep.subr.mxu0 0.0
  %1135 = vmatpush1.msra.mxu0 0.0
  %1136 = vmatprep.subr.mxu0 0.0
  %1137 = vmatpush1.msra.mxu0 0.0
  %1138 = vmatprep.subr.mxu0 0.0
  %1139 = vmatpush1.msra.mxu0 0.0
  %1140 = vmatprep.subr.mxu0 0.0
  %1141 = vmatpush1.msra.mxu0 0.0
  %1142 = vmatprep.subr.mxu0 0.0
  %1143 = vmatpush1.msra.mxu0 0.0
  %1144 = vmatprep.subr.mxu0 0.0
  %1145 = vmatpush1.msra.mxu0 0.0
  %1146 = vmatprep.subr.mxu0 0.0
  %1147 = vmatpush1.msra.mxu0 0.0
  %1148 = vmatprep.subr.mxu0 0.0
  %1149 = vmatpush1.msra.mxu0 0.0
  %1150 = vmatprep.subr.mxu0 0.0
  %1151 = vmatpush1.msra.mxu0 0.0
  %1152 = vmatprep.subr.mxu0 0.0
  %1153 = vmatpush1.msra.mxu0 0.0
  %1154 = vmatprep.subr.mxu0 0.0
  %1155 = vmatpush1.msra.mxu0 0.0
  %1156 = vmatprep.subr.mxu0 0.0
  %1157 = vmatpush1.msra.mxu0 0.0
  %1158 = vmatprep.subr.mxu0 0.0
  %1159 = vmatpush1.msra.mxu0 0.0
  %1160 = vmatprep.subr.mxu0 0.0
  %1161 = vmatpush1.msra.mxu0 0.0
  %1162 = vmatprep.subr.mxu0 0.0
  %1163 = vmatpush1.msra.mxu0 0.0
  %1164 = vmatprep.subr.mxu0 0.0
  %1165 = vmatpush1.msra.mxu0 0.0
  %1166 = vmatprep.subr.mxu0 0.0
  %1167 = vmatpush1.msra.mxu0 0.0
  %1168 = vmatprep.subr.mxu0 0.0
  %1169 = vmatpush1.msra.mxu0 0.0
  %1170 = vmatprep.subr.mxu0 0.0
  %1171 = vmatpush1.msra.mxu0 0.0
  %1172 = vmatprep.mubr.f32.mxu0 0.0
  %1173 = vmatmul.mubr.f32.gmra.mrb[0].mxu0 %v1103
  %v1174 = vpop.f32.mrb[0].mxu0
  %v1175 = vadd.f32 %v305, %v1174
  %v1176 = vpop.f32.mrb[0].mxu0
  %1177 = vmatprep.mubr.f32.mxu0 0.0
  %1178 = vmatmul.mubr.f32.gmra.mrb[0].mxu0 %v1106
  %v1179 = vpop.f32.mrb[0].mxu0
  %v1180 = vadd.f32 %v310, %v1179
  %v1181 = vpop.f32.mrb[0].mxu0
  %1182 = vdwg.mxu0
  %v1184 = vsel %vm372, %v40, 0
  %v1187 = vsel %vm372, %v41, 0
  %1189 = vmatprep.subr.mxu0 0.0
  %1190 = vmatpush1.msra.mxu0 %v132
  %1191 = vmatprep.subr.mxu0 0.0
  %1192 = vmatpush1.msra.mxu0 %v133
  %1193 = vmatprep.subr.mxu0 0.0
  %1194 = vmatpush1.msra.mxu0 %v134
  %1195 = vmatprep.subr.mxu0 0.0
  %1196 = vmatpush1.msra.mxu0 %v135
  %1197 = vmatprep.subr.mxu0 0.0
  %1198 = vmatpush1.msra.mxu0 %v136
  %1199 = vmatprep.subr.mxu0 0.0
  %1200 = vmatpush1.msra.mxu0 %v137
  %1201 = vmatprep.subr.mxu0 0.0
  %1202 = vmatpush1.msra.mxu0 %v138
  %1203 = vmatprep.subr.mxu0 0.0
  %1204 = vmatpush1.msra.mxu0 %v139
  %1205 = vmatprep.subr.mxu0 0.0
  %1206 = vmatpush1.msra.mxu0 0.0
  %1207 = vmatprep.subr.mxu0 0.0
  %1208 = vmatpush1.msra.mxu0 0.0
  %1209 = vmatprep.subr.mxu0 0.0
  %1210 = vmatpush1.msra.mxu0 0.0
  %1211 = vmatprep.subr.mxu0 0.0
  %1212 = vmatpush1.msra.mxu0 0.0
  %1213 = vmatprep.subr.mxu0 0.0
  %1214 = vmatpush1.msra.mxu0 0.0
  %1215 = vmatprep.subr.mxu0 0.0
  %1216 = vmatpush1.msra.mxu0 0.0
  %1217 = vmatprep.subr.mxu0 0.0
  %1218 = vmatpush1.msra.mxu0 0.0
  %1219 = vmatprep.subr.mxu0 0.0
  %1220 = vmatpush1.msra.mxu0 0.0
  %1221 = vmatprep.subr.mxu0 0.0
  %1222 = vmatpush1.msra.mxu0 0.0
  %1223 = vmatprep.subr.mxu0 0.0
  %1224 = vmatpush1.msra.mxu0 0.0
  %1225 = vmatprep.subr.mxu0 0.0
  %1226 = vmatpush1.msra.mxu0 0.0
  %1227 = vmatprep.subr.mxu0 0.0
  %1228 = vmatpush1.msra.mxu0 0.0
  %1229 = vmatprep.subr.mxu0 0.0
  %1230 = vmatpush1.msra.mxu0 0.0
  %1231 = vmatprep.subr.mxu0 0.0
  %1232 = vmatpush1.msra.mxu0 0.0
  %1233 = vmatprep.subr.mxu0 0.0
  %1234 = vmatpush1.msra.mxu0 0.0
  %1235 = vmatprep.subr.mxu0 0.0
  %1236 = vmatpush1.msra.mxu0 0.0
  %1237 = vmatprep.subr.mxu0 0.0
  %1238 = vmatpush1.msra.mxu0 0.0
  %1239 = vmatprep.subr.mxu0 0.0
  %1240 = vmatpush1.msra.mxu0 0.0
  %1241 = vmatprep.subr.mxu0 0.0
  %1242 = vmatpush1.msra.mxu0 0.0
  %1243 = vmatprep.subr.mxu0 0.0
  %1244 = vmatpush1.msra.mxu0 0.0
  %1245 = vmatprep.subr.mxu0 0.0
  %1246 = vmatpush1.msra.mxu0 0.0
  %1247 = vmatprep.subr.mxu0 0.0
  %1248 = vmatpush1.msra.mxu0 0.0
  %1249 = vmatprep.subr.mxu0 0.0
  %1250 = vmatpush1.msra.mxu0 0.0
  %1251 = vmatprep.subr.mxu0 0.0
  %1252 = vmatpush1.msra.mxu0 0.0
  %1253 = vmatprep.mubr.f32.mxu0 0.0
  %1254 = vmatmul.mubr.f32.gmra.mrb[0].mxu0 %v1184
  %v1255 = vpop.f32.mrb[0].mxu0
  %v1256 = vadd.f32 %v315, %v1255
  %v1257 = vpop.f32.mrb[0].mxu0
  %1258 = vmatprep.mubr.f32.mxu0 0.0
  %1259 = vmatmul.mubr.f32.gmra.mrb[0].mxu0 %v1187
  %v1260 = vpop.f32.mrb[0].mxu0
  %v1261 = vadd.f32 %v320, %v1260
  %v1262 = vpop.f32.mrb[0].mxu0
  %1263 = vdwg.mxu0
  %v1265 = vsel %vm372, %v42, 0
  %v1268 = vsel %vm372, %v43, 0
  %1270 = vmatprep.subr.mxu0 0.0
  %1271 = vmatpush1.msra.mxu0 %v140
  %1272 = vmatprep.subr.mxu0 0.0
  %1273 = vmatpush1.msra.mxu0 %v141
  %1274 = vmatprep.subr.mxu0 0.0
  %1275 = vmatpush1.msra.mxu0 %v142
  %1276 = vmatprep.subr.mxu0 0.0
  %1277 = vmatpush1.msra.mxu0 %v143
  %1278 = vmatprep.subr.mxu0 0.0
  %1279 = vmatpush1.msra.mxu0 %v144
  %1280 = vmatprep.subr.mxu0 0.0
  %1281 = vmatpush1.msra.mxu0 %v145
  %1282 = vmatprep.subr.mxu0 0.0
  %1283 = vmatpush1.msra.mxu0 %v146
  %1284 = vmatprep.subr.mxu0 0.0
  %1285 = vmatpush1.msra.mxu0 %v147
  %1286 = vmatprep.subr.mxu0 0.0
  %1287 = vmatpush1.msra.mxu0 0.0
  %1288 = vmatprep.subr.mxu0 0.0
  %1289 = vmatpush1.msra.mxu0 0.0
  %1290 = vmatprep.subr.mxu0 0.0
  %1291 = vmatpush1.msra.mxu0 0.0
  %1292 = vmatprep.subr.mxu0 0.0
  %1293 = vmatpush1.msra.mxu0 0.0
  %1294 = vmatprep.subr.mxu0 0.0
  %1295 = vmatpush1.msra.mxu0 0.0
  %1296 = vmatprep.subr.mxu0 0.0
  %1297 = vmatpush1.msra.mxu0 0.0
  %1298 = vmatprep.subr.mxu0 0.0
  %1299 = vmatpush1.msra.mxu0 0.0
  %1300 = vmatprep.subr.mxu0 0.0
  %1301 = vmatpush1.msra.mxu0 0.0
  %1302 = vmatprep.subr.mxu0 0.0
  %1303 = vmatpush1.msra.mxu0 0.0
  %1304 = vmatprep.subr.mxu0 0.0
  %1305 = vmatpush1.msra.mxu0 0.0
  %1306 = vmatprep.subr.mxu0 0.0
  %1307 = vmatpush1.msra.mxu0 0.0
  %1308 = vmatprep.subr.mxu0 0.0
  %1309 = vmatpush1.msra.mxu0 0.0
  %1310 = vmatprep.subr.mxu0 0.0
  %1311 = vmatpush1.msra.mxu0 0.0
  %1312 = vmatprep.subr.mxu0 0.0
  %1313 = vmatpush1.msra.mxu0 0.0
  %1314 = vmatprep.subr.mxu0 0.0
  %1315 = vmatpush1.msra.mxu0 0.0
  %1316 = vmatprep.subr.mxu0 0.0
  %1317 = vmatpush1.msra.mxu0 0.0
  %1318 = vmatprep.subr.mxu0 0.0
  %1319 = vmatpush1.msra.mxu0 0.0
  %1320 = vmatprep.subr.mxu0 0.0
  %1321 = vmatpush1.msra.mxu0 0.0
  %1322 = vmatprep.subr.mxu0 0.0
  %1323 = vmatpush1.msra.mxu0 0.0
  %1324 = vmatprep.subr.mxu0 0.0
  %1325 = vmatpush1.msra.mxu0 0.0
  %1326 = vmatprep.subr.mxu0 0.0
  %1327 = vmatpush1.msra.mxu0 0.0
  %1328 = vmatprep.subr.mxu0 0.0
  %1329 = vmatpush1.msra.mxu0 0.0
  %1330 = vmatprep.subr.mxu0 0.0
  %1331 = vmatpush1.msra.mxu0 0.0
  %1332 = vmatprep.subr.mxu0 0.0
  %1333 = vmatpush1.msra.mxu0 0.0
  %1334 = vmatprep.mubr.f32.mxu0 0.0
  %1335 = vmatmul.mubr.f32.gmra.mrb[0].mxu0 %v1265
  %v1336 = vpop.f32.mrb[0].mxu0
  %v1337 = vadd.f32 %v325, %v1336
  %v1338 = vpop.f32.mrb[0].mxu0
  %1339 = vmatprep.mubr.f32.mxu0 0.0
  %1340 = vmatmul.mubr.f32.gmra.mrb[0].mxu0 %v1268
  %v1341 = vpop.f32.mrb[0].mxu0
  %v1342 = vadd.f32 %v330, %v1341
  %v1343 = vpop.f32.mrb[0].mxu0
  %1344 = vdwg.mxu0
  %v1346 = vsel %vm372, %v44, 0
  %v1349 = vsel %vm372, %v45, 0
  %1351 = vmatprep.subr.mxu0 0.0
  %1352 = vmatpush1.msra.mxu0 %v148
  %1353 = vmatprep.subr.mxu0 0.0
  %1354 = vmatpush1.msra.mxu0 %v149
  %1355 = vmatprep.subr.mxu0 0.0
  %1356 = vmatpush1.msra.mxu0 %v150
  %1357 = vmatprep.subr.mxu0 0.0
  %1358 = vmatpush1.msra.mxu0 %v151
  %1359 = vmatprep.subr.mxu0 0.0
  %1360 = vmatpush1.msra.mxu0 %v152
  %1361 = vmatprep.subr.mxu0 0.0
  %1362 = vmatpush1.msra.mxu0 %v153
  %1363 = vmatprep.subr.mxu0 0.0
  %1364 = vmatpush1.msra.mxu0 %v154
  %1365 = vmatprep.subr.mxu0 0.0
  %1366 = vmatpush1.msra.mxu0 %v155
  %1367 = vmatprep.subr.mxu0 0.0
  %1368 = vmatpush1.msra.mxu0 0.0
  %1369 = vmatprep.subr.mxu0 0.0
  %1370 = vmatpush1.msra.mxu0 0.0
  %1371 = vmatprep.subr.mxu0 0.0
  %1372 = vmatpush1.msra.mxu0 0.0
  %1373 = vmatprep.subr.mxu0 0.0
  %1374 = vmatpush1.msra.mxu0 0.0
  %1375 = vmatprep.subr.mxu0 0.0
  %1376 = vmatpush1.msra.mxu0 0.0
  %1377 = vmatprep.subr.mxu0 0.0
  %1378 = vmatpush1.msra.mxu0 0.0
  %1379 = vmatprep.subr.mxu0 0.0
  %1380 = vmatpush1.msra.mxu0 0.0
  %1381 = vmatprep.subr.mxu0 0.0
  %1382 = vmatpush1.msra.mxu0 0.0
  %1383 = vmatprep.subr.mxu0 0.0
  %1384 = vmatpush1.msra.mxu0 0.0
  %1385 = vmatprep.subr.mxu0 0.0
  %1386 = vmatpush1.msra.mxu0 0.0
  %1387 = vmatprep.subr.mxu0 0.0
  %1388 = vmatpush1.msra.mxu0 0.0
  %1389 = vmatprep.subr.mxu0 0.0
  %1390 = vmatpush1.msra.mxu0 0.0
  %1391 = vmatprep.subr.mxu0 0.0
  %1392 = vmatpush1.msra.mxu0 0.0
  %1393 = vmatprep.subr.mxu0 0.0
  %1394 = vmatpush1.msra.mxu0 0.0
  %1395 = vmatprep.subr.mxu0 0.0
  %1396 = vmatpush1.msra.mxu0 0.0
  %1397 = vmatprep.subr.mxu0 0.0
  %1398 = vmatpush1.msra.mxu0 0.0
  %1399 = vmatprep.subr.mxu0 0.0
  %1400 = vmatpush1.msra.mxu0 0.0
  %1401 = vmatprep.subr.mxu0 0.0
  %1402 = vmatpush1.msra.mxu0 0.0
  %1403 = vmatprep.subr.mxu0 0.0
  %1404 = vmatpush1.msra.mxu0 0.0
  %1405 = vmatprep.subr.mxu0 0.0
  %1406 = vmatpush1.msra.mxu0 0.0
  %1407 = vmatprep.subr.mxu0 0.0
  %1408 = vmatpush1.msra.mxu0 0.0
  %1409 = vmatprep.subr.mxu0 0.0
  %1410 = vmatpush1.msra.mxu0 0.0
  %1411 = vmatprep.subr.mxu0 0.0
  %1412 = vmatpush1.msra.mxu0 0.0
  %1413 = vmatprep.subr.mxu0 0.0
  %1414 = vmatpush1.msra.mxu0 0.0
  %1415 = vmatprep.mubr.f32.mxu0 0.0
  %1416 = vmatmul.mubr.f32.gmra.mrb[0].mxu0 %v1346
  %v1417 = vpop.f32.mrb[0].mxu0
  %v1418 = vadd.f32 %v335, %v1417
  %v1419 = vpop.f32.mrb[0].mxu0
  %1420 = vmatprep.mubr.f32.mxu0 0.0
  %1421 = vmatmul.mubr.f32.gmra.mrb[0].mxu0 %v1349
  %v1422 = vpop.f32.mrb[0].mxu0
  %v1423 = vadd.f32 %v340, %v1422
  %v1424 = vpop.f32.mrb[0].mxu0
  %1425 = vdwg.mxu0
  %v1427 = vsel %vm372, %v46, 0
  %v1430 = vsel %vm372, %v47, 0
  %1432 = vmatprep.subr.mxu0 0.0
  %1433 = vmatpush1.msra.mxu0 %v156
  %1434 = vmatprep.subr.mxu0 0.0
  %1435 = vmatpush1.msra.mxu0 %v157
  %1436 = vmatprep.subr.mxu0 0.0
  %1437 = vmatpush1.msra.mxu0 %v158
  %1438 = vmatprep.subr.mxu0 0.0
  %1439 = vmatpush1.msra.mxu0 %v159
  %1440 = vmatprep.subr.mxu0 0.0
  %1441 = vmatpush1.msra.mxu0 %v160
  %1442 = vmatprep.subr.mxu0 0.0
  %1443 = vmatpush1.msra.mxu0 %v161
  %1444 = vmatprep.subr.mxu0 0.0
  %1445 = vmatpush1.msra.mxu0 %v162
  %1446 = vmatprep.subr.mxu0 0.0
  %1447 = vmatpush1.msra.mxu0 %v163
  %1448 = vmatprep.subr.mxu0 0.0
  %1449 = vmatpush1.msra.mxu0 0.0
  %1450 = vmatprep.subr.mxu0 0.0
  %1451 = vmatpush1.msra.mxu0 0.0
  %1452 = vmatprep.subr.mxu0 0.0
  %1453 = vmatpush1.msra.mxu0 0.0
  %1454 = vmatprep.subr.mxu0 0.0
  %1455 = vmatpush1.msra.mxu0 0.0
  %1456 = vmatprep.subr.mxu0 0.0
  %1457 = vmatpush1.msra.mxu0 0.0
  %1458 = vmatprep.subr.mxu0 0.0
  %1459 = vmatpush1.msra.mxu0 0.0
  %1460 = vmatprep.subr.mxu0 0.0
  %1461 = vmatpush1.msra.mxu0 0.0
  %1462 = vmatprep.subr.mxu0 0.0
  %1463 = vmatpush1.msra.mxu0 0.0
  %1464 = vmatprep.subr.mxu0 0.0
  %1465 = vmatpush1.msra.mxu0 0.0
  %1466 = vmatprep.subr.mxu0 0.0
  %1467 = vmatpush1.msra.mxu0 0.0
  %1468 = vmatprep.subr.mxu0 0.0
  %1469 = vmatpush1.msra.mxu0 0.0
  %1470 = vmatprep.subr.mxu0 0.0
  %1471 = vmatpush1.msra.mxu0 0.0
  %1472 = vmatprep.subr.mxu0 0.0
  %1473 = vmatpush1.msra.mxu0 0.0
  %1474 = vmatprep.subr.mxu0 0.0
  %1475 = vmatpush1.msra.mxu0 0.0
  %1476 = vmatprep.subr.mxu0 0.0
  %1477 = vmatpush1.msra.mxu0 0.0
  %1478 = vmatprep.subr.mxu0 0.0
  %1479 = vmatpush1.msra.mxu0 0.0
  %1480 = vmatprep.subr.mxu0 0.0
  %1481 = vmatpush1.msra.mxu0 0.0
  %1482 = vmatprep.subr.mxu0 0.0
  %1483 = vmatpush1.msra.mxu0 0.0
  %1484 = vmatprep.subr.mxu0 0.0
  %1485 = vmatpush1.msra.mxu0 0.0
  %1486 = vmatprep.subr.mxu0 0.0
  %1487 = vmatpush1.msra.mxu0 0.0
  %1488 = vmatprep.subr.mxu0 0.0
  %1489 = vmatpush1.msra.mxu0 0.0
  %1490 = vmatprep.subr.mxu0 0.0
  %1491 = vmatpush1.msra.mxu0 0.0
  %1492 = vmatprep.subr.mxu0 0.0
  %1493 = vmatpush1.msra.mxu0 0.0
  %1494 = vmatprep.subr.mxu0 0.0
  %1495 = vmatpush1.msra.mxu0 0.0
  %1496 = vmatprep.mubr.f32.mxu0 0.0
  %1497 = vmatmul.mubr.f32.gmra.mrb[0].mxu0 %v1427
  %v1498 = vpop.f32.mrb[0].mxu0
  %v1499 = vadd.f32 %v345, %v1498
  %v1500 = vpop.f32.mrb[0].mxu0
  %1501 = vmatprep.mubr.f32.mxu0 0.0
  %1502 = vmatmul.mubr.f32.gmra.mrb[0].mxu0 %v1430
  %v1503 = vpop.f32.mrb[0].mxu0
  %v1504 = vadd.f32 %v350, %v1503
  %v1505 = vpop.f32.mrb[0].mxu0
  %1506 = vdwg.mxu0
  %v1508 = vsel %vm372, %v48, 0
  %v1511 = vsel %vm372, %v49, 0
  %1513 = vmatprep.subr.mxu0 0.0
  %1514 = vmatpush1.msra.mxu0 %v164
  %1515 = vmatprep.subr.mxu0 0.0
  %1516 = vmatpush1.msra.mxu0 %v165
  %1517 = vmatprep.subr.mxu0 0.0
  %1518 = vmatpush1.msra.mxu0 %v166
  %1519 = vmatprep.subr.mxu0 0.0
  %1520 = vmatpush1.msra.mxu0 %v167
  %1521 = vmatprep.subr.mxu0 0.0
  %1522 = vmatpush1.msra.mxu0 %v168
  %1523 = vmatprep.subr.mxu0 0.0
  %1524 = vmatpush1.msra.mxu0 %v169
  %1525 = vmatprep.subr.mxu0 0.0
  %1526 = vmatpush1.msra.mxu0 %v170
  %1527 = vmatprep.subr.mxu0 0.0
  %1528 = vmatpush1.msra.mxu0 %v171
  %1529 = vmatprep.subr.mxu0 0.0
  %1530 = vmatpush1.msra.mxu0 0.0
  %1531 = vmatprep.subr.mxu0 0.0
  %1532 = vmatpush1.msra.mxu0 0.0
  %1533 = vmatprep.subr.mxu0 0.0
  %1534 = vmatpush1.msra.mxu0 0.0
  %1535 = vmatprep.subr.mxu0 0.0
  %1536 = vmatpush1.msra.mxu0 0.0
  %1537 = vmatprep.subr.mxu0 0.0
  %1538 = vmatpush1.msra.mxu0 0.0
  %1539 = vmatprep.subr.mxu0 0.0
  %1540 = vmatpush1.msra.mxu0 0.0
  %1541 = vmatprep.subr.mxu0 0.0
  %1542 = vmatpush1.msra.mxu0 0.0
  %1543 = vmatprep.subr.mxu0 0.0
  %1544 = vmatpush1.msra.mxu0 0.0
  %1545 = vmatprep.subr.mxu0 0.0
  %1546 = vmatpush1.msra.mxu0 0.0
  %1547 = vmatprep.subr.mxu0 0.0
  %1548 = vmatpush1.msra.mxu0 0.0
  %1549 = vmatprep.subr.mxu0 0.0
  %1550 = vmatpush1.msra.mxu0 0.0
  %1551 = vmatprep.subr.mxu0 0.0
  %1552 = vmatpush1.msra.mxu0 0.0
  %1553 = vmatprep.subr.mxu0 0.0
  %1554 = vmatpush1.msra.mxu0 0.0
  %1555 = vmatprep.subr.mxu0 0.0
  %1556 = vmatpush1.msra.mxu0 0.0
  %1557 = vmatprep.subr.mxu0 0.0
  %1558 = vmatpush1.msra.mxu0 0.0
  %1559 = vmatprep.subr.mxu0 0.0
  %1560 = vmatpush1.msra.mxu0 0.0
  %1561 = vmatprep.subr.mxu0 0.0
  %1562 = vmatpush1.msra.mxu0 0.0
  %1563 = vmatprep.subr.mxu0 0.0
  %1564 = vmatpush1.msra.mxu0 0.0
  %1565 = vmatprep.subr.mxu0 0.0
  %1566 = vmatpush1.msra.mxu0 0.0
  %1567 = vmatprep.subr.mxu0 0.0
  %1568 = vmatpush1.msra.mxu0 0.0
  %1569 = vmatprep.subr.mxu0 0.0
  %1570 = vmatpush1.msra.mxu0 0.0
  %1571 = vmatprep.subr.mxu0 0.0
  %1572 = vmatpush1.msra.mxu0 0.0
  %1573 = vmatprep.subr.mxu0 0.0
  %1574 = vmatpush1.msra.mxu0 0.0
  %1575 = vmatprep.subr.mxu0 0.0
  %1576 = vmatpush1.msra.mxu0 0.0
  %1577 = vmatprep.mubr.f32.mxu0 0.0
  %1578 = vmatmul.mubr.f32.gmra.mrb[0].mxu0 %v1508
  %v1579 = vpop.f32.mrb[0].mxu0
  %v1580 = vadd.f32 %v355, %v1579
  %v1581 = vpop.f32.mrb[0].mxu0
  %1582 = vmatprep.mubr.f32.mxu0 0.0
  %1583 = vmatmul.mubr.f32.gmra.mrb[0].mxu0 %v1511
  %v1584 = vpop.f32.mrb[0].mxu0
  %v1585 = vadd.f32 %v360, %v1584
  %v1586 = vpop.f32.mrb[0].mxu0
  %1587 = vdwg.mxu0
  %v1589 = vsel %vm372, %v50, 0
  %v1592 = vsel %vm372, %v51, 0
  %1594 = vmatprep.subr.mxu0 0.0
  %1595 = vmatpush1.msra.mxu0 %v172
  %1596 = vmatprep.subr.mxu0 0.0
  %1597 = vmatpush1.msra.mxu0 %v173
  %1598 = vmatprep.subr.mxu0 0.0
  %1599 = vmatpush1.msra.mxu0 %v174
  %1600 = vmatprep.subr.mxu0 0.0
  %1601 = vmatpush1.msra.mxu0 %v175
  %1602 = vmatprep.subr.mxu0 0.0
  %1603 = vmatpush1.msra.mxu0 %v176
  %1604 = vmatprep.subr.mxu0 0.0
  %1605 = vmatpush1.msra.mxu0 %v177
  %1606 = vmatprep.subr.mxu0 0.0
  %1607 = vmatpush1.msra.mxu0 %v178
  %1608 = vmatprep.subr.mxu0 0.0
  %1609 = vmatpush1.msra.mxu0 %v179
  %1610 = vmatprep.subr.mxu0 0.0
  %1611 = vmatpush1.msra.mxu0 0.0
  %1612 = vmatprep.subr.mxu0 0.0
  %1613 = vmatpush1.msra.mxu0 0.0
  %1614 = vmatprep.subr.mxu0 0.0
  %1615 = vmatpush1.msra.mxu0 0.0
  %1616 = vmatprep.subr.mxu0 0.0
  %1617 = vmatpush1.msra.mxu0 0.0
  %1618 = vmatprep.subr.mxu0 0.0
  %1619 = vmatpush1.msra.mxu0 0.0
  %1620 = vmatprep.subr.mxu0 0.0
  %1621 = vmatpush1.msra.mxu0 0.0
  %1622 = vmatprep.subr.mxu0 0.0
  %1623 = vmatpush1.msra.mxu0 0.0
  %1624 = vmatprep.subr.mxu0 0.0
  %1625 = vmatpush1.msra.mxu0 0.0
  %1626 = vmatprep.subr.mxu0 0.0
  %1627 = vmatpush1.msra.mxu0 0.0
  %1628 = vmatprep.subr.mxu0 0.0
  %1629 = vmatpush1.msra.mxu0 0.0
  %1630 = vmatprep.subr.mxu0 0.0
  %1631 = vmatpush1.msra.mxu0 0.0
  %1632 = vmatprep.subr.mxu0 0.0
  %1633 = vmatpush1.msra.mxu0 0.0
  %1634 = vmatprep.subr.mxu0 0.0
  %1635 = vmatpush1.msra.mxu0 0.0
  %1636 = vmatprep.subr.mxu0 0.0
  %1637 = vmatpush1.msra.mxu0 0.0
  %1638 = vmatprep.subr.mxu0 0.0
  %1639 = vmatpush1.msra.mxu0 0.0
  %1640 = vmatprep.subr.mxu0 0.0
  %1641 = vmatpush1.msra.mxu0 0.0
  %1642 = vmatprep.subr.mxu0 0.0
  %1643 = vmatpush1.msra.mxu0 0.0
  %1644 = vmatprep.subr.mxu0 0.0
  %1645 = vmatpush1.msra.mxu0 0.0
  %1646 = vmatprep.subr.mxu0 0.0
  %1647 = vmatpush1.msra.mxu0 0.0
  %1648 = vmatprep.subr.mxu0 0.0
  %1649 = vmatpush1.msra.mxu0 0.0
  %1650 = vmatprep.subr.mxu0 0.0
  %1651 = vmatpush1.msra.mxu0 0.0
  %1652 = vmatprep.subr.mxu0 0.0
  %1653 = vmatpush1.msra.mxu0 0.0
  %1654 = vmatprep.subr.mxu0 0.0
  %1655 = vmatpush1.msra.mxu0 0.0
  %1656 = vmatprep.subr.mxu0 0.0
  %1657 = vmatpush1.msra.mxu0 0.0
  %1658 = vmatprep.mubr.f32.mxu0 0.0
  %1659 = vmatmul.mubr.f32.gmra.mrb[0].mxu0 %v1589
  %v1660 = vpop.f32.mrb[0].mxu0
  %v1661 = vadd.f32 %v365, %v1660
  %v1662 = vpop.f32.mrb[0].mxu0
  %1663 = vmatprep.mubr.f32.mxu0 0.0
  %1664 = vmatmul.mubr.f32.gmra.mrb[0].mxu0 %v1592
  %v1665 = vpop.f32.mrb[0].mxu0
  %v1666 = vadd.f32 %v370, %v1665
  %v1667 = vpop.f32.mrb[0].mxu0
  %1668 = vdwg.mxu0
  %v1669 = vlaneseq
  %v1670 = vshrl.u32 %v1669, 7
  %v1671 = vsub.s32 0, %v1670
  %v1672 = vrot.slane %v446, %v1671
  %v1673 = vlaneseq
  %v1674 = vshrl.u32 %v1673, 7
  %v1675 = vsub.s32 0, %v1674
  %v1676 = vrot.slane %v527, %v1675
  %v1677 = vlaneseq
  %v1678 = vshrl.u32 %v1677, 7
  %v1679 = vsub.s32 0, %v1678
  %v1680 = vrot.slane %v608, %v1679
  %v1681 = vlaneseq
  %v1682 = vshrl.u32 %v1681, 7
  %v1683 = vsub.s32 0, %v1682
  %v1684 = vrot.slane %v689, %v1683
  %v1685 = vlaneseq
  %v1686 = vshrl.u32 %v1685, 7
  %v1687 = vsub.s32 0, %v1686
  %v1688 = vrot.slane %v770, %v1687
  %v1689 = vlaneseq
  %v1690 = vshrl.u32 %v1689, 7
  %v1691 = vsub.s32 0, %v1690
  %v1692 = vrot.slane %v851, %v1691
  %v1693 = vlaneseq
  %v1694 = vshrl.u32 %v1693, 7
  %v1695 = vsub.s32 0, %v1694
  %v1696 = vrot.slane %v932, %v1695
  %v1697 = vlaneseq
  %v1698 = vshrl.u32 %v1697, 7
  %v1699 = vsub.s32 0, %v1698
  %v1700 = vrot.slane %v1013, %v1699
  %v1701 = vlaneseq
  %v1702 = vshrl.u32 %v1701, 7
  %v1703 = vsub.s32 0, %v1702
  %v1704 = vrot.slane %v1094, %v1703
  %v1705 = vlaneseq
  %v1706 = vshrl.u32 %v1705, 7
  %v1707 = vsub.s32 0, %v1706
  %v1708 = vrot.slane %v1175, %v1707
  %v1709 = vlaneseq
  %v1710 = vshrl.u32 %v1709, 7
  %v1711 = vsub.s32 0, %v1710
  %v1712 = vrot.slane %v1256, %v1711
  %v1713 = vlaneseq
  %v1714 = vshrl.u32 %v1713, 7
  %v1715 = vsub.s32 0, %v1714
  %v1716 = vrot.slane %v1337, %v1715
  %v1717 = vlaneseq
  %v1718 = vshrl.u32 %v1717, 7
  %v1719 = vsub.s32 0, %v1718
  %v1720 = vrot.slane %v1418, %v1719
  %v1721 = vlaneseq
  %v1722 = vshrl.u32 %v1721, 7
  %v1723 = vsub.s32 0, %v1722
  %v1724 = vrot.slane %v1499, %v1723
  %v1725 = vlaneseq
  %v1726 = vshrl.u32 %v1725, 7
  %v1727 = vsub.s32 0, %v1726
  %v1728 = vrot.slane %v1580, %v1727
  %v1729 = vlaneseq
  %v1730 = vshrl.u32 %v1729, 7
  %v1731 = vsub.s32 0, %v1730
  %v1732 = vrot.slane %v1661, %v1731
  %v1749 = vrot.slane %v446, 4
  %v1750 = vrot.slane %v527, 3
  %vm1751 = vcmask 1041409
  %v1752 = vsel %vm1751, %v1750, %v1749
  %v1753 = vrot.slane %v608, 2
  %vm1754 = vcmask 1042434
  %v1755 = vsel %vm1754, %v1753, %v1752
  %v1756 = vrot.slane %v689, 1
  %vm1757 = vcmask 1043459
  %v1758 = vsel %vm1757, %v1756, %v1755
  %vm1759 = vcmask 1044484
  %v1760 = vsel %vm1759, %v770, %v1758
  %v1761 = vrot.slane %v851, 7
  %vm1762 = vcmask 1045509
  %v1763 = vsel %vm1762, %v1761, %v1760
  %v1764 = vrot.slane %v932, 6
  %vm1765 = vcmask 1046534
  %v1766 = vsel %vm1765, %v1764, %v1763
  %v1767 = vrot.slane %v1013, 5
  %vm1768 = vcmask 1047559
  %v1769 = vsel %vm1768, %v1767, %v1766
  %v1770 = vrot.slane %v1094, 4
  %v1771 = vrot.slane %v1175, 3
  %v1772 = vsel %vm1751, %v1771, %v1770
  %v1773 = vrot.slane %v1256, 2
  %v1774 = vsel %vm1754, %v1773, %v1772
  %v1775 = vrot.slane %v1337, 1
  %v1776 = vsel %vm1757, %v1775, %v1774
  %v1777 = vsel %vm1759, %v1418, %v1776
  %v1778 = vrot.slane %v1499, 7
  %v1779 = vsel %vm1762, %v1778, %v1777
  %v1780 = vrot.slane %v1580, 6
  %v1781 = vsel %vm1765, %v1780, %v1779
  %v1782 = vrot.slane %v1661, 5
  %v1783 = vsel %vm1768, %v1782, %v1781
  %v1786 = vmul.f32 %v1672, %v1769
  %v1787 = vmul.f32 %v1672, %v1783
  %v1788 = vmul.f32 %v1676, %v1769
  %v1789 = vmul.f32 %v1676, %v1783
  %v1790 = vmul.f32 %v1680, %v1769
  %v1791 = vmul.f32 %v1680, %v1783
  %v1792 = vmul.f32 %v1684, %v1769
  %v1793 = vmul.f32 %v1684, %v1783
  %v1794 = vmul.f32 %v1688, %v1769
  %v1795 = vmul.f32 %v1688, %v1783
  %v1796 = vmul.f32 %v1692, %v1769
  %v1797 = vmul.f32 %v1692, %v1783
  %v1798 = vmul.f32 %v1696, %v1769
  %v1799 = vmul.f32 %v1696, %v1783
  %v1800 = vmul.f32 %v1700, %v1769
  %v1801 = vmul.f32 %v1700, %v1783
  %v1802 = vmul.f32 %v1704, %v1769
  %v1803 = vmul.f32 %v1704, %v1783
  %v1804 = vmul.f32 %v1708, %v1769
  %v1805 = vmul.f32 %v1708, %v1783
  %v1806 = vmul.f32 %v1712, %v1769
  %v1807 = vmul.f32 %v1712, %v1783
  %v1808 = vmul.f32 %v1716, %v1769
  %v1809 = vmul.f32 %v1716, %v1783
  %v1810 = vmul.f32 %v1720, %v1769
  %v1811 = vmul.f32 %v1720, %v1783
  %v1812 = vmul.f32 %v1724, %v1769
  %v1813 = vmul.f32 %v1724, %v1783
  %v1814 = vmul.f32 %v1728, %v1769
  %v1815 = vmul.f32 %v1728, %v1783
  %v1816 = vmul.f32 %v1732, %v1769
  %v1817 = vmul.f32 %v1732, %v1783
  %v1818 = vlaneseq
  %v1819 = vshrl.u32 %v1818, 7
  %v1820 = vsub.s32 1, %v1819
  %v1821 = vrot.slane %v446, %v1820
  %v1822 = vlaneseq
  %v1823 = vshrl.u32 %v1822, 7
  %v1824 = vsub.s32 1, %v1823
  %v1825 = vrot.slane %v527, %v1824
  %v1826 = vlaneseq
  %v1827 = vshrl.u32 %v1826, 7
  %v1828 = vsub.s32 1, %v1827
  %v1829 = vrot.slane %v608, %v1828
  %v1830 = vlaneseq
  %v1831 = vshrl.u32 %v1830, 7
  %v1832 = vsub.s32 1, %v1831
  %v1833 = vrot.slane %v689, %v1832
  %v1834 = vlaneseq
  %v1835 = vshrl.u32 %v1834, 7
  %v1836 = vsub.s32 1, %v1835
  %v1837 = vrot.slane %v770, %v1836
  %v1838 = vlaneseq
  %v1839 = vshrl.u32 %v1838, 7
  %v1840 = vsub.s32 1, %v1839
  %v1841 = vrot.slane %v851, %v1840
  %v1842 = vlaneseq
  %v1843 = vshrl.u32 %v1842, 7
  %v1844 = vsub.s32 1, %v1843
  %v1845 = vrot.slane %v932, %v1844
  %v1846 = vlaneseq
  %v1847 = vshrl.u32 %v1846, 7
  %v1848 = vsub.s32 1, %v1847
  %v1849 = vrot.slane %v1013, %v1848
  %v1850 = vlaneseq
  %v1851 = vshrl.u32 %v1850, 7
  %v1852 = vsub.s32 1, %v1851
  %v1853 = vrot.slane %v1094, %v1852
  %v1854 = vlaneseq
  %v1855 = vshrl.u32 %v1854, 7
  %v1856 = vsub.s32 1, %v1855
  %v1857 = vrot.slane %v1175, %v1856
  %v1858 = vlaneseq
  %v1859 = vshrl.u32 %v1858, 7
  %v1860 = vsub.s32 1, %v1859
  %v1861 = vrot.slane %v1256, %v1860
  %v1862 = vlaneseq
  %v1863 = vshrl.u32 %v1862, 7
  %v1864 = vsub.s32 1, %v1863
  %v1865 = vrot.slane %v1337, %v1864
  %v1866 = vlaneseq
  %v1867 = vshrl.u32 %v1866, 7
  %v1868 = vsub.s32 1, %v1867
  %v1869 = vrot.slane %v1418, %v1868
  %v1870 = vlaneseq
  %v1871 = vshrl.u32 %v1870, 7
  %v1872 = vsub.s32 1, %v1871
  %v1873 = vrot.slane %v1499, %v1872
  %v1874 = vlaneseq
  %v1875 = vshrl.u32 %v1874, 7
  %v1876 = vsub.s32 1, %v1875
  %v1877 = vrot.slane %v1580, %v1876
  %v1878 = vlaneseq
  %v1879 = vshrl.u32 %v1878, 7
  %v1880 = vsub.s32 1, %v1879
  %v1881 = vrot.slane %v1661, %v1880
  %v1882 = vrot.slane %v446, 5
  %v1883 = vrot.slane %v527, 4
  %v1884 = vsel %vm1751, %v1883, %v1882
  %v1885 = vrot.slane %v608, 3
  %v1886 = vsel %vm1754, %v1885, %v1884
  %v1887 = vrot.slane %v689, 2
  %v1888 = vsel %vm1757, %v1887, %v1886
  %v1889 = vrot.slane %v770, 1
  %v1890 = vsel %vm1759, %v1889, %v1888
  %v1891 = vsel %vm1762, %v851, %v1890
  %v1892 = vrot.slane %v932, 7
  %v1893 = vsel %vm1765, %v1892, %v1891
  %v1894 = vrot.slane %v1013, 6
  %v1895 = vsel %vm1768, %v1894, %v1893
  %v1896 = vrot.slane %v1094, 5
  %v1897 = vrot.slane %v1175, 4
  %v1898 = vsel %vm1751, %v1897, %v1896
  %v1899 = vrot.slane %v1256, 3
  %v1900 = vsel %vm1754, %v1899, %v1898
  %v1901 = vrot.slane %v1337, 2
  %v1902 = vsel %vm1757, %v1901, %v1900
  %v1903 = vrot.slane %v1418, 1
  %v1904 = vsel %vm1759, %v1903, %v1902
  %v1905 = vsel %vm1762, %v1499, %v1904
  %v1906 = vrot.slane %v1580, 7
  %v1907 = vsel %vm1765, %v1906, %v1905
  %v1908 = vrot.slane %v1661, 6
  %v1909 = vsel %vm1768, %v1908, %v1907
  %v1912 = vmul.f32 %v1821, %v1895
  %v1913 = vmul.f32 %v1821, %v1909
  %v1914 = vmul.f32 %v1825, %v1895
  %v1915 = vmul.f32 %v1825, %v1909
  %v1916 = vmul.f32 %v1829, %v1895
  %v1917 = vmul.f32 %v1829, %v1909
  %v1918 = vmul.f32 %v1833, %v1895
  %v1919 = vmul.f32 %v1833, %v1909
  %v1920 = vmul.f32 %v1837, %v1895
  %v1921 = vmul.f32 %v1837, %v1909
  %v1922 = vmul.f32 %v1841, %v1895
  %v1923 = vmul.f32 %v1841, %v1909
  %v1924 = vmul.f32 %v1845, %v1895
  %v1925 = vmul.f32 %v1845, %v1909
  %v1926 = vmul.f32 %v1849, %v1895
  %v1927 = vmul.f32 %v1849, %v1909
  %v1928 = vmul.f32 %v1853, %v1895
  %v1929 = vmul.f32 %v1853, %v1909
  %v1930 = vmul.f32 %v1857, %v1895
  %v1931 = vmul.f32 %v1857, %v1909
  %v1932 = vmul.f32 %v1861, %v1895
  %v1933 = vmul.f32 %v1861, %v1909
  %v1934 = vmul.f32 %v1865, %v1895
  %v1935 = vmul.f32 %v1865, %v1909
  %v1936 = vmul.f32 %v1869, %v1895
  %v1937 = vmul.f32 %v1869, %v1909
  %v1938 = vmul.f32 %v1873, %v1895
  %v1939 = vmul.f32 %v1873, %v1909
  %v1940 = vmul.f32 %v1877, %v1895
  %v1941 = vmul.f32 %v1877, %v1909
  %v1942 = vmul.f32 %v1881, %v1895
  %v1943 = vmul.f32 %v1881, %v1909
  %v1944 = vadd.f32 %v1786, %v1912
  %v1945 = vadd.f32 %v1787, %v1913
  %v1946 = vadd.f32 %v1788, %v1914
  %v1947 = vadd.f32 %v1789, %v1915
  %v1948 = vadd.f32 %v1790, %v1916
  %v1949 = vadd.f32 %v1791, %v1917
  %v1950 = vadd.f32 %v1792, %v1918
  %v1951 = vadd.f32 %v1793, %v1919
  %v1952 = vadd.f32 %v1794, %v1920
  %v1953 = vadd.f32 %v1795, %v1921
  %v1954 = vadd.f32 %v1796, %v1922
  %v1955 = vadd.f32 %v1797, %v1923
  %v1956 = vadd.f32 %v1798, %v1924
  %v1957 = vadd.f32 %v1799, %v1925
  %v1958 = vadd.f32 %v1800, %v1926
  %v1959 = vadd.f32 %v1801, %v1927
  %v1960 = vadd.f32 %v1802, %v1928
  %v1961 = vadd.f32 %v1803, %v1929
  %v1962 = vadd.f32 %v1804, %v1930
  %v1963 = vadd.f32 %v1805, %v1931
  %v1964 = vadd.f32 %v1806, %v1932
  %v1965 = vadd.f32 %v1807, %v1933
  %v1966 = vadd.f32 %v1808, %v1934
  %v1967 = vadd.f32 %v1809, %v1935
  %v1968 = vadd.f32 %v1810, %v1936
  %v1969 = vadd.f32 %v1811, %v1937
  %v1970 = vadd.f32 %v1812, %v1938
  %v1971 = vadd.f32 %v1813, %v1939
  %v1972 = vadd.f32 %v1814, %v1940
  %v1973 = vadd.f32 %v1815, %v1941
  %v1974 = vadd.f32 %v1816, %v1942
  %v1975 = vadd.f32 %v1817, %v1943
  %vm1976 = vcmask 15360
  %v1977 = vsel %vm1976, %v1944, -inf
  %v1978 = vsel %vm1976, %v1945, -inf
  %v1979 = vmax.f32 %v1977, %v1978
  %v1980 = vrot.slane %v1979, 4
  %v1981 = vmax.f32 %v1979, %v1980
  %v1982 = vrot.slane %v1981, 2
  %v1983 = vmax.f32 %v1981, %v1982
  %v1984 = vrot.slane %v1983, 1
  %v1985 = vmax.f32 %v1983, %v1984
  %v1986 = vsel %vm1976, %v1946, -inf
  %v1987 = vsel %vm1976, %v1947, -inf
  %v1988 = vmax.f32 %v1986, %v1987
  %v1989 = vrot.slane %v1988, 4
  %v1990 = vmax.f32 %v1988, %v1989
  %v1991 = vrot.slane %v1990, 2
  %v1992 = vmax.f32 %v1990, %v1991
  %v1993 = vrot.slane %v1992, 1
  %v1994 = vmax.f32 %v1992, %v1993
  %v1995 = vsel %vm1976, %v1948, -inf
  %v1996 = vsel %vm1976, %v1949, -inf
  %v1997 = vmax.f32 %v1995, %v1996
  %v1998 = vrot.slane %v1997, 4
  %v1999 = vmax.f32 %v1997, %v1998
  %v2000 = vrot.slane %v1999, 2
  %v2001 = vmax.f32 %v1999, %v2000
  %v2002 = vrot.slane %v2001, 1
  %v2003 = vmax.f32 %v2001, %v2002
  %v2004 = vsel %vm1976, %v1950, -inf
  %v2005 = vsel %vm1976, %v1951, -inf
  %v2006 = vmax.f32 %v2004, %v2005
  %v2007 = vrot.slane %v2006, 4
  %v2008 = vmax.f32 %v2006, %v2007
  %v2009 = vrot.slane %v2008, 2
  %v2010 = vmax.f32 %v2008, %v2009
  %v2011 = vrot.slane %v2010, 1
  %v2012 = vmax.f32 %v2010, %v2011
  %v2013 = vsel %vm1976, %v1952, -inf
  %v2014 = vsel %vm1976, %v1953, -inf
  %v2015 = vmax.f32 %v2013, %v2014
  %v2016 = vrot.slane %v2015, 4
  %v2017 = vmax.f32 %v2015, %v2016
  %v2018 = vrot.slane %v2017, 2
  %v2019 = vmax.f32 %v2017, %v2018
  %v2020 = vrot.slane %v2019, 1
  %v2021 = vmax.f32 %v2019, %v2020
  %v2022 = vsel %vm1976, %v1954, -inf
  %v2023 = vsel %vm1976, %v1955, -inf
  %v2024 = vmax.f32 %v2022, %v2023
  %v2025 = vrot.slane %v2024, 4
  %v2026 = vmax.f32 %v2024, %v2025
  %v2027 = vrot.slane %v2026, 2
  %v2028 = vmax.f32 %v2026, %v2027
  %v2029 = vrot.slane %v2028, 1
  %v2030 = vmax.f32 %v2028, %v2029
  %v2031 = vsel %vm1976, %v1956, -inf
  %v2032 = vsel %vm1976, %v1957, -inf
  %v2033 = vmax.f32 %v2031, %v2032
  %v2034 = vrot.slane %v2033, 4
  %v2035 = vmax.f32 %v2033, %v2034
  %v2036 = vrot.slane %v2035, 2
  %v2037 = vmax.f32 %v2035, %v2036
  %v2038 = vrot.slane %v2037, 1
  %v2039 = vmax.f32 %v2037, %v2038
  %v2040 = vsel %vm1976, %v1958, -inf
  %v2041 = vsel %vm1976, %v1959, -inf
  %v2042 = vmax.f32 %v2040, %v2041
  %v2043 = vrot.slane %v2042, 4
  %v2044 = vmax.f32 %v2042, %v2043
  %v2045 = vrot.slane %v2044, 2
  %v2046 = vmax.f32 %v2044, %v2045
  %v2047 = vrot.slane %v2046, 1
  %v2048 = vmax.f32 %v2046, %v2047
  %v2049 = vsel %vm1976, %v1960, -inf
  %v2050 = vsel %vm1976, %v1961, -inf
  %v2051 = vmax.f32 %v2049, %v2050
  %v2052 = vrot.slane %v2051, 4
  %v2053 = vmax.f32 %v2051, %v2052
  %v2054 = vrot.slane %v2053, 2
  %v2055 = vmax.f32 %v2053, %v2054
  %v2056 = vrot.slane %v2055, 1
  %v2057 = vmax.f32 %v2055, %v2056
  %v2058 = vsel %vm1976, %v1962, -inf
  %v2059 = vsel %vm1976, %v1963, -inf
  %v2060 = vmax.f32 %v2058, %v2059
  %v2061 = vrot.slane %v2060, 4
  %v2062 = vmax.f32 %v2060, %v2061
  %v2063 = vrot.slane %v2062, 2
  %v2064 = vmax.f32 %v2062, %v2063
  %v2065 = vrot.slane %v2064, 1
  %v2066 = vmax.f32 %v2064, %v2065
  %v2067 = vsel %vm1976, %v1964, -inf
  %v2068 = vsel %vm1976, %v1965, -inf
  %v2069 = vmax.f32 %v2067, %v2068
  %v2070 = vrot.slane %v2069, 4
  %v2071 = vmax.f32 %v2069, %v2070
  %v2072 = vrot.slane %v2071, 2
  %v2073 = vmax.f32 %v2071, %v2072
  %v2074 = vrot.slane %v2073, 1
  %v2075 = vmax.f32 %v2073, %v2074
  %v2076 = vsel %vm1976, %v1966, -inf
  %v2077 = vsel %vm1976, %v1967, -inf
  %v2078 = vmax.f32 %v2076, %v2077
  %v2079 = vrot.slane %v2078, 4
  %v2080 = vmax.f32 %v2078, %v2079
  %v2081 = vrot.slane %v2080, 2
  %v2082 = vmax.f32 %v2080, %v2081
  %v2083 = vrot.slane %v2082, 1
  %v2084 = vmax.f32 %v2082, %v2083
  %v2085 = vsel %vm1976, %v1968, -inf
  %v2086 = vsel %vm1976, %v1969, -inf
  %v2087 = vmax.f32 %v2085, %v2086
  %v2088 = vrot.slane %v2087, 4
  %v2089 = vmax.f32 %v2087, %v2088
  %v2090 = vrot.slane %v2089, 2
  %v2091 = vmax.f32 %v2089, %v2090
  %v2092 = vrot.slane %v2091, 1
  %v2093 = vmax.f32 %v2091, %v2092
  %v2094 = vsel %vm1976, %v1970, -inf
  %v2095 = vsel %vm1976, %v1971, -inf
  %v2096 = vmax.f32 %v2094, %v2095
  %v2097 = vrot.slane %v2096, 4
  %v2098 = vmax.f32 %v2096, %v2097
  %v2099 = vrot.slane %v2098, 2
  %v2100 = vmax.f32 %v2098, %v2099
  %v2101 = vrot.slane %v2100, 1
  %v2102 = vmax.f32 %v2100, %v2101
  %v2103 = vsel %vm1976, %v1972, -inf
  %v2104 = vsel %vm1976, %v1973, -inf
  %v2105 = vmax.f32 %v2103, %v2104
  %v2106 = vrot.slane %v2105, 4
  %v2107 = vmax.f32 %v2105, %v2106
  %v2108 = vrot.slane %v2107, 2
  %v2109 = vmax.f32 %v2107, %v2108
  %v2110 = vrot.slane %v2109, 1
  %v2111 = vmax.f32 %v2109, %v2110
  %v2112 = vsel %vm1976, %v1974, -inf
  %v2113 = vsel %vm1976, %v1975, -inf
  %v2114 = vmax.f32 %v2112, %v2113
  %v2115 = vrot.slane %v2114, 4
  %v2116 = vmax.f32 %v2114, %v2115
  %v2117 = vrot.slane %v2116, 2
  %v2118 = vmax.f32 %v2116, %v2117
  %v2119 = vrot.slane %v2118, 1
  %v2120 = vmax.f32 %v2118, %v2119
  %v2121 = vsub.f32 %v1944, %v1985
  %v2122 = vsub.f32 %v1945, %v1985
  %v2123 = vsub.f32 %v1946, %v1994
  %v2124 = vsub.f32 %v1947, %v1994
  %v2125 = vsub.f32 %v1948, %v2003
  %v2126 = vsub.f32 %v1949, %v2003
  %v2127 = vsub.f32 %v1950, %v2012
  %v2128 = vsub.f32 %v1951, %v2012
  %v2129 = vsub.f32 %v1952, %v2021
  %v2130 = vsub.f32 %v1953, %v2021
  %v2131 = vsub.f32 %v1954, %v2030
  %v2132 = vsub.f32 %v1955, %v2030
  %v2133 = vsub.f32 %v1956, %v2039
  %v2134 = vsub.f32 %v1957, %v2039
  %v2135 = vsub.f32 %v1958, %v2048
  %v2136 = vsub.f32 %v1959, %v2048
  %v2137 = vsub.f32 %v1960, %v2057
  %v2138 = vsub.f32 %v1961, %v2057
  %v2139 = vsub.f32 %v1962, %v2066
  %v2140 = vsub.f32 %v1963, %v2066
  %v2141 = vsub.f32 %v1964, %v2075
  %v2142 = vsub.f32 %v1965, %v2075
  %v2143 = vsub.f32 %v1966, %v2084
  %v2144 = vsub.f32 %v1967, %v2084
  %v2145 = vsub.f32 %v1968, %v2093
  %v2146 = vsub.f32 %v1969, %v2093
  %v2147 = vsub.f32 %v1970, %v2102
  %v2148 = vsub.f32 %v1971, %v2102
  %v2149 = vsub.f32 %v1972, %v2111
  %v2150 = vsub.f32 %v1973, %v2111
  %v2151 = vsub.f32 %v1974, %v2120
  %v2152 = vsub.f32 %v1975, %v2120
  %v2153 = vmul.f32 %v2121, 1.442695
  %v2154 = vpow.pop %v2153
  %v2155 = vmul.f32 %v2122, 1.442695
  %v2156 = vpow.pop %v2155
  %v2157 = vmul.f32 %v2123, 1.442695
  %v2158 = vpow.pop %v2157
  %v2159 = vmul.f32 %v2124, 1.442695
  %v2160 = vpow.pop %v2159
  %v2161 = vmul.f32 %v2125, 1.442695
  %v2162 = vpow.pop %v2161
  %v2163 = vmul.f32 %v2126, 1.442695
  %v2164 = vpow.pop %v2163
  %v2165 = vmul.f32 %v2127, 1.442695
  %v2166 = vpow.pop %v2165
  %v2167 = vmul.f32 %v2128, 1.442695
  %v2168 = vpow.pop %v2167
  %v2169 = vmul.f32 %v2129, 1.442695
  %v2170 = vpow.pop %v2169
  %v2171 = vmul.f32 %v2130, 1.442695
  %v2172 = vpow.pop %v2171
  %v2173 = vmul.f32 %v2131, 1.442695
  %v2174 = vpow.pop %v2173
  %v2175 = vmul.f32 %v2132, 1.442695
  %v2176 = vpow.pop %v2175
  %v2177 = vmul.f32 %v2133, 1.442695
  %v2178 = vpow.pop %v2177
  %v2179 = vmul.f32 %v2134, 1.442695
  %v2180 = vpow.pop %v2179
  %v2181 = vmul.f32 %v2135, 1.442695
  %v2182 = vpow.pop %v2181
  %v2183 = vmul.f32 %v2136, 1.442695
  %v2184 = vpow.pop %v2183
  %v2185 = vmul.f32 %v2137, 1.442695
  %v2186 = vpow.pop %v2185
  %v2187 = vmul.f32 %v2138, 1.442695
  %v2188 = vpow.pop %v2187
  %v2189 = vmul.f32 %v2139, 1.442695
  %v2190 = vpow.pop %v2189
  %v2191 = vmul.f32 %v2140, 1.442695
  %v2192 = vpow.pop %v2191
  %v2193 = vmul.f32 %v2141, 1.442695
  %v2194 = vpow.pop %v2193
  %v2195 = vmul.f32 %v2142, 1.442695
  %v2196 = vpow.pop %v2195
  %v2197 = vmul.f32 %v2143, 1.442695
  %v2198 = vpow.pop %v2197
  %v2199 = vmul.f32 %v2144, 1.442695
  %v2200 = vpow.pop %v2199
  %v2201 = vmul.f32 %v2145, 1.442695
  %v2202 = vpow.pop %v2201
  %v2203 = vmul.f32 %v2146, 1.442695
  %v2204 = vpow.pop %v2203
  %v2205 = vmul.f32 %v2147, 1.442695
  %v2206 = vpow.pop %v2205
  %v2207 = vmul.f32 %v2148, 1.442695
  %v2208 = vpow.pop %v2207
  %v2209 = vmul.f32 %v2149, 1.442695
  %v2210 = vpow.pop %v2209
  %v2211 = vmul.f32 %v2150, 1.442695
  %v2212 = vpow.pop %v2211
  %v2213 = vmul.f32 %v2151, 1.442695
  %v2214 = vpow.pop %v2213
  %v2215 = vmul.f32 %v2152, 1.442695
  %v2216 = vpow.pop %v2215
  %v2217 = vsel %vm1976, %v2154, 0.0
  %v2218 = vsel %vm1976, %v2156, 0.0
  %v2219 = vadd.f32 %v2217, %v2218
  %v2220 = vrot.slane %v2219, 4
  %v2221 = vadd.f32 %v2219, %v2220
  %v2222 = vrot.slane %v2221, 2
  %v2223 = vadd.f32 %v2221, %v2222
  %v2224 = vrot.slane %v2223, 1
  %v2225 = vadd.f32 %v2223, %v2224
  %v2226 = vsel %vm1976, %v2158, 0.0
  %v2227 = vsel %vm1976, %v2160, 0.0
  %v2228 = vadd.f32 %v2226, %v2227
  %v2229 = vrot.slane %v2228, 4
  %v2230 = vadd.f32 %v2228, %v2229
  %v2231 = vrot.slane %v2230, 2
  %v2232 = vadd.f32 %v2230, %v2231
  %v2233 = vrot.slane %v2232, 1
  %v2234 = vadd.f32 %v2232, %v2233
  %v2235 = vsel %vm1976, %v2162, 0.0
  %v2236 = vsel %vm1976, %v2164, 0.0
  %v2237 = vadd.f32 %v2235, %v2236
  %v2238 = vrot.slane %v2237, 4
  %v2239 = vadd.f32 %v2237, %v2238
  %v2240 = vrot.slane %v2239, 2
  %v2241 = vadd.f32 %v2239, %v2240
  %v2242 = vrot.slane %v2241, 1
  %v2243 = vadd.f32 %v2241, %v2242
  %v2244 = vsel %vm1976, %v2166, 0.0
  %v2245 = vsel %vm1976, %v2168, 0.0
  %v2246 = vadd.f32 %v2244, %v2245
  %v2247 = vrot.slane %v2246, 4
  %v2248 = vadd.f32 %v2246, %v2247
  %v2249 = vrot.slane %v2248, 2
  %v2250 = vadd.f32 %v2248, %v2249
  %v2251 = vrot.slane %v2250, 1
  %v2252 = vadd.f32 %v2250, %v2251
  %v2253 = vsel %vm1976, %v2170, 0.0
  %v2254 = vsel %vm1976, %v2172, 0.0
  %v2255 = vadd.f32 %v2253, %v2254
  %v2256 = vrot.slane %v2255, 4
  %v2257 = vadd.f32 %v2255, %v2256
  %v2258 = vrot.slane %v2257, 2
  %v2259 = vadd.f32 %v2257, %v2258
  %v2260 = vrot.slane %v2259, 1
  %v2261 = vadd.f32 %v2259, %v2260
  %v2262 = vsel %vm1976, %v2174, 0.0
  %v2263 = vsel %vm1976, %v2176, 0.0
  %v2264 = vadd.f32 %v2262, %v2263
  %v2265 = vrot.slane %v2264, 4
  %v2266 = vadd.f32 %v2264, %v2265
  %v2267 = vrot.slane %v2266, 2
  %v2268 = vadd.f32 %v2266, %v2267
  %v2269 = vrot.slane %v2268, 1
  %v2270 = vadd.f32 %v2268, %v2269
  %v2271 = vsel %vm1976, %v2178, 0.0
  %v2272 = vsel %vm1976, %v2180, 0.0
  %v2273 = vadd.f32 %v2271, %v2272
  %v2274 = vrot.slane %v2273, 4
  %v2275 = vadd.f32 %v2273, %v2274
  %v2276 = vrot.slane %v2275, 2
  %v2277 = vadd.f32 %v2275, %v2276
  %v2278 = vrot.slane %v2277, 1
  %v2279 = vadd.f32 %v2277, %v2278
  %v2280 = vsel %vm1976, %v2182, 0.0
  %v2281 = vsel %vm1976, %v2184, 0.0
  %v2282 = vadd.f32 %v2280, %v2281
  %v2283 = vrot.slane %v2282, 4
  %v2284 = vadd.f32 %v2282, %v2283
  %v2285 = vrot.slane %v2284, 2
  %v2286 = vadd.f32 %v2284, %v2285
  %v2287 = vrot.slane %v2286, 1
  %v2288 = vadd.f32 %v2286, %v2287
  %v2289 = vsel %vm1976, %v2186, 0.0
  %v2290 = vsel %vm1976, %v2188, 0.0
  %v2291 = vadd.f32 %v2289, %v2290
  %v2292 = vrot.slane %v2291, 4
  %v2293 = vadd.f32 %v2291, %v2292
  %v2294 = vrot.slane %v2293, 2
  %v2295 = vadd.f32 %v2293, %v2294
  %v2296 = vrot.slane %v2295, 1
  %v2297 = vadd.f32 %v2295, %v2296
  %v2298 = vsel %vm1976, %v2190, 0.0
  %v2299 = vsel %vm1976, %v2192, 0.0
  %v2300 = vadd.f32 %v2298, %v2299
  %v2301 = vrot.slane %v2300, 4
  %v2302 = vadd.f32 %v2300, %v2301
  %v2303 = vrot.slane %v2302, 2
  %v2304 = vadd.f32 %v2302, %v2303
  %v2305 = vrot.slane %v2304, 1
  %v2306 = vadd.f32 %v2304, %v2305
  %v2307 = vsel %vm1976, %v2194, 0.0
  %v2308 = vsel %vm1976, %v2196, 0.0
  %v2309 = vadd.f32 %v2307, %v2308
  %v2310 = vrot.slane %v2309, 4
  %v2311 = vadd.f32 %v2309, %v2310
  %v2312 = vrot.slane %v2311, 2
  %v2313 = vadd.f32 %v2311, %v2312
  %v2314 = vrot.slane %v2313, 1
  %v2315 = vadd.f32 %v2313, %v2314
  %v2316 = vsel %vm1976, %v2198, 0.0
  %v2317 = vsel %vm1976, %v2200, 0.0
  %v2318 = vadd.f32 %v2316, %v2317
  %v2319 = vrot.slane %v2318, 4
  %v2320 = vadd.f32 %v2318, %v2319
  %v2321 = vrot.slane %v2320, 2
  %v2322 = vadd.f32 %v2320, %v2321
  %v2323 = vrot.slane %v2322, 1
  %v2324 = vadd.f32 %v2322, %v2323
  %v2325 = vsel %vm1976, %v2202, 0.0
  %v2326 = vsel %vm1976, %v2204, 0.0
  %v2327 = vadd.f32 %v2325, %v2326
  %v2328 = vrot.slane %v2327, 4
  %v2329 = vadd.f32 %v2327, %v2328
  %v2330 = vrot.slane %v2329, 2
  %v2331 = vadd.f32 %v2329, %v2330
  %v2332 = vrot.slane %v2331, 1
  %v2333 = vadd.f32 %v2331, %v2332
  %v2334 = vsel %vm1976, %v2206, 0.0
  %v2335 = vsel %vm1976, %v2208, 0.0
  %v2336 = vadd.f32 %v2334, %v2335
  %v2337 = vrot.slane %v2336, 4
  %v2338 = vadd.f32 %v2336, %v2337
  %v2339 = vrot.slane %v2338, 2
  %v2340 = vadd.f32 %v2338, %v2339
  %v2341 = vrot.slane %v2340, 1
  %v2342 = vadd.f32 %v2340, %v2341
  %v2343 = vsel %vm1976, %v2210, 0.0
  %v2344 = vsel %vm1976, %v2212, 0.0
  %v2345 = vadd.f32 %v2343, %v2344
  %v2346 = vrot.slane %v2345, 4
  %v2347 = vadd.f32 %v2345, %v2346
  %v2348 = vrot.slane %v2347, 2
  %v2349 = vadd.f32 %v2347, %v2348
  %v2350 = vrot.slane %v2349, 1
  %v2351 = vadd.f32 %v2349, %v2350
  %v2352 = vsel %vm1976, %v2214, 0.0
  %v2353 = vsel %vm1976, %v2216, 0.0
  %v2354 = vadd.f32 %v2352, %v2353
  %v2355 = vrot.slane %v2354, 4
  %v2356 = vadd.f32 %v2354, %v2355
  %v2357 = vrot.slane %v2356, 2
  %v2358 = vadd.f32 %v2356, %v2357
  %v2359 = vrot.slane %v2358, 1
  %v2360 = vadd.f32 %v2358, %v2359
  %v2361 = vrcp.pop %v2225
  %v2362 = vmul.f32 1.0, %v2361
  %v2363 = vrcp.pop %v2234
  %v2364 = vmul.f32 1.0, %v2363
  %v2365 = vrcp.pop %v2243
  %v2366 = vmul.f32 1.0, %v2365
  %v2367 = vrcp.pop %v2252
  %v2368 = vmul.f32 1.0, %v2367
  %v2369 = vrcp.pop %v2261
  %v2370 = vmul.f32 1.0, %v2369
  %v2371 = vrcp.pop %v2270
  %v2372 = vmul.f32 1.0, %v2371
  %v2373 = vrcp.pop %v2279
  %v2374 = vmul.f32 1.0, %v2373
  %v2375 = vrcp.pop %v2288
  %v2376 = vmul.f32 1.0, %v2375
  %v2377 = vrcp.pop %v2297
  %v2378 = vmul.f32 1.0, %v2377
  %v2379 = vrcp.pop %v2306
  %v2380 = vmul.f32 1.0, %v2379
  %v2381 = vrcp.pop %v2315
  %v2382 = vmul.f32 1.0, %v2381
  %v2383 = vrcp.pop %v2324
  %v2384 = vmul.f32 1.0, %v2383
  %v2385 = vrcp.pop %v2333
  %v2386 = vmul.f32 1.0, %v2385
  %v2387 = vrcp.pop %v2342
  %v2388 = vmul.f32 1.0, %v2387
  %v2389 = vrcp.pop %v2351
  %v2390 = vmul.f32 1.0, %v2389
  %v2391 = vrcp.pop %v2360
  %v2392 = vmul.f32 1.0, %v2391
  %v2393 = vmul.f32 %v2154, %v2362
  %v2394 = vmul.f32 %v2156, %v2362
  %v2395 = vmul.f32 %v2158, %v2364
  %v2396 = vmul.f32 %v2160, %v2364
  %v2397 = vmul.f32 %v2162, %v2366
  %v2398 = vmul.f32 %v2164, %v2366
  %v2399 = vmul.f32 %v2166, %v2368
  %v2400 = vmul.f32 %v2168, %v2368
  %v2401 = vmul.f32 %v2170, %v2370
  %v2402 = vmul.f32 %v2172, %v2370
  %v2403 = vmul.f32 %v2174, %v2372
  %v2404 = vmul.f32 %v2176, %v2372
  %v2405 = vmul.f32 %v2178, %v2374
  %v2406 = vmul.f32 %v2180, %v2374
  %v2407 = vmul.f32 %v2182, %v2376
  %v2408 = vmul.f32 %v2184, %v2376
  %v2409 = vmul.f32 %v2186, %v2378
  %v2410 = vmul.f32 %v2188, %v2378
  %v2411 = vmul.f32 %v2190, %v2380
  %v2412 = vmul.f32 %v2192, %v2380
  %v2413 = vmul.f32 %v2194, %v2382
  %v2414 = vmul.f32 %v2196, %v2382
  %v2415 = vmul.f32 %v2198, %v2384
  %v2416 = vmul.f32 %v2200, %v2384
  %v2417 = vmul.f32 %v2202, %v2386
  %v2418 = vmul.f32 %v2204, %v2386
  %v2419 = vmul.f32 %v2206, %v2388
  %v2420 = vmul.f32 %v2208, %v2388
  %v2421 = vmul.f32 %v2210, %v2390
  %v2422 = vmul.f32 %v2212, %v2390
  %v2423 = vmul.f32 %v2214, %v2392
  %v2424 = vmul.f32 %v2216, %v2392
  %v2441 = vrot.slane %v532, 7
  %v2442 = vsel %vm1751, %v2441, %v451
  %v2443 = vrot.slane %v613, 6
  %v2444 = vsel %vm1754, %v2443, %v2442
  %v2445 = vrot.slane %v694, 5
  %v2446 = vsel %vm1757, %v2445, %v2444
  %v2447 = vrot.slane %v775, 4
  %v2448 = vsel %vm1759, %v2447, %v2446
  %v2449 = vrot.slane %v856, 3
  %v2450 = vsel %vm1762, %v2449, %v2448
  %v2451 = vrot.slane %v937, 2
  %v2452 = vsel %vm1765, %v2451, %v2450
  %v2453 = vrot.slane %v1018, 1
  %v2454 = vsel %vm1768, %v2453, %v2452
  %v2455 = vrot.slane %v1180, 7
  %v2456 = vsel %vm1751, %v2455, %v1099
  %v2457 = vrot.slane %v1261, 6
  %v2458 = vsel %vm1754, %v2457, %v2456
  %v2459 = vrot.slane %v1342, 5
  %v2460 = vsel %vm1757, %v2459, %v2458
  %v2461 = vrot.slane %v1423, 4
  %v2462 = vsel %vm1759, %v2461, %v2460
  %v2463 = vrot.slane %v1504, 3
  %v2464 = vsel %vm1762, %v2463, %v2462
  %v2465 = vrot.slane %v1585, 2
  %v2466 = vsel %vm1765, %v2465, %v2464
  %v2467 = vrot.slane %v1666, 1
  %v2468 = vsel %vm1768, %v2467, %v2466
  %v2471 = vmul.f32 %v2393, %v2454
  %v2472 = vmul.f32 %v2394, %v2468
  %v2473 = vmul.f32 %v2395, %v2454
  %v2474 = vmul.f32 %v2396, %v2468
  %v2475 = vmul.f32 %v2397, %v2454
  %v2476 = vmul.f32 %v2398, %v2468
  %v2477 = vmul.f32 %v2399, %v2454
  %v2478 = vmul.f32 %v2400, %v2468
  %v2479 = vmul.f32 %v2401, %v2454
  %v2480 = vmul.f32 %v2402, %v2468
  %v2481 = vmul.f32 %v2403, %v2454
  %v2482 = vmul.f32 %v2404, %v2468
  %v2483 = vmul.f32 %v2405, %v2454
  %v2484 = vmul.f32 %v2406, %v2468
  %v2485 = vmul.f32 %v2407, %v2454
  %v2486 = vmul.f32 %v2408, %v2468
  %v2487 = vmul.f32 %v2409, %v2454
  %v2488 = vmul.f32 %v2410, %v2468
  %v2489 = vmul.f32 %v2411, %v2454
  %v2490 = vmul.f32 %v2412, %v2468
  %v2491 = vmul.f32 %v2413, %v2454
  %v2492 = vmul.f32 %v2414, %v2468
  %v2493 = vmul.f32 %v2415, %v2454
  %v2494 = vmul.f32 %v2416, %v2468
  %v2495 = vmul.f32 %v2417, %v2454
  %v2496 = vmul.f32 %v2418, %v2468
  %v2497 = vmul.f32 %v2419, %v2454
  %v2498 = vmul.f32 %v2420, %v2468
  %v2499 = vmul.f32 %v2421, %v2454
  %v2500 = vmul.f32 %v2422, %v2468
  %v2501 = vmul.f32 %v2423, %v2454
  %v2502 = vmul.f32 %v2424, %v2468
  %v2503 = vsel %vm1976, %v2471, 0.0
  %v2504 = vsel %vm1976, %v2472, 0.0
  %v2505 = vadd.f32 %v2503, %v2504
  %v2506 = vrot.slane %v2505, 4
  %v2507 = vadd.f32 %v2505, %v2506
  %v2508 = vrot.slane %v2507, 2
  %v2509 = vadd.f32 %v2507, %v2508
  %v2510 = vrot.slane %v2509, 1
  %v2511 = vadd.f32 %v2509, %v2510
  %v2512 = vsel %vm1976, %v2473, 0.0
  %v2513 = vsel %vm1976, %v2474, 0.0
  %v2514 = vadd.f32 %v2512, %v2513
  %v2515 = vrot.slane %v2514, 4
  %v2516 = vadd.f32 %v2514, %v2515
  %v2517 = vrot.slane %v2516, 2
  %v2518 = vadd.f32 %v2516, %v2517
  %v2519 = vrot.slane %v2518, 1
  %v2520 = vadd.f32 %v2518, %v2519
  %v2521 = vsel %vm1976, %v2475, 0.0
  %v2522 = vsel %vm1976, %v2476, 0.0
  %v2523 = vadd.f32 %v2521, %v2522
  %v2524 = vrot.slane %v2523, 4
  %v2525 = vadd.f32 %v2523, %v2524
  %v2526 = vrot.slane %v2525, 2
  %v2527 = vadd.f32 %v2525, %v2526
  %v2528 = vrot.slane %v2527, 1
  %v2529 = vadd.f32 %v2527, %v2528
  %v2530 = vsel %vm1976, %v2477, 0.0
  %v2531 = vsel %vm1976, %v2478, 0.0
  %v2532 = vadd.f32 %v2530, %v2531
  %v2533 = vrot.slane %v2532, 4
  %v2534 = vadd.f32 %v2532, %v2533
  %v2535 = vrot.slane %v2534, 2
  %v2536 = vadd.f32 %v2534, %v2535
  %v2537 = vrot.slane %v2536, 1
  %v2538 = vadd.f32 %v2536, %v2537
  %v2539 = vsel %vm1976, %v2479, 0.0
  %v2540 = vsel %vm1976, %v2480, 0.0
  %v2541 = vadd.f32 %v2539, %v2540
  %v2542 = vrot.slane %v2541, 4
  %v2543 = vadd.f32 %v2541, %v2542
  %v2544 = vrot.slane %v2543, 2
  %v2545 = vadd.f32 %v2543, %v2544
  %v2546 = vrot.slane %v2545, 1
  %v2547 = vadd.f32 %v2545, %v2546
  %v2548 = vsel %vm1976, %v2481, 0.0
  %v2549 = vsel %vm1976, %v2482, 0.0
  %v2550 = vadd.f32 %v2548, %v2549
  %v2551 = vrot.slane %v2550, 4
  %v2552 = vadd.f32 %v2550, %v2551
  %v2553 = vrot.slane %v2552, 2
  %v2554 = vadd.f32 %v2552, %v2553
  %v2555 = vrot.slane %v2554, 1
  %v2556 = vadd.f32 %v2554, %v2555
  %v2557 = vsel %vm1976, %v2483, 0.0
  %v2558 = vsel %vm1976, %v2484, 0.0
  %v2559 = vadd.f32 %v2557, %v2558
  %v2560 = vrot.slane %v2559, 4
  %v2561 = vadd.f32 %v2559, %v2560
  %v2562 = vrot.slane %v2561, 2
  %v2563 = vadd.f32 %v2561, %v2562
  %v2564 = vrot.slane %v2563, 1
  %v2565 = vadd.f32 %v2563, %v2564
  %v2566 = vsel %vm1976, %v2485, 0.0
  %v2567 = vsel %vm1976, %v2486, 0.0
  %v2568 = vadd.f32 %v2566, %v2567
  %v2569 = vrot.slane %v2568, 4
  %v2570 = vadd.f32 %v2568, %v2569
  %v2571 = vrot.slane %v2570, 2
  %v2572 = vadd.f32 %v2570, %v2571
  %v2573 = vrot.slane %v2572, 1
  %v2574 = vadd.f32 %v2572, %v2573
  %v2575 = vsel %vm1976, %v2487, 0.0
  %v2576 = vsel %vm1976, %v2488, 0.0
  %v2577 = vadd.f32 %v2575, %v2576
  %v2578 = vrot.slane %v2577, 4
  %v2579 = vadd.f32 %v2577, %v2578
  %v2580 = vrot.slane %v2579, 2
  %v2581 = vadd.f32 %v2579, %v2580
  %v2582 = vrot.slane %v2581, 1
  %v2583 = vadd.f32 %v2581, %v2582
  %v2584 = vsel %vm1976, %v2489, 0.0
  %v2585 = vsel %vm1976, %v2490, 0.0
  %v2586 = vadd.f32 %v2584, %v2585
  %v2587 = vrot.slane %v2586, 4
  %v2588 = vadd.f32 %v2586, %v2587
  %v2589 = vrot.slane %v2588, 2
  %v2590 = vadd.f32 %v2588, %v2589
  %v2591 = vrot.slane %v2590, 1
  %v2592 = vadd.f32 %v2590, %v2591
  %v2593 = vsel %vm1976, %v2491, 0.0
  %v2594 = vsel %vm1976, %v2492, 0.0
  %v2595 = vadd.f32 %v2593, %v2594
  %v2596 = vrot.slane %v2595, 4
  %v2597 = vadd.f32 %v2595, %v2596
  %v2598 = vrot.slane %v2597, 2
  %v2599 = vadd.f32 %v2597, %v2598
  %v2600 = vrot.slane %v2599, 1
  %v2601 = vadd.f32 %v2599, %v2600
  %v2602 = vsel %vm1976, %v2493, 0.0
  %v2603 = vsel %vm1976, %v2494, 0.0
  %v2604 = vadd.f32 %v2602, %v2603
  %v2605 = vrot.slane %v2604, 4
  %v2606 = vadd.f32 %v2604, %v2605
  %v2607 = vrot.slane %v2606, 2
  %v2608 = vadd.f32 %v2606, %v2607
  %v2609 = vrot.slane %v2608, 1
  %v2610 = vadd.f32 %v2608, %v2609
  %v2611 = vsel %vm1976, %v2495, 0.0
  %v2612 = vsel %vm1976, %v2496, 0.0
  %v2613 = vadd.f32 %v2611, %v2612
  %v2614 = vrot.slane %v2613, 4
  %v2615 = vadd.f32 %v2613, %v2614
  %v2616 = vrot.slane %v2615, 2
  %v2617 = vadd.f32 %v2615, %v2616
  %v2618 = vrot.slane %v2617, 1
  %v2619 = vadd.f32 %v2617, %v2618
  %v2620 = vsel %vm1976, %v2497, 0.0
  %v2621 = vsel %vm1976, %v2498, 0.0
  %v2622 = vadd.f32 %v2620, %v2621
  %v2623 = vrot.slane %v2622, 4
  %v2624 = vadd.f32 %v2622, %v2623
  %v2625 = vrot.slane %v2624, 2
  %v2626 = vadd.f32 %v2624, %v2625
  %v2627 = vrot.slane %v2626, 1
  %v2628 = vadd.f32 %v2626, %v2627
  %v2629 = vsel %vm1976, %v2499, 0.0
  %v2630 = vsel %vm1976, %v2500, 0.0
  %v2631 = vadd.f32 %v2629, %v2630
  %v2632 = vrot.slane %v2631, 4
  %v2633 = vadd.f32 %v2631, %v2632
  %v2634 = vrot.slane %v2633, 2
  %v2635 = vadd.f32 %v2633, %v2634
  %v2636 = vrot.slane %v2635, 1
  %v2637 = vadd.f32 %v2635, %v2636
  %v2638 = vsel %vm1976, %v2501, 0.0
  %v2639 = vsel %vm1976, %v2502, 0.0
  %v2640 = vadd.f32 %v2638, %v2639
  %v2641 = vrot.slane %v2640, 4
  %v2642 = vadd.f32 %v2640, %v2641
  %v2643 = vrot.slane %v2642, 2
  %v2644 = vadd.f32 %v2642, %v2643
  %v2645 = vrot.slane %v2644, 1
  %v2646 = vadd.f32 %v2644, %v2645
  %v2647 = vrot.slane %v451, 1
  %v2648 = vsel %vm1751, %v532, %v2647
  %v2649 = vrot.slane %v613, 7
  %v2650 = vsel %vm1754, %v2649, %v2648
  %v2651 = vrot.slane %v694, 6
  %v2652 = vsel %vm1757, %v2651, %v2650
  %v2653 = vrot.slane %v775, 5
  %v2654 = vsel %vm1759, %v2653, %v2652
  %v2655 = vrot.slane %v856, 4
  %v2656 = vsel %vm1762, %v2655, %v2654
  %v2657 = vrot.slane %v937, 3
  %v2658 = vsel %vm1765, %v2657, %v2656
  %v2659 = vrot.slane %v1018, 2
  %v2660 = vsel %vm1768, %v2659, %v2658
  %v2661 = vrot.slane %v1099, 1
  %v2662 = vsel %vm1751, %v1180, %v2661
  %v2663 = vrot.slane %v1261, 7
  %v2664 = vsel %vm1754, %v2663, %v2662
  %v2665 = vrot.slane %v1342, 6
  %v2666 = vsel %vm1757, %v2665, %v2664
  %v2667 = vrot.slane %v1423, 5
  %v2668 = vsel %vm1759, %v2667, %v2666
  %v2669 = vrot.slane %v1504, 4
  %v2670 = vsel %vm1762, %v2669, %v2668
  %v2671 = vrot.slane %v1585, 3
  %v2672 = vsel %vm1765, %v2671, %v2670
  %v2673 = vrot.slane %v1666, 2
  %v2674 = vsel %vm1768, %v2673, %v2672
  %v2677 = vmul.f32 %v2393, %v2660
  %v2678 = vmul.f32 %v2394, %v2674
  %v2679 = vmul.f32 %v2395, %v2660
  %v2680 = vmul.f32 %v2396, %v2674
  %v2681 = vmul.f32 %v2397, %v2660
  %v2682 = vmul.f32 %v2398, %v2674
  %v2683 = vmul.f32 %v2399, %v2660
  %v2684 = vmul.f32 %v2400, %v2674
  %v2685 = vmul.f32 %v2401, %v2660
  %v2686 = vmul.f32 %v2402, %v2674
  %v2687 = vmul.f32 %v2403, %v2660
  %v2688 = vmul.f32 %v2404, %v2674
  %v2689 = vmul.f32 %v2405, %v2660
  %v2690 = vmul.f32 %v2406, %v2674
  %v2691 = vmul.f32 %v2407, %v2660
  %v2692 = vmul.f32 %v2408, %v2674
  %v2693 = vmul.f32 %v2409, %v2660
  %v2694 = vmul.f32 %v2410, %v2674
  %v2695 = vmul.f32 %v2411, %v2660
  %v2696 = vmul.f32 %v2412, %v2674
  %v2697 = vmul.f32 %v2413, %v2660
  %v2698 = vmul.f32 %v2414, %v2674
  %v2699 = vmul.f32 %v2415, %v2660
  %v2700 = vmul.f32 %v2416, %v2674
  %v2701 = vmul.f32 %v2417, %v2660
  %v2702 = vmul.f32 %v2418, %v2674
  %v2703 = vmul.f32 %v2419, %v2660
  %v2704 = vmul.f32 %v2420, %v2674
  %v2705 = vmul.f32 %v2421, %v2660
  %v2706 = vmul.f32 %v2422, %v2674
  %v2707 = vmul.f32 %v2423, %v2660
  %v2708 = vmul.f32 %v2424, %v2674
  %v2709 = vsel %vm1976, %v2677, 0.0
  %v2710 = vsel %vm1976, %v2678, 0.0
  %v2711 = vadd.f32 %v2709, %v2710
  %v2712 = vrot.slane %v2711, 4
  %v2713 = vadd.f32 %v2711, %v2712
  %v2714 = vrot.slane %v2713, 2
  %v2715 = vadd.f32 %v2713, %v2714
  %v2716 = vrot.slane %v2715, 1
  %v2717 = vadd.f32 %v2715, %v2716
  %v2718 = vsel %vm1976, %v2679, 0.0
  %v2719 = vsel %vm1976, %v2680, 0.0
  %v2720 = vadd.f32 %v2718, %v2719
  %v2721 = vrot.slane %v2720, 4
  %v2722 = vadd.f32 %v2720, %v2721
  %v2723 = vrot.slane %v2722, 2
  %v2724 = vadd.f32 %v2722, %v2723
  %v2725 = vrot.slane %v2724, 1
  %v2726 = vadd.f32 %v2724, %v2725
  %v2727 = vsel %vm1976, %v2681, 0.0
  %v2728 = vsel %vm1976, %v2682, 0.0
  %v2729 = vadd.f32 %v2727, %v2728
  %v2730 = vrot.slane %v2729, 4
  %v2731 = vadd.f32 %v2729, %v2730
  %v2732 = vrot.slane %v2731, 2
  %v2733 = vadd.f32 %v2731, %v2732
  %v2734 = vrot.slane %v2733, 1
  %v2735 = vadd.f32 %v2733, %v2734
  %v2736 = vsel %vm1976, %v2683, 0.0
  %v2737 = vsel %vm1976, %v2684, 0.0
  %v2738 = vadd.f32 %v2736, %v2737
  %v2739 = vrot.slane %v2738, 4
  %v2740 = vadd.f32 %v2738, %v2739
  %v2741 = vrot.slane %v2740, 2
  %v2742 = vadd.f32 %v2740, %v2741
  %v2743 = vrot.slane %v2742, 1
  %v2744 = vadd.f32 %v2742, %v2743
  %v2745 = vsel %vm1976, %v2685, 0.0
  %v2746 = vsel %vm1976, %v2686, 0.0
  %v2747 = vadd.f32 %v2745, %v2746
  %v2748 = vrot.slane %v2747, 4
  %v2749 = vadd.f32 %v2747, %v2748
  %v2750 = vrot.slane %v2749, 2
  %v2751 = vadd.f32 %v2749, %v2750
  %v2752 = vrot.slane %v2751, 1
  %v2753 = vadd.f32 %v2751, %v2752
  %v2754 = vsel %vm1976, %v2687, 0.0
  %v2755 = vsel %vm1976, %v2688, 0.0
  %v2756 = vadd.f32 %v2754, %v2755
  %v2757 = vrot.slane %v2756, 4
  %v2758 = vadd.f32 %v2756, %v2757
  %v2759 = vrot.slane %v2758, 2
  %v2760 = vadd.f32 %v2758, %v2759
  %v2761 = vrot.slane %v2760, 1
  %v2762 = vadd.f32 %v2760, %v2761
  %v2763 = vsel %vm1976, %v2689, 0.0
  %v2764 = vsel %vm1976, %v2690, 0.0
  %v2765 = vadd.f32 %v2763, %v2764
  %v2766 = vrot.slane %v2765, 4
  %v2767 = vadd.f32 %v2765, %v2766
  %v2768 = vrot.slane %v2767, 2
  %v2769 = vadd.f32 %v2767, %v2768
  %v2770 = vrot.slane %v2769, 1
  %v2771 = vadd.f32 %v2769, %v2770
  %v2772 = vsel %vm1976, %v2691, 0.0
  %v2773 = vsel %vm1976, %v2692, 0.0
  %v2774 = vadd.f32 %v2772, %v2773
  %v2775 = vrot.slane %v2774, 4
  %v2776 = vadd.f32 %v2774, %v2775
  %v2777 = vrot.slane %v2776, 2
  %v2778 = vadd.f32 %v2776, %v2777
  %v2779 = vrot.slane %v2778, 1
  %v2780 = vadd.f32 %v2778, %v2779
  %v2781 = vsel %vm1976, %v2693, 0.0
  %v2782 = vsel %vm1976, %v2694, 0.0
  %v2783 = vadd.f32 %v2781, %v2782
  %v2784 = vrot.slane %v2783, 4
  %v2785 = vadd.f32 %v2783, %v2784
  %v2786 = vrot.slane %v2785, 2
  %v2787 = vadd.f32 %v2785, %v2786
  %v2788 = vrot.slane %v2787, 1
  %v2789 = vadd.f32 %v2787, %v2788
  %v2790 = vsel %vm1976, %v2695, 0.0
  %v2791 = vsel %vm1976, %v2696, 0.0
  %v2792 = vadd.f32 %v2790, %v2791
  %v2793 = vrot.slane %v2792, 4
  %v2794 = vadd.f32 %v2792, %v2793
  %v2795 = vrot.slane %v2794, 2
  %v2796 = vadd.f32 %v2794, %v2795
  %v2797 = vrot.slane %v2796, 1
  %v2798 = vadd.f32 %v2796, %v2797
  %v2799 = vsel %vm1976, %v2697, 0.0
  %v2800 = vsel %vm1976, %v2698, 0.0
  %v2801 = vadd.f32 %v2799, %v2800
  %v2802 = vrot.slane %v2801, 4
  %v2803 = vadd.f32 %v2801, %v2802
  %v2804 = vrot.slane %v2803, 2
  %v2805 = vadd.f32 %v2803, %v2804
  %v2806 = vrot.slane %v2805, 1
  %v2807 = vadd.f32 %v2805, %v2806
  %v2808 = vsel %vm1976, %v2699, 0.0
  %v2809 = vsel %vm1976, %v2700, 0.0
  %v2810 = vadd.f32 %v2808, %v2809
  %v2811 = vrot.slane %v2810, 4
  %v2812 = vadd.f32 %v2810, %v2811
  %v2813 = vrot.slane %v2812, 2
  %v2814 = vadd.f32 %v2812, %v2813
  %v2815 = vrot.slane %v2814, 1
  %v2816 = vadd.f32 %v2814, %v2815
  %v2817 = vsel %vm1976, %v2701, 0.0
  %v2818 = vsel %vm1976, %v2702, 0.0
  %v2819 = vadd.f32 %v2817, %v2818
  %v2820 = vrot.slane %v2819, 4
  %v2821 = vadd.f32 %v2819, %v2820
  %v2822 = vrot.slane %v2821, 2
  %v2823 = vadd.f32 %v2821, %v2822
  %v2824 = vrot.slane %v2823, 1
  %v2825 = vadd.f32 %v2823, %v2824
  %v2826 = vsel %vm1976, %v2703, 0.0
  %v2827 = vsel %vm1976, %v2704, 0.0
  %v2828 = vadd.f32 %v2826, %v2827
  %v2829 = vrot.slane %v2828, 4
  %v2830 = vadd.f32 %v2828, %v2829
  %v2831 = vrot.slane %v2830, 2
  %v2832 = vadd.f32 %v2830, %v2831
  %v2833 = vrot.slane %v2832, 1
  %v2834 = vadd.f32 %v2832, %v2833
  %v2835 = vsel %vm1976, %v2705, 0.0
  %v2836 = vsel %vm1976, %v2706, 0.0
  %v2837 = vadd.f32 %v2835, %v2836
  %v2838 = vrot.slane %v2837, 4
  %v2839 = vadd.f32 %v2837, %v2838
  %v2840 = vrot.slane %v2839, 2
  %v2841 = vadd.f32 %v2839, %v2840
  %v2842 = vrot.slane %v2841, 1
  %v2843 = vadd.f32 %v2841, %v2842
  %v2844 = vsel %vm1976, %v2707, 0.0
  %v2845 = vsel %vm1976, %v2708, 0.0
  %v2846 = vadd.f32 %v2844, %v2845
  %v2847 = vrot.slane %v2846, 4
  %v2848 = vadd.f32 %v2846, %v2847
  %v2849 = vrot.slane %v2848, 2
  %v2850 = vadd.f32 %v2848, %v2849
  %v2851 = vrot.slane %v2850, 1
  %v2852 = vadd.f32 %v2850, %v2851
  %v2853 = vlaneseq
  %v2854 = vshrl.u32 %v2853, 7
  %v2855 = vsub.s32 2, %v2854
  %v2856 = vrot.slane %v446, %v2855
  %v2857 = vlaneseq
  %v2858 = vshrl.u32 %v2857, 7
  %v2859 = vsub.s32 2, %v2858
  %v2860 = vrot.slane %v527, %v2859
  %v2861 = vlaneseq
  %v2862 = vshrl.u32 %v2861, 7
  %v2863 = vsub.s32 2, %v2862
  %v2864 = vrot.slane %v608, %v2863
  %v2865 = vlaneseq
  %v2866 = vshrl.u32 %v2865, 7
  %v2867 = vsub.s32 2, %v2866
  %v2868 = vrot.slane %v689, %v2867
  %v2869 = vlaneseq
  %v2870 = vshrl.u32 %v2869, 7
  %v2871 = vsub.s32 2, %v2870
  %v2872 = vrot.slane %v770, %v2871
  %v2873 = vlaneseq
  %v2874 = vshrl.u32 %v2873, 7
  %v2875 = vsub.s32 2, %v2874
  %v2876 = vrot.slane %v851, %v2875
  %v2877 = vlaneseq
  %v2878 = vshrl.u32 %v2877, 7
  %v2879 = vsub.s32 2, %v2878
  %v2880 = vrot.slane %v932, %v2879
  %v2881 = vlaneseq
  %v2882 = vshrl.u32 %v2881, 7
  %v2883 = vsub.s32 2, %v2882
  %v2884 = vrot.slane %v1013, %v2883
  %v2885 = vlaneseq
  %v2886 = vshrl.u32 %v2885, 7
  %v2887 = vsub.s32 2, %v2886
  %v2888 = vrot.slane %v1094, %v2887
  %v2889 = vlaneseq
  %v2890 = vshrl.u32 %v2889, 7
  %v2891 = vsub.s32 2, %v2890
  %v2892 = vrot.slane %v1175, %v2891
  %v2893 = vlaneseq
  %v2894 = vshrl.u32 %v2893, 7
  %v2895 = vsub.s32 2, %v2894
  %v2896 = vrot.slane %v1256, %v2895
  %v2897 = vlaneseq
  %v2898 = vshrl.u32 %v2897, 7
  %v2899 = vsub.s32 2, %v2898
  %v2900 = vrot.slane %v1337, %v2899
  %v2901 = vlaneseq
  %v2902 = vshrl.u32 %v2901, 7
  %v2903 = vsub.s32 2, %v2902
  %v2904 = vrot.slane %v1418, %v2903
  %v2905 = vlaneseq
  %v2906 = vshrl.u32 %v2905, 7
  %v2907 = vsub.s32 2, %v2906
  %v2908 = vrot.slane %v1499, %v2907
  %v2909 = vlaneseq
  %v2910 = vshrl.u32 %v2909, 7
  %v2911 = vsub.s32 2, %v2910
  %v2912 = vrot.slane %v1580, %v2911
  %v2913 = vlaneseq
  %v2914 = vshrl.u32 %v2913, 7
  %v2915 = vsub.s32 2, %v2914
  %v2916 = vrot.slane %v1661, %v2915
  %v2917 = vrot.slane %v446, 6
  %v2918 = vrot.slane %v527, 5
  %v2919 = vsel %vm1751, %v2918, %v2917
  %v2920 = vrot.slane %v608, 4
  %v2921 = vsel %vm1754, %v2920, %v2919
  %v2922 = vrot.slane %v689, 3
  %v2923 = vsel %vm1757, %v2922, %v2921
  %v2924 = vrot.slane %v770, 2
  %v2925 = vsel %vm1759, %v2924, %v2923
  %v2926 = vrot.slane %v851, 1
  %v2927 = vsel %vm1762, %v2926, %v2925
  %v2928 = vsel %vm1765, %v932, %v2927
  %v2929 = vrot.slane %v1013, 7
  %v2930 = vsel %vm1768, %v2929, %v2928
  %v2931 = vrot.slane %v1094, 6
  %v2932 = vrot.slane %v1175, 5
  %v2933 = vsel %vm1751, %v2932, %v2931
  %v2934 = vrot.slane %v1256, 4
  %v2935 = vsel %vm1754, %v2934, %v2933
  %v2936 = vrot.slane %v1337, 3
  %v2937 = vsel %vm1757, %v2936, %v2935
  %v2938 = vrot.slane %v1418, 2
  %v2939 = vsel %vm1759, %v2938, %v2937
  %v2940 = vrot.slane %v1499, 1
  %v2941 = vsel %vm1762, %v2940, %v2939
  %v2942 = vsel %vm1765, %v1580, %v2941
  %v2943 = vrot.slane %v1661, 7
  %v2944 = vsel %vm1768, %v2943, %v2942
  %v2947 = vmul.f32 %v2856, %v2930
  %v2948 = vmul.f32 %v2856, %v2944
  %v2949 = vmul.f32 %v2860, %v2930
  %v2950 = vmul.f32 %v2860, %v2944
  %v2951 = vmul.f32 %v2864, %v2930
  %v2952 = vmul.f32 %v2864, %v2944
  %v2953 = vmul.f32 %v2868, %v2930
  %v2954 = vmul.f32 %v2868, %v2944
  %v2955 = vmul.f32 %v2872, %v2930
  %v2956 = vmul.f32 %v2872, %v2944
  %v2957 = vmul.f32 %v2876, %v2930
  %v2958 = vmul.f32 %v2876, %v2944
  %v2959 = vmul.f32 %v2880, %v2930
  %v2960 = vmul.f32 %v2880, %v2944
  %v2961 = vmul.f32 %v2884, %v2930
  %v2962 = vmul.f32 %v2884, %v2944
  %v2963 = vmul.f32 %v2888, %v2930
  %v2964 = vmul.f32 %v2888, %v2944
  %v2965 = vmul.f32 %v2892, %v2930
  %v2966 = vmul.f32 %v2892, %v2944
  %v2967 = vmul.f32 %v2896, %v2930
  %v2968 = vmul.f32 %v2896, %v2944
  %v2969 = vmul.f32 %v2900, %v2930
  %v2970 = vmul.f32 %v2900, %v2944
  %v2971 = vmul.f32 %v2904, %v2930
  %v2972 = vmul.f32 %v2904, %v2944
  %v2973 = vmul.f32 %v2908, %v2930
  %v2974 = vmul.f32 %v2908, %v2944
  %v2975 = vmul.f32 %v2912, %v2930
  %v2976 = vmul.f32 %v2912, %v2944
  %v2977 = vmul.f32 %v2916, %v2930
  %v2978 = vmul.f32 %v2916, %v2944
  %v2979 = vlaneseq
  %v2980 = vshrl.u32 %v2979, 7
  %v2981 = vsub.s32 3, %v2980
  %v2982 = vrot.slane %v446, %v2981
  %v2983 = vlaneseq
  %v2984 = vshrl.u32 %v2983, 7
  %v2985 = vsub.s32 3, %v2984
  %v2986 = vrot.slane %v527, %v2985
  %v2987 = vlaneseq
  %v2988 = vshrl.u32 %v2987, 7
  %v2989 = vsub.s32 3, %v2988
  %v2990 = vrot.slane %v608, %v2989
  %v2991 = vlaneseq
  %v2992 = vshrl.u32 %v2991, 7
  %v2993 = vsub.s32 3, %v2992
  %v2994 = vrot.slane %v689, %v2993
  %v2995 = vlaneseq
  %v2996 = vshrl.u32 %v2995, 7
  %v2997 = vsub.s32 3, %v2996
  %v2998 = vrot.slane %v770, %v2997
  %v2999 = vlaneseq
  %v3000 = vshrl.u32 %v2999, 7
  %v3001 = vsub.s32 3, %v3000
  %v3002 = vrot.slane %v851, %v3001
  %v3003 = vlaneseq
  %v3004 = vshrl.u32 %v3003, 7
  %v3005 = vsub.s32 3, %v3004
  %v3006 = vrot.slane %v932, %v3005
  %v3007 = vlaneseq
  %v3008 = vshrl.u32 %v3007, 7
  %v3009 = vsub.s32 3, %v3008
  %v3010 = vrot.slane %v1013, %v3009
  %v3011 = vlaneseq
  %v3012 = vshrl.u32 %v3011, 7
  %v3013 = vsub.s32 3, %v3012
  %v3014 = vrot.slane %v1094, %v3013
  %v3015 = vlaneseq
  %v3016 = vshrl.u32 %v3015, 7
  %v3017 = vsub.s32 3, %v3016
  %v3018 = vrot.slane %v1175, %v3017
  %v3019 = vlaneseq
  %v3020 = vshrl.u32 %v3019, 7
  %v3021 = vsub.s32 3, %v3020
  %v3022 = vrot.slane %v1256, %v3021
  %v3023 = vlaneseq
  %v3024 = vshrl.u32 %v3023, 7
  %v3025 = vsub.s32 3, %v3024
  %v3026 = vrot.slane %v1337, %v3025
  %v3027 = vlaneseq
  %v3028 = vshrl.u32 %v3027, 7
  %v3029 = vsub.s32 3, %v3028
  %v3030 = vrot.slane %v1418, %v3029
  %v3031 = vlaneseq
  %v3032 = vshrl.u32 %v3031, 7
  %v3033 = vsub.s32 3, %v3032
  %v3034 = vrot.slane %v1499, %v3033
  %v3035 = vlaneseq
  %v3036 = vshrl.u32 %v3035, 7
  %v3037 = vsub.s32 3, %v3036
  %v3038 = vrot.slane %v1580, %v3037
  %v3039 = vlaneseq
  %v3040 = vshrl.u32 %v3039, 7
  %v3041 = vsub.s32 3, %v3040
  %v3042 = vrot.slane %v1661, %v3041
  %v3043 = vrot.slane %v446, 7
  %v3044 = vrot.slane %v527, 6
  %v3045 = vsel %vm1751, %v3044, %v3043
  %v3046 = vrot.slane %v608, 5
  %v3047 = vsel %vm1754, %v3046, %v3045
  %v3048 = vrot.slane %v689, 4
  %v3049 = vsel %vm1757, %v3048, %v3047
  %v3050 = vrot.slane %v770, 3
  %v3051 = vsel %vm1759, %v3050, %v3049
  %v3052 = vrot.slane %v851, 2
  %v3053 = vsel %vm1762, %v3052, %v3051
  %v3054 = vrot.slane %v932, 1
  %v3055 = vsel %vm1765, %v3054, %v3053
  %v3056 = vsel %vm1768, %v1013, %v3055
  %v3057 = vrot.slane %v1094, 7
  %v3058 = vrot.slane %v1175, 6
  %v3059 = vsel %vm1751, %v3058, %v3057
  %v3060 = vrot.slane %v1256, 5
  %v3061 = vsel %vm1754, %v3060, %v3059
  %v3062 = vrot.slane %v1337, 4
  %v3063 = vsel %vm1757, %v3062, %v3061
  %v3064 = vrot.slane %v1418, 3
  %v3065 = vsel %vm1759, %v3064, %v3063
  %v3066 = vrot.slane %v1499, 2
  %v3067 = vsel %vm1762, %v3066, %v3065
  %v3068 = vrot.slane %v1580, 1
  %v3069 = vsel %vm1765, %v3068, %v3067
  %v3070 = vsel %vm1768, %v1661, %v3069
  %v3073 = vmul.f32 %v2982, %v3056
  %v3074 = vmul.f32 %v2982, %v3070
  %v3075 = vmul.f32 %v2986, %v3056
  %v3076 = vmul.f32 %v2986, %v3070
  %v3077 = vmul.f32 %v2990, %v3056
  %v3078 = vmul.f32 %v2990, %v3070
  %v3079 = vmul.f32 %v2994, %v3056
  %v3080 = vmul.f32 %v2994, %v3070
  %v3081 = vmul.f32 %v2998, %v3056
  %v3082 = vmul.f32 %v2998, %v3070
  %v3083 = vmul.f32 %v3002, %v3056
  %v3084 = vmul.f32 %v3002, %v3070
  %v3085 = vmul.f32 %v3006, %v3056
  %v3086 = vmul.f32 %v3006, %v3070
  %v3087 = vmul.f32 %v3010, %v3056
  %v3088 = vmul.f32 %v3010, %v3070
  %v3089 = vmul.f32 %v3014, %v3056
  %v3090 = vmul.f32 %v3014, %v3070
  %v3091 = vmul.f32 %v3018, %v3056
  %v3092 = vmul.f32 %v3018, %v3070
  %v3093 = vmul.f32 %v3022, %v3056
  %v3094 = vmul.f32 %v3022, %v3070
  %v3095 = vmul.f32 %v3026, %v3056
  %v3096 = vmul.f32 %v3026, %v3070
  %v3097 = vmul.f32 %v3030, %v3056
  %v3098 = vmul.f32 %v3030, %v3070
  %v3099 = vmul.f32 %v3034, %v3056
  %v3100 = vmul.f32 %v3034, %v3070
  %v3101 = vmul.f32 %v3038, %v3056
  %v3102 = vmul.f32 %v3038, %v3070
  %v3103 = vmul.f32 %v3042, %v3056
  %v3104 = vmul.f32 %v3042, %v3070
  %v3105 = vadd.f32 %v2947, %v3073
  %v3106 = vadd.f32 %v2948, %v3074
  %v3107 = vadd.f32 %v2949, %v3075
  %v3108 = vadd.f32 %v2950, %v3076
  %v3109 = vadd.f32 %v2951, %v3077
  %v3110 = vadd.f32 %v2952, %v3078
  %v3111 = vadd.f32 %v2953, %v3079
  %v3112 = vadd.f32 %v2954, %v3080
  %v3113 = vadd.f32 %v2955, %v3081
  %v3114 = vadd.f32 %v2956, %v3082
  %v3115 = vadd.f32 %v2957, %v3083
  %v3116 = vadd.f32 %v2958, %v3084
  %v3117 = vadd.f32 %v2959, %v3085
  %v3118 = vadd.f32 %v2960, %v3086
  %v3119 = vadd.f32 %v2961, %v3087
  %v3120 = vadd.f32 %v2962, %v3088
  %v3121 = vadd.f32 %v2963, %v3089
  %v3122 = vadd.f32 %v2964, %v3090
  %v3123 = vadd.f32 %v2965, %v3091
  %v3124 = vadd.f32 %v2966, %v3092
  %v3125 = vadd.f32 %v2967, %v3093
  %v3126 = vadd.f32 %v2968, %v3094
  %v3127 = vadd.f32 %v2969, %v3095
  %v3128 = vadd.f32 %v2970, %v3096
  %v3129 = vadd.f32 %v2971, %v3097
  %v3130 = vadd.f32 %v2972, %v3098
  %v3131 = vadd.f32 %v2973, %v3099
  %v3132 = vadd.f32 %v2974, %v3100
  %v3133 = vadd.f32 %v2975, %v3101
  %v3134 = vadd.f32 %v2976, %v3102
  %v3135 = vadd.f32 %v2977, %v3103
  %v3136 = vadd.f32 %v2978, %v3104
  %v3137 = vsel %vm1976, %v3105, -inf
  %v3138 = vsel %vm1976, %v3106, -inf
  %v3139 = vmax.f32 %v3137, %v3138
  %v3140 = vrot.slane %v3139, 4
  %v3141 = vmax.f32 %v3139, %v3140
  %v3142 = vrot.slane %v3141, 2
  %v3143 = vmax.f32 %v3141, %v3142
  %v3144 = vrot.slane %v3143, 1
  %v3145 = vmax.f32 %v3143, %v3144
  %v3146 = vsel %vm1976, %v3107, -inf
  %v3147 = vsel %vm1976, %v3108, -inf
  %v3148 = vmax.f32 %v3146, %v3147
  %v3149 = vrot.slane %v3148, 4
  %v3150 = vmax.f32 %v3148, %v3149
  %v3151 = vrot.slane %v3150, 2
  %v3152 = vmax.f32 %v3150, %v3151
  %v3153 = vrot.slane %v3152, 1
  %v3154 = vmax.f32 %v3152, %v3153
  %v3155 = vsel %vm1976, %v3109, -inf
  %v3156 = vsel %vm1976, %v3110, -inf
  %v3157 = vmax.f32 %v3155, %v3156
  %v3158 = vrot.slane %v3157, 4
  %v3159 = vmax.f32 %v3157, %v3158
  %v3160 = vrot.slane %v3159, 2
  %v3161 = vmax.f32 %v3159, %v3160
  %v3162 = vrot.slane %v3161, 1
  %v3163 = vmax.f32 %v3161, %v3162
  %v3164 = vsel %vm1976, %v3111, -inf
  %v3165 = vsel %vm1976, %v3112, -inf
  %v3166 = vmax.f32 %v3164, %v3165
  %v3167 = vrot.slane %v3166, 4
  %v3168 = vmax.f32 %v3166, %v3167
  %v3169 = vrot.slane %v3168, 2
  %v3170 = vmax.f32 %v3168, %v3169
  %v3171 = vrot.slane %v3170, 1
  %v3172 = vmax.f32 %v3170, %v3171
  %v3173 = vsel %vm1976, %v3113, -inf
  %v3174 = vsel %vm1976, %v3114, -inf
  %v3175 = vmax.f32 %v3173, %v3174
  %v3176 = vrot.slane %v3175, 4
  %v3177 = vmax.f32 %v3175, %v3176
  %v3178 = vrot.slane %v3177, 2
  %v3179 = vmax.f32 %v3177, %v3178
  %v3180 = vrot.slane %v3179, 1
  %v3181 = vmax.f32 %v3179, %v3180
  %v3182 = vsel %vm1976, %v3115, -inf
  %v3183 = vsel %vm1976, %v3116, -inf
  %v3184 = vmax.f32 %v3182, %v3183
  %v3185 = vrot.slane %v3184, 4
  %v3186 = vmax.f32 %v3184, %v3185
  %v3187 = vrot.slane %v3186, 2
  %v3188 = vmax.f32 %v3186, %v3187
  %v3189 = vrot.slane %v3188, 1
  %v3190 = vmax.f32 %v3188, %v3189
  %v3191 = vsel %vm1976, %v3117, -inf
  %v3192 = vsel %vm1976, %v3118, -inf
  %v3193 = vmax.f32 %v3191, %v3192
  %v3194 = vrot.slane %v3193, 4
  %v3195 = vmax.f32 %v3193, %v3194
  %v3196 = vrot.slane %v3195, 2
  %v3197 = vmax.f32 %v3195, %v3196
  %v3198 = vrot.slane %v3197, 1
  %v3199 = vmax.f32 %v3197, %v3198
  %v3200 = vsel %vm1976, %v3119, -inf
  %v3201 = vsel %vm1976, %v3120, -inf
  %v3202 = vmax.f32 %v3200, %v3201
  %v3203 = vrot.slane %v3202, 4
  %v3204 = vmax.f32 %v3202, %v3203
  %v3205 = vrot.slane %v3204, 2
  %v3206 = vmax.f32 %v3204, %v3205
  %v3207 = vrot.slane %v3206, 1
  %v3208 = vmax.f32 %v3206, %v3207
  %v3209 = vsel %vm1976, %v3121, -inf
  %v3210 = vsel %vm1976, %v3122, -inf
  %v3211 = vmax.f32 %v3209, %v3210
  %v3212 = vrot.slane %v3211, 4
  %v3213 = vmax.f32 %v3211, %v3212
  %v3214 = vrot.slane %v3213, 2
  %v3215 = vmax.f32 %v3213, %v3214
  %v3216 = vrot.slane %v3215, 1
  %v3217 = vmax.f32 %v3215, %v3216
  %v3218 = vsel %vm1976, %v3123, -inf
  %v3219 = vsel %vm1976, %v3124, -inf
  %v3220 = vmax.f32 %v3218, %v3219
  %v3221 = vrot.slane %v3220, 4
  %v3222 = vmax.f32 %v3220, %v3221
  %v3223 = vrot.slane %v3222, 2
  %v3224 = vmax.f32 %v3222, %v3223
  %v3225 = vrot.slane %v3224, 1
  %v3226 = vmax.f32 %v3224, %v3225
  %v3227 = vsel %vm1976, %v3125, -inf
  %v3228 = vsel %vm1976, %v3126, -inf
  %v3229 = vmax.f32 %v3227, %v3228
  %v3230 = vrot.slane %v3229, 4
  %v3231 = vmax.f32 %v3229, %v3230
  %v3232 = vrot.slane %v3231, 2
  %v3233 = vmax.f32 %v3231, %v3232
  %v3234 = vrot.slane %v3233, 1
  %v3235 = vmax.f32 %v3233, %v3234
  %v3236 = vsel %vm1976, %v3127, -inf
  %v3237 = vsel %vm1976, %v3128, -inf
  %v3238 = vmax.f32 %v3236, %v3237
  %v3239 = vrot.slane %v3238, 4
  %v3240 = vmax.f32 %v3238, %v3239
  %v3241 = vrot.slane %v3240, 2
  %v3242 = vmax.f32 %v3240, %v3241
  %v3243 = vrot.slane %v3242, 1
  %v3244 = vmax.f32 %v3242, %v3243
  %v3245 = vsel %vm1976, %v3129, -inf
  %v3246 = vsel %vm1976, %v3130, -inf
  %v3247 = vmax.f32 %v3245, %v3246
  %v3248 = vrot.slane %v3247, 4
  %v3249 = vmax.f32 %v3247, %v3248
  %v3250 = vrot.slane %v3249, 2
  %v3251 = vmax.f32 %v3249, %v3250
  %v3252 = vrot.slane %v3251, 1
  %v3253 = vmax.f32 %v3251, %v3252
  %v3254 = vsel %vm1976, %v3131, -inf
  %v3255 = vsel %vm1976, %v3132, -inf
  %v3256 = vmax.f32 %v3254, %v3255
  %v3257 = vrot.slane %v3256, 4
  %v3258 = vmax.f32 %v3256, %v3257
  %v3259 = vrot.slane %v3258, 2
  %v3260 = vmax.f32 %v3258, %v3259
  %v3261 = vrot.slane %v3260, 1
  %v3262 = vmax.f32 %v3260, %v3261
  %v3263 = vsel %vm1976, %v3133, -inf
  %v3264 = vsel %vm1976, %v3134, -inf
  %v3265 = vmax.f32 %v3263, %v3264
  %v3266 = vrot.slane %v3265, 4
  %v3267 = vmax.f32 %v3265, %v3266
  %v3268 = vrot.slane %v3267, 2
  %v3269 = vmax.f32 %v3267, %v3268
  %v3270 = vrot.slane %v3269, 1
  %v3271 = vmax.f32 %v3269, %v3270
  %v3272 = vsel %vm1976, %v3135, -inf
  %v3273 = vsel %vm1976, %v3136, -inf
  %v3274 = vmax.f32 %v3272, %v3273
  %v3275 = vrot.slane %v3274, 4
  %v3276 = vmax.f32 %v3274, %v3275
  %v3277 = vrot.slane %v3276, 2
  %v3278 = vmax.f32 %v3276, %v3277
  %v3279 = vrot.slane %v3278, 1
  %v3280 = vmax.f32 %v3278, %v3279
  %v3281 = vsub.f32 %v3105, %v3145
  %v3282 = vsub.f32 %v3106, %v3145
  %v3283 = vsub.f32 %v3107, %v3154
  %v3284 = vsub.f32 %v3108, %v3154
  %v3285 = vsub.f32 %v3109, %v3163
  %v3286 = vsub.f32 %v3110, %v3163
  %v3287 = vsub.f32 %v3111, %v3172
  %v3288 = vsub.f32 %v3112, %v3172
  %v3289 = vsub.f32 %v3113, %v3181
  %v3290 = vsub.f32 %v3114, %v3181
  %v3291 = vsub.f32 %v3115, %v3190
  %v3292 = vsub.f32 %v3116, %v3190
  %v3293 = vsub.f32 %v3117, %v3199
  %v3294 = vsub.f32 %v3118, %v3199
  %v3295 = vsub.f32 %v3119, %v3208
  %v3296 = vsub.f32 %v3120, %v3208
  %v3297 = vsub.f32 %v3121, %v3217
  %v3298 = vsub.f32 %v3122, %v3217
  %v3299 = vsub.f32 %v3123, %v3226
  %v3300 = vsub.f32 %v3124, %v3226
  %v3301 = vsub.f32 %v3125, %v3235
  %v3302 = vsub.f32 %v3126, %v3235
  %v3303 = vsub.f32 %v3127, %v3244
  %v3304 = vsub.f32 %v3128, %v3244
  %v3305 = vsub.f32 %v3129, %v3253
  %v3306 = vsub.f32 %v3130, %v3253
  %v3307 = vsub.f32 %v3131, %v3262
  %v3308 = vsub.f32 %v3132, %v3262
  %v3309 = vsub.f32 %v3133, %v3271
  %v3310 = vsub.f32 %v3134, %v3271
  %v3311 = vsub.f32 %v3135, %v3280
  %v3312 = vsub.f32 %v3136, %v3280
  %v3313 = vmul.f32 %v3281, 1.442695
  %v3314 = vpow.pop %v3313
  %v3315 = vmul.f32 %v3282, 1.442695
  %v3316 = vpow.pop %v3315
  %v3317 = vmul.f32 %v3283, 1.442695
  %v3318 = vpow.pop %v3317
  %v3319 = vmul.f32 %v3284, 1.442695
  %v3320 = vpow.pop %v3319
  %v3321 = vmul.f32 %v3285, 1.442695
  %v3322 = vpow.pop %v3321
  %v3323 = vmul.f32 %v3286, 1.442695
  %v3324 = vpow.pop %v3323
  %v3325 = vmul.f32 %v3287, 1.442695
  %v3326 = vpow.pop %v3325
  %v3327 = vmul.f32 %v3288, 1.442695
  %v3328 = vpow.pop %v3327
  %v3329 = vmul.f32 %v3289, 1.442695
  %v3330 = vpow.pop %v3329
  %v3331 = vmul.f32 %v3290, 1.442695
  %v3332 = vpow.pop %v3331
  %v3333 = vmul.f32 %v3291, 1.442695
  %v3334 = vpow.pop %v3333
  %v3335 = vmul.f32 %v3292, 1.442695
  %v3336 = vpow.pop %v3335
  %v3337 = vmul.f32 %v3293, 1.442695
  %v3338 = vpow.pop %v3337
  %v3339 = vmul.f32 %v3294, 1.442695
  %v3340 = vpow.pop %v3339
  %v3341 = vmul.f32 %v3295, 1.442695
  %v3342 = vpow.pop %v3341
  %v3343 = vmul.f32 %v3296, 1.442695
  %v3344 = vpow.pop %v3343
  %v3345 = vmul.f32 %v3297, 1.442695
  %v3346 = vpow.pop %v3345
  %v3347 = vmul.f32 %v3298, 1.442695
  %v3348 = vpow.pop %v3347
  %v3349 = vmul.f32 %v3299, 1.442695
  %v3350 = vpow.pop %v3349
  %v3351 = vmul.f32 %v3300, 1.442695
  %v3352 = vpow.pop %v3351
  %v3353 = vmul.f32 %v3301, 1.442695
  %v3354 = vpow.pop %v3353
  %v3355 = vmul.f32 %v3302, 1.442695
  %v3356 = vpow.pop %v3355
  %v3357 = vmul.f32 %v3303, 1.442695
  %v3358 = vpow.pop %v3357
  %v3359 = vmul.f32 %v3304, 1.442695
  %v3360 = vpow.pop %v3359
  %v3361 = vmul.f32 %v3305, 1.442695
  %v3362 = vpow.pop %v3361
  %v3363 = vmul.f32 %v3306, 1.442695
  %v3364 = vpow.pop %v3363
  %v3365 = vmul.f32 %v3307, 1.442695
  %v3366 = vpow.pop %v3365
  %v3367 = vmul.f32 %v3308, 1.442695
  %v3368 = vpow.pop %v3367
  %v3369 = vmul.f32 %v3309, 1.442695
  %v3370 = vpow.pop %v3369
  %v3371 = vmul.f32 %v3310, 1.442695
  %v3372 = vpow.pop %v3371
  %v3373 = vmul.f32 %v3311, 1.442695
  %v3374 = vpow.pop %v3373
  %v3375 = vmul.f32 %v3312, 1.442695
  %v3376 = vpow.pop %v3375
  %v3377 = vsel %vm1976, %v3314, 0.0
  %v3378 = vsel %vm1976, %v3316, 0.0
  %v3379 = vadd.f32 %v3377, %v3378
  %v3380 = vrot.slane %v3379, 4
  %v3381 = vadd.f32 %v3379, %v3380
  %v3382 = vrot.slane %v3381, 2
  %v3383 = vadd.f32 %v3381, %v3382
  %v3384 = vrot.slane %v3383, 1
  %v3385 = vadd.f32 %v3383, %v3384
  %v3386 = vsel %vm1976, %v3318, 0.0
  %v3387 = vsel %vm1976, %v3320, 0.0
  %v3388 = vadd.f32 %v3386, %v3387
  %v3389 = vrot.slane %v3388, 4
  %v3390 = vadd.f32 %v3388, %v3389
  %v3391 = vrot.slane %v3390, 2
  %v3392 = vadd.f32 %v3390, %v3391
  %v3393 = vrot.slane %v3392, 1
  %v3394 = vadd.f32 %v3392, %v3393
  %v3395 = vsel %vm1976, %v3322, 0.0
  %v3396 = vsel %vm1976, %v3324, 0.0
  %v3397 = vadd.f32 %v3395, %v3396
  %v3398 = vrot.slane %v3397, 4
  %v3399 = vadd.f32 %v3397, %v3398
  %v3400 = vrot.slane %v3399, 2
  %v3401 = vadd.f32 %v3399, %v3400
  %v3402 = vrot.slane %v3401, 1
  %v3403 = vadd.f32 %v3401, %v3402
  %v3404 = vsel %vm1976, %v3326, 0.0
  %v3405 = vsel %vm1976, %v3328, 0.0
  %v3406 = vadd.f32 %v3404, %v3405
  %v3407 = vrot.slane %v3406, 4
  %v3408 = vadd.f32 %v3406, %v3407
  %v3409 = vrot.slane %v3408, 2
  %v3410 = vadd.f32 %v3408, %v3409
  %v3411 = vrot.slane %v3410, 1
  %v3412 = vadd.f32 %v3410, %v3411
  %v3413 = vsel %vm1976, %v3330, 0.0
  %v3414 = vsel %vm1976, %v3332, 0.0
  %v3415 = vadd.f32 %v3413, %v3414
  %v3416 = vrot.slane %v3415, 4
  %v3417 = vadd.f32 %v3415, %v3416
  %v3418 = vrot.slane %v3417, 2
  %v3419 = vadd.f32 %v3417, %v3418
  %v3420 = vrot.slane %v3419, 1
  %v3421 = vadd.f32 %v3419, %v3420
  %v3422 = vsel %vm1976, %v3334, 0.0
  %v3423 = vsel %vm1976, %v3336, 0.0
  %v3424 = vadd.f32 %v3422, %v3423
  %v3425 = vrot.slane %v3424, 4
  %v3426 = vadd.f32 %v3424, %v3425
  %v3427 = vrot.slane %v3426, 2
  %v3428 = vadd.f32 %v3426, %v3427
  %v3429 = vrot.slane %v3428, 1
  %v3430 = vadd.f32 %v3428, %v3429
  %v3431 = vsel %vm1976, %v3338, 0.0
  %v3432 = vsel %vm1976, %v3340, 0.0
  %v3433 = vadd.f32 %v3431, %v3432
  %v3434 = vrot.slane %v3433, 4
  %v3435 = vadd.f32 %v3433, %v3434
  %v3436 = vrot.slane %v3435, 2
  %v3437 = vadd.f32 %v3435, %v3436
  %v3438 = vrot.slane %v3437, 1
  %v3439 = vadd.f32 %v3437, %v3438
  %v3440 = vsel %vm1976, %v3342, 0.0
  %v3441 = vsel %vm1976, %v3344, 0.0
  %v3442 = vadd.f32 %v3440, %v3441
  %v3443 = vrot.slane %v3442, 4
  %v3444 = vadd.f32 %v3442, %v3443
  %v3445 = vrot.slane %v3444, 2
  %v3446 = vadd.f32 %v3444, %v3445
  %v3447 = vrot.slane %v3446, 1
  %v3448 = vadd.f32 %v3446, %v3447
  %v3449 = vsel %vm1976, %v3346, 0.0
  %v3450 = vsel %vm1976, %v3348, 0.0
  %v3451 = vadd.f32 %v3449, %v3450
  %v3452 = vrot.slane %v3451, 4
  %v3453 = vadd.f32 %v3451, %v3452
  %v3454 = vrot.slane %v3453, 2
  %v3455 = vadd.f32 %v3453, %v3454
  %v3456 = vrot.slane %v3455, 1
  %v3457 = vadd.f32 %v3455, %v3456
  %v3458 = vsel %vm1976, %v3350, 0.0
  %v3459 = vsel %vm1976, %v3352, 0.0
  %v3460 = vadd.f32 %v3458, %v3459
  %v3461 = vrot.slane %v3460, 4
  %v3462 = vadd.f32 %v3460, %v3461
  %v3463 = vrot.slane %v3462, 2
  %v3464 = vadd.f32 %v3462, %v3463
  %v3465 = vrot.slane %v3464, 1
  %v3466 = vadd.f32 %v3464, %v3465
  %v3467 = vsel %vm1976, %v3354, 0.0
  %v3468 = vsel %vm1976, %v3356, 0.0
  %v3469 = vadd.f32 %v3467, %v3468
  %v3470 = vrot.slane %v3469, 4
  %v3471 = vadd.f32 %v3469, %v3470
  %v3472 = vrot.slane %v3471, 2
  %v3473 = vadd.f32 %v3471, %v3472
  %v3474 = vrot.slane %v3473, 1
  %v3475 = vadd.f32 %v3473, %v3474
  %v3476 = vsel %vm1976, %v3358, 0.0
  %v3477 = vsel %vm1976, %v3360, 0.0
  %v3478 = vadd.f32 %v3476, %v3477
  %v3479 = vrot.slane %v3478, 4
  %v3480 = vadd.f32 %v3478, %v3479
  %v3481 = vrot.slane %v3480, 2
  %v3482 = vadd.f32 %v3480, %v3481
  %v3483 = vrot.slane %v3482, 1
  %v3484 = vadd.f32 %v3482, %v3483
  %v3485 = vsel %vm1976, %v3362, 0.0
  %v3486 = vsel %vm1976, %v3364, 0.0
  %v3487 = vadd.f32 %v3485, %v3486
  %v3488 = vrot.slane %v3487, 4
  %v3489 = vadd.f32 %v3487, %v3488
  %v3490 = vrot.slane %v3489, 2
  %v3491 = vadd.f32 %v3489, %v3490
  %v3492 = vrot.slane %v3491, 1
  %v3493 = vadd.f32 %v3491, %v3492
  %v3494 = vsel %vm1976, %v3366, 0.0
  %v3495 = vsel %vm1976, %v3368, 0.0
  %v3496 = vadd.f32 %v3494, %v3495
  %v3497 = vrot.slane %v3496, 4
  %v3498 = vadd.f32 %v3496, %v3497
  %v3499 = vrot.slane %v3498, 2
  %v3500 = vadd.f32 %v3498, %v3499
  %v3501 = vrot.slane %v3500, 1
  %v3502 = vadd.f32 %v3500, %v3501
  %v3503 = vsel %vm1976, %v3370, 0.0
  %v3504 = vsel %vm1976, %v3372, 0.0
  %v3505 = vadd.f32 %v3503, %v3504
  %v3506 = vrot.slane %v3505, 4
  %v3507 = vadd.f32 %v3505, %v3506
  %v3508 = vrot.slane %v3507, 2
  %v3509 = vadd.f32 %v3507, %v3508
  %v3510 = vrot.slane %v3509, 1
  %v3511 = vadd.f32 %v3509, %v3510
  %v3512 = vsel %vm1976, %v3374, 0.0
  %v3513 = vsel %vm1976, %v3376, 0.0
  %v3514 = vadd.f32 %v3512, %v3513
  %v3515 = vrot.slane %v3514, 4
  %v3516 = vadd.f32 %v3514, %v3515
  %v3517 = vrot.slane %v3516, 2
  %v3518 = vadd.f32 %v3516, %v3517
  %v3519 = vrot.slane %v3518, 1
  %v3520 = vadd.f32 %v3518, %v3519
  %v3521 = vrcp.pop %v3385
  %v3522 = vmul.f32 1.0, %v3521
  %v3523 = vrcp.pop %v3394
  %v3524 = vmul.f32 1.0, %v3523
  %v3525 = vrcp.pop %v3403
  %v3526 = vmul.f32 1.0, %v3525
  %v3527 = vrcp.pop %v3412
  %v3528 = vmul.f32 1.0, %v3527
  %v3529 = vrcp.pop %v3421
  %v3530 = vmul.f32 1.0, %v3529
  %v3531 = vrcp.pop %v3430
  %v3532 = vmul.f32 1.0, %v3531
  %v3533 = vrcp.pop %v3439
  %v3534 = vmul.f32 1.0, %v3533
  %v3535 = vrcp.pop %v3448
  %v3536 = vmul.f32 1.0, %v3535
  %v3537 = vrcp.pop %v3457
  %v3538 = vmul.f32 1.0, %v3537
  %v3539 = vrcp.pop %v3466
  %v3540 = vmul.f32 1.0, %v3539
  %v3541 = vrcp.pop %v3475
  %v3542 = vmul.f32 1.0, %v3541
  %v3543 = vrcp.pop %v3484
  %v3544 = vmul.f32 1.0, %v3543
  %v3545 = vrcp.pop %v3493
  %v3546 = vmul.f32 1.0, %v3545
  %v3547 = vrcp.pop %v3502
  %v3548 = vmul.f32 1.0, %v3547
  %v3549 = vrcp.pop %v3511
  %v3550 = vmul.f32 1.0, %v3549
  %v3551 = vrcp.pop %v3520
  %v3552 = vmul.f32 1.0, %v3551
  %v3553 = vmul.f32 %v3314, %v3522
  %v3554 = vmul.f32 %v3316, %v3522
  %v3555 = vmul.f32 %v3318, %v3524
  %v3556 = vmul.f32 %v3320, %v3524
  %v3557 = vmul.f32 %v3322, %v3526
  %v3558 = vmul.f32 %v3324, %v3526
  %v3559 = vmul.f32 %v3326, %v3528
  %v3560 = vmul.f32 %v3328, %v3528
  %v3561 = vmul.f32 %v3330, %v3530
  %v3562 = vmul.f32 %v3332, %v3530
  %v3563 = vmul.f32 %v3334, %v3532
  %v3564 = vmul.f32 %v3336, %v3532
  %v3565 = vmul.f32 %v3338, %v3534
  %v3566 = vmul.f32 %v3340, %v3534
  %v3567 = vmul.f32 %v3342, %v3536
  %v3568 = vmul.f32 %v3344, %v3536
  %v3569 = vmul.f32 %v3346, %v3538
  %v3570 = vmul.f32 %v3348, %v3538
  %v3571 = vmul.f32 %v3350, %v3540
  %v3572 = vmul.f32 %v3352, %v3540
  %v3573 = vmul.f32 %v3354, %v3542
  %v3574 = vmul.f32 %v3356, %v3542
  %v3575 = vmul.f32 %v3358, %v3544
  %v3576 = vmul.f32 %v3360, %v3544
  %v3577 = vmul.f32 %v3362, %v3546
  %v3578 = vmul.f32 %v3364, %v3546
  %v3579 = vmul.f32 %v3366, %v3548
  %v3580 = vmul.f32 %v3368, %v3548
  %v3581 = vmul.f32 %v3370, %v3550
  %v3582 = vmul.f32 %v3372, %v3550
  %v3583 = vmul.f32 %v3374, %v3552
  %v3584 = vmul.f32 %v3376, %v3552
  %v3585 = vrot.slane %v451, 2
  %v3586 = vrot.slane %v532, 1
  %v3587 = vsel %vm1751, %v3586, %v3585
  %v3588 = vsel %vm1754, %v613, %v3587
  %v3589 = vrot.slane %v694, 7
  %v3590 = vsel %vm1757, %v3589, %v3588
  %v3591 = vrot.slane %v775, 6
  %v3592 = vsel %vm1759, %v3591, %v3590
  %v3593 = vrot.slane %v856, 5
  %v3594 = vsel %vm1762, %v3593, %v3592
  %v3595 = vrot.slane %v937, 4
  %v3596 = vsel %vm1765, %v3595, %v3594
  %v3597 = vrot.slane %v1018, 3
  %v3598 = vsel %vm1768, %v3597, %v3596
  %v3599 = vrot.slane %v1099, 2
  %v3600 = vrot.slane %v1180, 1
  %v3601 = vsel %vm1751, %v3600, %v3599
  %v3602 = vsel %vm1754, %v1261, %v3601
  %v3603 = vrot.slane %v1342, 7
  %v3604 = vsel %vm1757, %v3603, %v3602
  %v3605 = vrot.slane %v1423, 6
  %v3606 = vsel %vm1759, %v3605, %v3604
  %v3607 = vrot.slane %v1504, 5
  %v3608 = vsel %vm1762, %v3607, %v3606
  %v3609 = vrot.slane %v1585, 4
  %v3610 = vsel %vm1765, %v3609, %v3608
  %v3611 = vrot.slane %v1666, 3
  %v3612 = vsel %vm1768, %v3611, %v3610
  %v3615 = vmul.f32 %v3553, %v3598
  %v3616 = vmul.f32 %v3554, %v3612
  %v3617 = vmul.f32 %v3555, %v3598
  %v3618 = vmul.f32 %v3556, %v3612
  %v3619 = vmul.f32 %v3557, %v3598
  %v3620 = vmul.f32 %v3558, %v3612
  %v3621 = vmul.f32 %v3559, %v3598
  %v3622 = vmul.f32 %v3560, %v3612
  %v3623 = vmul.f32 %v3561, %v3598
  %v3624 = vmul.f32 %v3562, %v3612
  %v3625 = vmul.f32 %v3563, %v3598
  %v3626 = vmul.f32 %v3564, %v3612
  %v3627 = vmul.f32 %v3565, %v3598
  %v3628 = vmul.f32 %v3566, %v3612
  %v3629 = vmul.f32 %v3567, %v3598
  %v3630 = vmul.f32 %v3568, %v3612
  %v3631 = vmul.f32 %v3569, %v3598
  %v3632 = vmul.f32 %v3570, %v3612
  %v3633 = vmul.f32 %v3571, %v3598
  %v3634 = vmul.f32 %v3572, %v3612
  %v3635 = vmul.f32 %v3573, %v3598
  %v3636 = vmul.f32 %v3574, %v3612
  %v3637 = vmul.f32 %v3575, %v3598
  %v3638 = vmul.f32 %v3576, %v3612
  %v3639 = vmul.f32 %v3577, %v3598
  %v3640 = vmul.f32 %v3578, %v3612
  %v3641 = vmul.f32 %v3579, %v3598
  %v3642 = vmul.f32 %v3580, %v3612
  %v3643 = vmul.f32 %v3581, %v3598
  %v3644 = vmul.f32 %v3582, %v3612
  %v3645 = vmul.f32 %v3583, %v3598
  %v3646 = vmul.f32 %v3584, %v3612
  %v3647 = vsel %vm1976, %v3615, 0.0
  %v3648 = vsel %vm1976, %v3616, 0.0
  %v3649 = vadd.f32 %v3647, %v3648
  %v3650 = vrot.slane %v3649, 4
  %v3651 = vadd.f32 %v3649, %v3650
  %v3652 = vrot.slane %v3651, 2
  %v3653 = vadd.f32 %v3651, %v3652
  %v3654 = vrot.slane %v3653, 1
  %v3655 = vadd.f32 %v3653, %v3654
  %v3656 = vsel %vm1976, %v3617, 0.0
  %v3657 = vsel %vm1976, %v3618, 0.0
  %v3658 = vadd.f32 %v3656, %v3657
  %v3659 = vrot.slane %v3658, 4
  %v3660 = vadd.f32 %v3658, %v3659
  %v3661 = vrot.slane %v3660, 2
  %v3662 = vadd.f32 %v3660, %v3661
  %v3663 = vrot.slane %v3662, 1
  %v3664 = vadd.f32 %v3662, %v3663
  %v3665 = vsel %vm1976, %v3619, 0.0
  %v3666 = vsel %vm1976, %v3620, 0.0
  %v3667 = vadd.f32 %v3665, %v3666
  %v3668 = vrot.slane %v3667, 4
  %v3669 = vadd.f32 %v3667, %v3668
  %v3670 = vrot.slane %v3669, 2
  %v3671 = vadd.f32 %v3669, %v3670
  %v3672 = vrot.slane %v3671, 1
  %v3673 = vadd.f32 %v3671, %v3672
  %v3674 = vsel %vm1976, %v3621, 0.0
  %v3675 = vsel %vm1976, %v3622, 0.0
  %v3676 = vadd.f32 %v3674, %v3675
  %v3677 = vrot.slane %v3676, 4
  %v3678 = vadd.f32 %v3676, %v3677
  %v3679 = vrot.slane %v3678, 2
  %v3680 = vadd.f32 %v3678, %v3679
  %v3681 = vrot.slane %v3680, 1
  %v3682 = vadd.f32 %v3680, %v3681
  %v3683 = vsel %vm1976, %v3623, 0.0
  %v3684 = vsel %vm1976, %v3624, 0.0
  %v3685 = vadd.f32 %v3683, %v3684
  %v3686 = vrot.slane %v3685, 4
  %v3687 = vadd.f32 %v3685, %v3686
  %v3688 = vrot.slane %v3687, 2
  %v3689 = vadd.f32 %v3687, %v3688
  %v3690 = vrot.slane %v3689, 1
  %v3691 = vadd.f32 %v3689, %v3690
  %v3692 = vsel %vm1976, %v3625, 0.0
  %v3693 = vsel %vm1976, %v3626, 0.0
  %v3694 = vadd.f32 %v3692, %v3693
  %v3695 = vrot.slane %v3694, 4
  %v3696 = vadd.f32 %v3694, %v3695
  %v3697 = vrot.slane %v3696, 2
  %v3698 = vadd.f32 %v3696, %v3697
  %v3699 = vrot.slane %v3698, 1
  %v3700 = vadd.f32 %v3698, %v3699
  %v3701 = vsel %vm1976, %v3627, 0.0
  %v3702 = vsel %vm1976, %v3628, 0.0
  %v3703 = vadd.f32 %v3701, %v3702
  %v3704 = vrot.slane %v3703, 4
  %v3705 = vadd.f32 %v3703, %v3704
  %v3706 = vrot.slane %v3705, 2
  %v3707 = vadd.f32 %v3705, %v3706
  %v3708 = vrot.slane %v3707, 1
  %v3709 = vadd.f32 %v3707, %v3708
  %v3710 = vsel %vm1976, %v3629, 0.0
  %v3711 = vsel %vm1976, %v3630, 0.0
  %v3712 = vadd.f32 %v3710, %v3711
  %v3713 = vrot.slane %v3712, 4
  %v3714 = vadd.f32 %v3712, %v3713
  %v3715 = vrot.slane %v3714, 2
  %v3716 = vadd.f32 %v3714, %v3715
  %v3717 = vrot.slane %v3716, 1
  %v3718 = vadd.f32 %v3716, %v3717
  %v3719 = vsel %vm1976, %v3631, 0.0
  %v3720 = vsel %vm1976, %v3632, 0.0
  %v3721 = vadd.f32 %v3719, %v3720
  %v3722 = vrot.slane %v3721, 4
  %v3723 = vadd.f32 %v3721, %v3722
  %v3724 = vrot.slane %v3723, 2
  %v3725 = vadd.f32 %v3723, %v3724
  %v3726 = vrot.slane %v3725, 1
  %v3727 = vadd.f32 %v3725, %v3726
  %v3728 = vsel %vm1976, %v3633, 0.0
  %v3729 = vsel %vm1976, %v3634, 0.0
  %v3730 = vadd.f32 %v3728, %v3729
  %v3731 = vrot.slane %v3730, 4
  %v3732 = vadd.f32 %v3730, %v3731
  %v3733 = vrot.slane %v3732, 2
  %v3734 = vadd.f32 %v3732, %v3733
  %v3735 = vrot.slane %v3734, 1
  %v3736 = vadd.f32 %v3734, %v3735
  %v3737 = vsel %vm1976, %v3635, 0.0
  %v3738 = vsel %vm1976, %v3636, 0.0
  %v3739 = vadd.f32 %v3737, %v3738
  %v3740 = vrot.slane %v3739, 4
  %v3741 = vadd.f32 %v3739, %v3740
  %v3742 = vrot.slane %v3741, 2
  %v3743 = vadd.f32 %v3741, %v3742
  %v3744 = vrot.slane %v3743, 1
  %v3745 = vadd.f32 %v3743, %v3744
  %v3746 = vsel %vm1976, %v3637, 0.0
  %v3747 = vsel %vm1976, %v3638, 0.0
  %v3748 = vadd.f32 %v3746, %v3747
  %v3749 = vrot.slane %v3748, 4
  %v3750 = vadd.f32 %v3748, %v3749
  %v3751 = vrot.slane %v3750, 2
  %v3752 = vadd.f32 %v3750, %v3751
  %v3753 = vrot.slane %v3752, 1
  %v3754 = vadd.f32 %v3752, %v3753
  %v3755 = vsel %vm1976, %v3639, 0.0
  %v3756 = vsel %vm1976, %v3640, 0.0
  %v3757 = vadd.f32 %v3755, %v3756
  %v3758 = vrot.slane %v3757, 4
  %v3759 = vadd.f32 %v3757, %v3758
  %v3760 = vrot.slane %v3759, 2
  %v3761 = vadd.f32 %v3759, %v3760
  %v3762 = vrot.slane %v3761, 1
  %v3763 = vadd.f32 %v3761, %v3762
  %v3764 = vsel %vm1976, %v3641, 0.0
  %v3765 = vsel %vm1976, %v3642, 0.0
  %v3766 = vadd.f32 %v3764, %v3765
  %v3767 = vrot.slane %v3766, 4
  %v3768 = vadd.f32 %v3766, %v3767
  %v3769 = vrot.slane %v3768, 2
  %v3770 = vadd.f32 %v3768, %v3769
  %v3771 = vrot.slane %v3770, 1
  %v3772 = vadd.f32 %v3770, %v3771
  %v3773 = vsel %vm1976, %v3643, 0.0
  %v3774 = vsel %vm1976, %v3644, 0.0
  %v3775 = vadd.f32 %v3773, %v3774
  %v3776 = vrot.slane %v3775, 4
  %v3777 = vadd.f32 %v3775, %v3776
  %v3778 = vrot.slane %v3777, 2
  %v3779 = vadd.f32 %v3777, %v3778
  %v3780 = vrot.slane %v3779, 1
  %v3781 = vadd.f32 %v3779, %v3780
  %v3782 = vsel %vm1976, %v3645, 0.0
  %v3783 = vsel %vm1976, %v3646, 0.0
  %v3784 = vadd.f32 %v3782, %v3783
  %v3785 = vrot.slane %v3784, 4
  %v3786 = vadd.f32 %v3784, %v3785
  %v3787 = vrot.slane %v3786, 2
  %v3788 = vadd.f32 %v3786, %v3787
  %v3789 = vrot.slane %v3788, 1
  %v3790 = vadd.f32 %v3788, %v3789
  %v3791 = vrot.slane %v451, 3
  %v3792 = vrot.slane %v532, 2
  %v3793 = vsel %vm1751, %v3792, %v3791
  %v3794 = vrot.slane %v613, 1
  %v3795 = vsel %vm1754, %v3794, %v3793
  %v3796 = vsel %vm1757, %v694, %v3795
  %v3797 = vrot.slane %v775, 7
  %v3798 = vsel %vm1759, %v3797, %v3796
  %v3799 = vrot.slane %v856, 6
  %v3800 = vsel %vm1762, %v3799, %v3798
  %v3801 = vrot.slane %v937, 5
  %v3802 = vsel %vm1765, %v3801, %v3800
  %v3803 = vrot.slane %v1018, 4
  %v3804 = vsel %vm1768, %v3803, %v3802
  %v3805 = vrot.slane %v1099, 3
  %v3806 = vrot.slane %v1180, 2
  %v3807 = vsel %vm1751, %v3806, %v3805
  %v3808 = vrot.slane %v1261, 1
  %v3809 = vsel %vm1754, %v3808, %v3807
  %v3810 = vsel %vm1757, %v1342, %v3809
  %v3811 = vrot.slane %v1423, 7
  %v3812 = vsel %vm1759, %v3811, %v3810
  %v3813 = vrot.slane %v1504, 6
  %v3814 = vsel %vm1762, %v3813, %v3812
  %v3815 = vrot.slane %v1585, 5
  %v3816 = vsel %vm1765, %v3815, %v3814
  %v3817 = vrot.slane %v1666, 4
  %v3818 = vsel %vm1768, %v3817, %v3816
  %v3821 = vmul.f32 %v3553, %v3804
  %v3822 = vmul.f32 %v3554, %v3818
  %v3823 = vmul.f32 %v3555, %v3804
  %v3824 = vmul.f32 %v3556, %v3818
  %v3825 = vmul.f32 %v3557, %v3804
  %v3826 = vmul.f32 %v3558, %v3818
  %v3827 = vmul.f32 %v3559, %v3804
  %v3828 = vmul.f32 %v3560, %v3818
  %v3829 = vmul.f32 %v3561, %v3804
  %v3830 = vmul.f32 %v3562, %v3818
  %v3831 = vmul.f32 %v3563, %v3804
  %v3832 = vmul.f32 %v3564, %v3818
  %v3833 = vmul.f32 %v3565, %v3804
  %v3834 = vmul.f32 %v3566, %v3818
  %v3835 = vmul.f32 %v3567, %v3804
  %v3836 = vmul.f32 %v3568, %v3818
  %v3837 = vmul.f32 %v3569, %v3804
  %v3838 = vmul.f32 %v3570, %v3818
  %v3839 = vmul.f32 %v3571, %v3804
  %v3840 = vmul.f32 %v3572, %v3818
  %v3841 = vmul.f32 %v3573, %v3804
  %v3842 = vmul.f32 %v3574, %v3818
  %v3843 = vmul.f32 %v3575, %v3804
  %v3844 = vmul.f32 %v3576, %v3818
  %v3845 = vmul.f32 %v3577, %v3804
  %v3846 = vmul.f32 %v3578, %v3818
  %v3847 = vmul.f32 %v3579, %v3804
  %v3848 = vmul.f32 %v3580, %v3818
  %v3849 = vmul.f32 %v3581, %v3804
  %v3850 = vmul.f32 %v3582, %v3818
  %v3851 = vmul.f32 %v3583, %v3804
  %v3852 = vmul.f32 %v3584, %v3818
  %v3853 = vsel %vm1976, %v3821, 0.0
  %v3854 = vsel %vm1976, %v3822, 0.0
  %v3855 = vadd.f32 %v3853, %v3854
  %v3856 = vrot.slane %v3855, 4
  %v3857 = vadd.f32 %v3855, %v3856
  %v3858 = vrot.slane %v3857, 2
  %v3859 = vadd.f32 %v3857, %v3858
  %v3860 = vrot.slane %v3859, 1
  %v3861 = vadd.f32 %v3859, %v3860
  %v3862 = vsel %vm1976, %v3823, 0.0
  %v3863 = vsel %vm1976, %v3824, 0.0
  %v3864 = vadd.f32 %v3862, %v3863
  %v3865 = vrot.slane %v3864, 4
  %v3866 = vadd.f32 %v3864, %v3865
  %v3867 = vrot.slane %v3866, 2
  %v3868 = vadd.f32 %v3866, %v3867
  %v3869 = vrot.slane %v3868, 1
  %v3870 = vadd.f32 %v3868, %v3869
  %v3871 = vsel %vm1976, %v3825, 0.0
  %v3872 = vsel %vm1976, %v3826, 0.0
  %v3873 = vadd.f32 %v3871, %v3872
  %v3874 = vrot.slane %v3873, 4
  %v3875 = vadd.f32 %v3873, %v3874
  %v3876 = vrot.slane %v3875, 2
  %v3877 = vadd.f32 %v3875, %v3876
  %v3878 = vrot.slane %v3877, 1
  %v3879 = vadd.f32 %v3877, %v3878
  %v3880 = vsel %vm1976, %v3827, 0.0
  %v3881 = vsel %vm1976, %v3828, 0.0
  %v3882 = vadd.f32 %v3880, %v3881
  %v3883 = vrot.slane %v3882, 4
  %v3884 = vadd.f32 %v3882, %v3883
  %v3885 = vrot.slane %v3884, 2
  %v3886 = vadd.f32 %v3884, %v3885
  %v3887 = vrot.slane %v3886, 1
  %v3888 = vadd.f32 %v3886, %v3887
  %v3889 = vsel %vm1976, %v3829, 0.0
  %v3890 = vsel %vm1976, %v3830, 0.0
  %v3891 = vadd.f32 %v3889, %v3890
  %v3892 = vrot.slane %v3891, 4
  %v3893 = vadd.f32 %v3891, %v3892
  %v3894 = vrot.slane %v3893, 2
  %v3895 = vadd.f32 %v3893, %v3894
  %v3896 = vrot.slane %v3895, 1
  %v3897 = vadd.f32 %v3895, %v3896
  %v3898 = vsel %vm1976, %v3831, 0.0
  %v3899 = vsel %vm1976, %v3832, 0.0
  %v3900 = vadd.f32 %v3898, %v3899
  %v3901 = vrot.slane %v3900, 4
  %v3902 = vadd.f32 %v3900, %v3901
  %v3903 = vrot.slane %v3902, 2
  %v3904 = vadd.f32 %v3902, %v3903
  %v3905 = vrot.slane %v3904, 1
  %v3906 = vadd.f32 %v3904, %v3905
  %v3907 = vsel %vm1976, %v3833, 0.0
  %v3908 = vsel %vm1976, %v3834, 0.0
  %v3909 = vadd.f32 %v3907, %v3908
  %v3910 = vrot.slane %v3909, 4
  %v3911 = vadd.f32 %v3909, %v3910
  %v3912 = vrot.slane %v3911, 2
  %v3913 = vadd.f32 %v3911, %v3912
  %v3914 = vrot.slane %v3913, 1
  %v3915 = vadd.f32 %v3913, %v3914
  %v3916 = vsel %vm1976, %v3835, 0.0
  %v3917 = vsel %vm1976, %v3836, 0.0
  %v3918 = vadd.f32 %v3916, %v3917
  %v3919 = vrot.slane %v3918, 4
  %v3920 = vadd.f32 %v3918, %v3919
  %v3921 = vrot.slane %v3920, 2
  %v3922 = vadd.f32 %v3920, %v3921
  %v3923 = vrot.slane %v3922, 1
  %v3924 = vadd.f32 %v3922, %v3923
  %v3925 = vsel %vm1976, %v3837, 0.0
  %v3926 = vsel %vm1976, %v3838, 0.0
  %v3927 = vadd.f32 %v3925, %v3926
  %v3928 = vrot.slane %v3927, 4
  %v3929 = vadd.f32 %v3927, %v3928
  %v3930 = vrot.slane %v3929, 2
  %v3931 = vadd.f32 %v3929, %v3930
  %v3932 = vrot.slane %v3931, 1
  %v3933 = vadd.f32 %v3931, %v3932
  %v3934 = vsel %vm1976, %v3839, 0.0
  %v3935 = vsel %vm1976, %v3840, 0.0
  %v3936 = vadd.f32 %v3934, %v3935
  %v3937 = vrot.slane %v3936, 4
  %v3938 = vadd.f32 %v3936, %v3937
  %v3939 = vrot.slane %v3938, 2
  %v3940 = vadd.f32 %v3938, %v3939
  %v3941 = vrot.slane %v3940, 1
  %v3942 = vadd.f32 %v3940, %v3941
  %v3943 = vsel %vm1976, %v3841, 0.0
  %v3944 = vsel %vm1976, %v3842, 0.0
  %v3945 = vadd.f32 %v3943, %v3944
  %v3946 = vrot.slane %v3945, 4
  %v3947 = vadd.f32 %v3945, %v3946
  %v3948 = vrot.slane %v3947, 2
  %v3949 = vadd.f32 %v3947, %v3948
  %v3950 = vrot.slane %v3949, 1
  %v3951 = vadd.f32 %v3949, %v3950
  %v3952 = vsel %vm1976, %v3843, 0.0
  %v3953 = vsel %vm1976, %v3844, 0.0
  %v3954 = vadd.f32 %v3952, %v3953
  %v3955 = vrot.slane %v3954, 4
  %v3956 = vadd.f32 %v3954, %v3955
  %v3957 = vrot.slane %v3956, 2
  %v3958 = vadd.f32 %v3956, %v3957
  %v3959 = vrot.slane %v3958, 1
  %v3960 = vadd.f32 %v3958, %v3959
  %v3961 = vsel %vm1976, %v3845, 0.0
  %v3962 = vsel %vm1976, %v3846, 0.0
  %v3963 = vadd.f32 %v3961, %v3962
  %v3964 = vrot.slane %v3963, 4
  %v3965 = vadd.f32 %v3963, %v3964
  %v3966 = vrot.slane %v3965, 2
  %v3967 = vadd.f32 %v3965, %v3966
  %v3968 = vrot.slane %v3967, 1
  %v3969 = vadd.f32 %v3967, %v3968
  %v3970 = vsel %vm1976, %v3847, 0.0
  %v3971 = vsel %vm1976, %v3848, 0.0
  %v3972 = vadd.f32 %v3970, %v3971
  %v3973 = vrot.slane %v3972, 4
  %v3974 = vadd.f32 %v3972, %v3973
  %v3975 = vrot.slane %v3974, 2
  %v3976 = vadd.f32 %v3974, %v3975
  %v3977 = vrot.slane %v3976, 1
  %v3978 = vadd.f32 %v3976, %v3977
  %v3979 = vsel %vm1976, %v3849, 0.0
  %v3980 = vsel %vm1976, %v3850, 0.0
  %v3981 = vadd.f32 %v3979, %v3980
  %v3982 = vrot.slane %v3981, 4
  %v3983 = vadd.f32 %v3981, %v3982
  %v3984 = vrot.slane %v3983, 2
  %v3985 = vadd.f32 %v3983, %v3984
  %v3986 = vrot.slane %v3985, 1
  %v3987 = vadd.f32 %v3985, %v3986
  %v3988 = vsel %vm1976, %v3851, 0.0
  %v3989 = vsel %vm1976, %v3852, 0.0
  %v3990 = vadd.f32 %v3988, %v3989
  %v3991 = vrot.slane %v3990, 4
  %v3992 = vadd.f32 %v3990, %v3991
  %v3993 = vrot.slane %v3992, 2
  %v3994 = vadd.f32 %v3992, %v3993
  %v3995 = vrot.slane %v3994, 1
  %v3996 = vadd.f32 %v3994, %v3995
  %vm3997 = vcmask 1040384
  %v3998 = vsel %vm3997, %v2511, %v2717
  %v3999 = vsel %vm3997, %v2520, %v2726
  %v4000 = vsel %vm3997, %v2529, %v2735
  %v4001 = vsel %vm3997, %v2538, %v2744
  %v4002 = vsel %vm3997, %v2547, %v2753
  %v4003 = vsel %vm3997, %v2556, %v2762
  %v4004 = vsel %vm3997, %v2565, %v2771
  %v4005 = vsel %vm3997, %v2574, %v2780
  %v4006 = vsel %vm3997, %v2583, %v2789
  %v4007 = vsel %vm3997, %v2592, %v2798
  %v4008 = vsel %vm3997, %v2601, %v2807
  %v4009 = vsel %vm3997, %v2610, %v2816
  %v4010 = vsel %vm3997, %v2619, %v2825
  %v4011 = vsel %vm3997, %v2628, %v2834
  %v4012 = vsel %vm3997, %v2637, %v2843
  %v4013 = vsel %vm3997, %v2646, %v2852
  %vm4014 = vcmask 1041408
  %v4015 = vsel %vm4014, %v3998, %v3655
  %v4016 = vsel %vm4014, %v3999, %v3664
  %v4017 = vsel %vm4014, %v4000, %v3673
  %v4018 = vsel %vm4014, %v4001, %v3682
  %v4019 = vsel %vm4014, %v4002, %v3691
  %v4020 = vsel %vm4014, %v4003, %v3700
  %v4021 = vsel %vm4014, %v4004, %v3709
  %v4022 = vsel %vm4014, %v4005, %v3718
  %v4023 = vsel %vm4014, %v4006, %v3727
  %v4024 = vsel %vm4014, %v4007, %v3736
  %v4025 = vsel %vm4014, %v4008, %v3745
  %v4026 = vsel %vm4014, %v4009, %v3754
  %v4027 = vsel %vm4014, %v4010, %v3763
  %v4028 = vsel %vm4014, %v4011, %v3772
  %v4029 = vsel %vm4014, %v4012, %v3781
  %v4030 = vsel %vm4014, %v4013, %v3790
  %vm4031 = vcmask 1042432
  %v4032 = vsel %vm4031, %v4015, %v3861
  %v4033 = vsel %vm4031, %v4016, %v3870
  %v4034 = vsel %vm4031, %v4017, %v3879
  %v4035 = vsel %vm4031, %v4018, %v3888
  %v4036 = vsel %vm4031, %v4019, %v3897
  %v4037 = vsel %vm4031, %v4020, %v3906
  %v4038 = vsel %vm4031, %v4021, %v3915
  %v4039 = vsel %vm4031, %v4022, %v3924
  %v4040 = vsel %vm4031, %v4023, %v3933
  %v4041 = vsel %vm4031, %v4024, %v3942
  %v4042 = vsel %vm4031, %v4025, %v3951
  %v4043 = vsel %vm4031, %v4026, %v3960
  %v4044 = vsel %vm4031, %v4027, %v3969
  %v4045 = vsel %vm4031, %v4028, %v3978
  %v4046 = vsel %vm4031, %v4029, %v3987
  %v4047 = vsel %vm4031, %v4030, %v3996
  %v4048 = vld [vmem:[%s3] sm:$0xff]
  %v4049 = vld [vmem:[%s3 + $0x8] sm:$0xff]
  %v4050 = vld [vmem:[%s3 + $0x10] sm:$0xff]
  %v4051 = vld [vmem:[%s3 + $0x18] sm:$0xff]
  %v4052 = vld [vmem:[%s3 + $0x20] sm:$0xff]
  %v4053 = vld [vmem:[%s3 + $0x28] sm:$0xff]
  %v4054 = vld [vmem:[%s3 + $0x30] sm:$0xff]
  %v4055 = vld [vmem:[%s3 + $0x38] sm:$0xff]
  %v4056 = vld [vmem:[%s3 + $0x40] sm:$0xff]
  %v4057 = vld [vmem:[%s3 + $0x48] sm:$0xff]
  %v4058 = vld [vmem:[%s3 + $0x50] sm:$0xff]
  %v4059 = vld [vmem:[%s3 + $0x58] sm:$0xff]
  %v4060 = vld [vmem:[%s3 + $0x60] sm:$0xff]
  %v4061 = vld [vmem:[%s3 + $0x68] sm:$0xff]
  %v4062 = vld [vmem:[%s3 + $0x70] sm:$0xff]
  %v4063 = vld [vmem:[%s3 + $0x78] sm:$0xff]
  %v4064 = vld [vmem:[%s3 + $0x80] sm:$0xff]
  %v4065 = vld [vmem:[%s3 + $0x88] sm:$0xff]
  %v4066 = vld [vmem:[%s3 + $0x90] sm:$0xff]
  %v4067 = vld [vmem:[%s3 + $0x98] sm:$0xff]
  %v4068 = vld [vmem:[%s3 + $0xa0] sm:$0xff]
  %v4069 = vld [vmem:[%s3 + $0xa8] sm:$0xff]
  %v4070 = vld [vmem:[%s3 + $0xb0] sm:$0xff]
  %v4071 = vld [vmem:[%s3 + $0xb8] sm:$0xff]
  %v4072 = vld [vmem:[%s3 + $0xc0] sm:$0xff]
  %v4073 = vld [vmem:[%s3 + $0xc8] sm:$0xff]
  %v4074 = vld [vmem:[%s3 + $0xd0] sm:$0xff]
  %v4075 = vld [vmem:[%s3 + $0xd8] sm:$0xff]
  %v4076 = vld [vmem:[%s3 + $0xe0] sm:$0xff]
  %v4077 = vld [vmem:[%s3 + $0xe8] sm:$0xff]
  %v4078 = vld [vmem:[%s3 + $0xf0] sm:$0xff]
  %v4079 = vld [vmem:[%s3 + $0xf8] sm:$0xff]
  %v4080 = vld [vmem:[%s3 + $0x100] sm:$0xff]
  %v4081 = vld [vmem:[%s3 + $0x108] sm:$0xff]
  %v4082 = vld [vmem:[%s3 + $0x110] sm:$0xff]
  %v4083 = vld [vmem:[%s3 + $0x118] sm:$0xff]
  %v4084 = vld [vmem:[%s3 + $0x120] sm:$0xff]
  %v4085 = vld [vmem:[%s3 + $0x128] sm:$0xff]
  %v4086 = vld [vmem:[%s3 + $0x130] sm:$0xff]
  %v4087 = vld [vmem:[%s3 + $0x138] sm:$0xff]
  %v4088 = vld [vmem:[%s3 + $0x140] sm:$0xff]
  %v4089 = vld [vmem:[%s3 + $0x148] sm:$0xff]
  %v4090 = vld [vmem:[%s3 + $0x150] sm:$0xff]
  %v4091 = vld [vmem:[%s3 + $0x158] sm:$0xff]
  %v4092 = vld [vmem:[%s3 + $0x160] sm:$0xff]
  %v4093 = vld [vmem:[%s3 + $0x168] sm:$0xff]
  %v4094 = vld [vmem:[%s3 + $0x170] sm:$0xff]
  %v4095 = vld [vmem:[%s3 + $0x178] sm:$0xff]
  %v4096 = vld [vmem:[%s3 + $0x180] sm:$0xff]
  %v4097 = vld [vmem:[%s3 + $0x188] sm:$0xff]
  %v4098 = vld [vmem:[%s3 + $0x190] sm:$0xff]
  %v4099 = vld [vmem:[%s3 + $0x198] sm:$0xff]
  %v4100 = vld [vmem:[%s3 + $0x1a0] sm:$0xff]
  %v4101 = vld [vmem:[%s3 + $0x1a8] sm:$0xff]
  %v4102 = vld [vmem:[%s3 + $0x1b0] sm:$0xff]
  %v4103 = vld [vmem:[%s3 + $0x1b8] sm:$0xff]
  %v4104 = vld [vmem:[%s3 + $0x1c0] sm:$0xff]
  %v4105 = vld [vmem:[%s3 + $0x1c8] sm:$0xff]
  %v4106 = vld [vmem:[%s3 + $0x1d0] sm:$0xff]
  %v4107 = vld [vmem:[%s3 + $0x1d8] sm:$0xff]
  %v4108 = vld [vmem:[%s3 + $0x1e0] sm:$0xff]
  %v4109 = vld [vmem:[%s3 + $0x1e8] sm:$0xff]
  %v4110 = vld [vmem:[%s3 + $0x1f0] sm:$0xff]
  %v4111 = vld [vmem:[%s3 + $0x1f8] sm:$0xff]
  %v4112 = vld [vmem:[%s3 + $0x200] sm:$0xff]
  %v4113 = vld [vmem:[%s3 + $0x208] sm:$0xff]
  %v4114 = vld [vmem:[%s3 + $0x210] sm:$0xff]
  %v4115 = vld [vmem:[%s3 + $0x218] sm:$0xff]
  %v4116 = vld [vmem:[%s3 + $0x220] sm:$0xff]
  %v4117 = vld [vmem:[%s3 + $0x228] sm:$0xff]
  %v4118 = vld [vmem:[%s3 + $0x230] sm:$0xff]
  %v4119 = vld [vmem:[%s3 + $0x238] sm:$0xff]
  %v4120 = vld [vmem:[%s3 + $0x240] sm:$0xff]
  %v4121 = vld [vmem:[%s3 + $0x248] sm:$0xff]
  %v4122 = vld [vmem:[%s3 + $0x250] sm:$0xff]
  %v4123 = vld [vmem:[%s3 + $0x258] sm:$0xff]
  %v4124 = vld [vmem:[%s3 + $0x260] sm:$0xff]
  %v4125 = vld [vmem:[%s3 + $0x268] sm:$0xff]
  %v4126 = vld [vmem:[%s3 + $0x270] sm:$0xff]
  %v4127 = vld [vmem:[%s3 + $0x278] sm:$0xff]
  %v4128 = vld [vmem:[%s3 + $0x280] sm:$0xff]
  %v4129 = vld [vmem:[%s3 + $0x288] sm:$0xff]
  %v4130 = vld [vmem:[%s3 + $0x290] sm:$0xff]
  %v4131 = vld [vmem:[%s3 + $0x298] sm:$0xff]
  %v4132 = vld [vmem:[%s3 + $0x2a0] sm:$0xff]
  %v4133 = vld [vmem:[%s3 + $0x2a8] sm:$0xff]
  %v4134 = vld [vmem:[%s3 + $0x2b0] sm:$0xff]
  %v4135 = vld [vmem:[%s3 + $0x2b8] sm:$0xff]
  %v4136 = vld [vmem:[%s3 + $0x2c0] sm:$0xff]
  %v4137 = vld [vmem:[%s3 + $0x2c8] sm:$0xff]
  %v4138 = vld [vmem:[%s3 + $0x2d0] sm:$0xff]
  %v4139 = vld [vmem:[%s3 + $0x2d8] sm:$0xff]
  %v4140 = vld [vmem:[%s3 + $0x2e0] sm:$0xff]
  %v4141 = vld [vmem:[%s3 + $0x2e8] sm:$0xff]
  %v4142 = vld [vmem:[%s3 + $0x2f0] sm:$0xff]
  %v4143 = vld [vmem:[%s3 + $0x2f8] sm:$0xff]
  %v4144 = vld [vmem:[%s3 + $0x300] sm:$0xff]
  %v4145 = vld [vmem:[%s3 + $0x308] sm:$0xff]
  %v4146 = vld [vmem:[%s3 + $0x310] sm:$0xff]
  %v4147 = vld [vmem:[%s3 + $0x318] sm:$0xff]
  %v4148 = vld [vmem:[%s3 + $0x320] sm:$0xff]
  %v4149 = vld [vmem:[%s3 + $0x328] sm:$0xff]
  %v4150 = vld [vmem:[%s3 + $0x330] sm:$0xff]
  %v4151 = vld [vmem:[%s3 + $0x338] sm:$0xff]
  %v4152 = vld [vmem:[%s3 + $0x340] sm:$0xff]
  %v4153 = vld [vmem:[%s3 + $0x348] sm:$0xff]
  %v4154 = vld [vmem:[%s3 + $0x350] sm:$0xff]
  %v4155 = vld [vmem:[%s3 + $0x358] sm:$0xff]
  %v4156 = vld [vmem:[%s3 + $0x360] sm:$0xff]
  %v4157 = vld [vmem:[%s3 + $0x368] sm:$0xff]
  %v4158 = vld [vmem:[%s3 + $0x370] sm:$0xff]
  %v4159 = vld [vmem:[%s3 + $0x378] sm:$0xff]
  %v4160 = vld [vmem:[%s3 + $0x380] sm:$0xff]
  %v4161 = vld [vmem:[%s3 + $0x388] sm:$0xff]
  %v4162 = vld [vmem:[%s3 + $0x390] sm:$0xff]
  %v4163 = vld [vmem:[%s3 + $0x398] sm:$0xff]
  %v4164 = vld [vmem:[%s3 + $0x3a0] sm:$0xff]
  %v4165 = vld [vmem:[%s3 + $0x3a8] sm:$0xff]
  %v4166 = vld [vmem:[%s3 + $0x3b0] sm:$0xff]
  %v4167 = vld [vmem:[%s3 + $0x3b8] sm:$0xff]
  %v4168 = vld [vmem:[%s3 + $0x3c0] sm:$0xff]
  %v4169 = vld [vmem:[%s3 + $0x3c8] sm:$0xff]
  %v4170 = vld [vmem:[%s3 + $0x3d0] sm:$0xff]
  %v4171 = vld [vmem:[%s3 + $0x3d8] sm:$0xff]
  %v4172 = vld [vmem:[%s3 + $0x3e0] sm:$0xff]
  %v4173 = vld [vmem:[%s3 + $0x3e8] sm:$0xff]
  %v4174 = vld [vmem:[%s3 + $0x3f0] sm:$0xff]
  %v4175 = vld [vmem:[%s3 + $0x3f8] sm:$0xff]
  %v4176 = vld [vmem:[%s4] sm:$0xff]
  %v4177 = vld [vmem:[%s4 + $0x8] sm:$0xff]
  %v4178 = vld [vmem:[%s4 + $0x10] sm:$0xff]
  %v4179 = vld [vmem:[%s4 + $0x18] sm:$0xff]
  %v4180 = vld [vmem:[%s4 + $0x20] sm:$0xff]
  %v4181 = vld [vmem:[%s4 + $0x28] sm:$0xff]
  %v4182 = vld [vmem:[%s4 + $0x30] sm:$0xff]
  %v4183 = vld [vmem:[%s4 + $0x38] sm:$0xff]
  %4185 = vset.pattern.permute.xlu0 0
  %4186 = vperm.xlu0 %4185, %v4176
  %v4187 = vpop.permute.xlu0 %4186
  %4190 = vset.pattern.permute.xlu0 0
  %4191 = vperm.xlu0 %4190, %v4177
  %v4192 = vpop.permute.xlu0 %4191
  %4195 = vset.pattern.permute.xlu0 0
  %4196 = vperm.xlu0 %4195, %v4178
  %v4197 = vpop.permute.xlu0 %4196
  %4200 = vset.pattern.permute.xlu0 0
  %4201 = vperm.xlu0 %4200, %v4179
  %v4202 = vpop.permute.xlu0 %4201
  %4205 = vset.pattern.permute.xlu0 0
  %4206 = vperm.xlu0 %4205, %v4180
  %v4207 = vpop.permute.xlu0 %4206
  %4210 = vset.pattern.permute.xlu0 0
  %4211 = vperm.xlu0 %4210, %v4181
  %v4212 = vpop.permute.xlu0 %4211
  %4215 = vset.pattern.permute.xlu0 0
  %4216 = vperm.xlu0 %4215, %v4182
  %v4217 = vpop.permute.xlu0 %4216
  %4220 = vset.pattern.permute.xlu0 0
  %4221 = vperm.xlu0 %4220, %v4183
  %v4222 = vpop.permute.xlu0 %4221
  %vm4224 = vcmask 31744
  %v4226 = vsel %vm4224, %v4048, 0
  %v4229 = vsel %vm4224, %v4049, 0
  %v4232 = vsel %vm4224, %v4050, 0
  %v4235 = vsel %vm4224, %v4051, 0
  %v4238 = vsel %vm4224, %v4052, 0
  %v4241 = vsel %vm4224, %v4053, 0
  %v4244 = vsel %vm4224, %v4054, 0
  %v4247 = vsel %vm4224, %v4055, 0
  %vm4249 = vcmask 1043456
  %v4251 = vsel %vm4249, %v4032, 0
  %4253 = vmatprep.subr.mxu0 0.0
  %4254 = vmatpush1.msra.mxu0 %v4251
  %4255 = vmatprep.subr.mxu0 0.0
  %4256 = vmatpush1.msra.mxu0 0.0
  %4257 = vmatprep.subr.mxu0 0.0
  %4258 = vmatpush1.msra.mxu0 0.0
  %4259 = vmatprep.subr.mxu0 0.0
  %4260 = vmatpush1.msra.mxu0 0.0
  %4261 = vmatprep.subr.mxu0 0.0
  %4262 = vmatpush1.msra.mxu0 0.0
  %4263 = vmatprep.subr.mxu0 0.0
  %4264 = vmatpush1.msra.mxu0 0.0
  %4265 = vmatprep.subr.mxu0 0.0
  %4266 = vmatpush1.msra.mxu0 0.0
  %4267 = vmatprep.subr.mxu0 0.0
  %4268 = vmatpush1.msra.mxu0 0.0
  %4269 = vmatprep.subr.mxu0 0.0
  %4270 = vmatpush1.msra.mxu0 0.0
  %4271 = vmatprep.subr.mxu0 0.0
  %4272 = vmatpush1.msra.mxu0 0.0
  %4273 = vmatprep.subr.mxu0 0.0
  %4274 = vmatpush1.msra.mxu0 0.0
  %4275 = vmatprep.subr.mxu0 0.0
  %4276 = vmatpush1.msra.mxu0 0.0
  %4277 = vmatprep.subr.mxu0 0.0
  %4278 = vmatpush1.msra.mxu0 0.0
  %4279 = vmatprep.subr.mxu0 0.0
  %4280 = vmatpush1.msra.mxu0 0.0
  %4281 = vmatprep.subr.mxu0 0.0
  %4282 = vmatpush1.msra.mxu0 0.0
  %4283 = vmatprep.subr.mxu0 0.0
  %4284 = vmatpush1.msra.mxu0 0.0
  %4285 = vmatprep.subr.mxu0 0.0
  %4286 = vmatpush1.msra.mxu0 0.0
  %4287 = vmatprep.subr.mxu0 0.0
  %4288 = vmatpush1.msra.mxu0 0.0
  %4289 = vmatprep.subr.mxu0 0.0
  %4290 = vmatpush1.msra.mxu0 0.0
  %4291 = vmatprep.subr.mxu0 0.0
  %4292 = vmatpush1.msra.mxu0 0.0
  %4293 = vmatprep.subr.mxu0 0.0
  %4294 = vmatpush1.msra.mxu0 0.0
  %4295 = vmatprep.subr.mxu0 0.0
  %4296 = vmatpush1.msra.mxu0 0.0
  %4297 = vmatprep.subr.mxu0 0.0
  %4298 = vmatpush1.msra.mxu0 0.0
  %4299 = vmatprep.subr.mxu0 0.0
  %4300 = vmatpush1.msra.mxu0 0.0
  %4301 = vmatprep.subr.mxu0 0.0
  %4302 = vmatpush1.msra.mxu0 0.0
  %4303 = vmatprep.subr.mxu0 0.0
  %4304 = vmatpush1.msra.mxu0 0.0
  %4305 = vmatprep.subr.mxu0 0.0
  %4306 = vmatpush1.msra.mxu0 0.0
  %4307 = vmatprep.subr.mxu0 0.0
  %4308 = vmatpush1.msra.mxu0 0.0
  %4309 = vmatprep.subr.mxu0 0.0
  %4310 = vmatpush1.msra.mxu0 0.0
  %4311 = vmatprep.subr.mxu0 0.0
  %4312 = vmatpush1.msra.mxu0 0.0
  %4313 = vmatprep.subr.mxu0 0.0
  %4314 = vmatpush1.msra.mxu0 0.0
  %4315 = vmatprep.subr.mxu0 0.0
  %4316 = vmatpush1.msra.mxu0 0.0
  %4317 = vmatprep.mubr.f32.mxu0 0.0
  %4318 = vmatmul.mubr.f32.gmra.mrb[0].mxu0 %v4226
  %v4319 = vpop.f32.mrb[0].mxu0
  %v4320 = vadd.f32 %v4187, %v4319
  %v4321 = vpop.f32.mrb[0].mxu0
  %4322 = vmatprep.mubr.f32.mxu0 0.0
  %4323 = vmatmul.mubr.f32.gmra.mrb[0].mxu0 %v4229
  %v4324 = vpop.f32.mrb[0].mxu0
  %v4325 = vadd.f32 %v4192, %v4324
  %v4326 = vpop.f32.mrb[0].mxu0
  %4327 = vmatprep.mubr.f32.mxu0 0.0
  %4328 = vmatmul.mubr.f32.gmra.mrb[0].mxu0 %v4232
  %v4329 = vpop.f32.mrb[0].mxu0
  %v4330 = vadd.f32 %v4197, %v4329
  %v4331 = vpop.f32.mrb[0].mxu0
  %4332 = vmatprep.mubr.f32.mxu0 0.0
  %4333 = vmatmul.mubr.f32.gmra.mrb[0].mxu0 %v4235
  %v4334 = vpop.f32.mrb[0].mxu0
  %v4335 = vadd.f32 %v4202, %v4334
  %v4336 = vpop.f32.mrb[0].mxu0
  %4337 = vmatprep.mubr.f32.mxu0 0.0
  %4338 = vmatmul.mubr.f32.gmra.mrb[0].mxu0 %v4238
  %v4339 = vpop.f32.mrb[0].mxu0
  %v4340 = vadd.f32 %v4207, %v4339
  %v4341 = vpop.f32.mrb[0].mxu0
  %4342 = vmatprep.mubr.f32.mxu0 0.0
  %4343 = vmatmul.mubr.f32.gmra.mrb[0].mxu0 %v4241
  %v4344 = vpop.f32.mrb[0].mxu0
  %v4345 = vadd.f32 %v4212, %v4344
  %v4346 = vpop.f32.mrb[0].mxu0
  %4347 = vmatprep.mubr.f32.mxu0 0.0
  %4348 = vmatmul.mubr.f32.gmra.mrb[0].mxu0 %v4244
  %v4349 = vpop.f32.mrb[0].mxu0
  %v4350 = vadd.f32 %v4217, %v4349
  %v4351 = vpop.f32.mrb[0].mxu0
  %4352 = vmatprep.mubr.f32.mxu0 0.0
  %4353 = vmatmul.mubr.f32.gmra.mrb[0].mxu0 %v4247
  %v4354 = vpop.f32.mrb[0].mxu0
  %v4355 = vadd.f32 %v4222, %v4354
  %v4356 = vpop.f32.mrb[0].mxu0
  %4357 = vdwg.mxu0
  %v4359 = vsel %vm4224, %v4056, 0
  %v4362 = vsel %vm4224, %v4057, 0
  %v4365 = vsel %vm4224, %v4058, 0
  %v4368 = vsel %vm4224, %v4059, 0
  %v4371 = vsel %vm4224, %v4060, 0
  %v4374 = vsel %vm4224, %v4061, 0
  %v4377 = vsel %vm4224, %v4062, 0
  %v4380 = vsel %vm4224, %v4063, 0
  %v4383 = vsel %vm4249, %v4033, 0
  %4385 = vmatprep.subr.mxu0 0.0
  %4386 = vmatpush1.msra.mxu0 %v4383
  %4387 = vmatprep.subr.mxu0 0.0
  %4388 = vmatpush1.msra.mxu0 0.0
  %4389 = vmatprep.subr.mxu0 0.0
  %4390 = vmatpush1.msra.mxu0 0.0
  %4391 = vmatprep.subr.mxu0 0.0
  %4392 = vmatpush1.msra.mxu0 0.0
  %4393 = vmatprep.subr.mxu0 0.0
  %4394 = vmatpush1.msra.mxu0 0.0
  %4395 = vmatprep.subr.mxu0 0.0
  %4396 = vmatpush1.msra.mxu0 0.0
  %4397 = vmatprep.subr.mxu0 0.0
  %4398 = vmatpush1.msra.mxu0 0.0
  %4399 = vmatprep.subr.mxu0 0.0
  %4400 = vmatpush1.msra.mxu0 0.0
  %4401 = vmatprep.subr.mxu0 0.0
  %4402 = vmatpush1.msra.mxu0 0.0
  %4403 = vmatprep.subr.mxu0 0.0
  %4404 = vmatpush1.msra.mxu0 0.0
  %4405 = vmatprep.subr.mxu0 0.0
  %4406 = vmatpush1.msra.mxu0 0.0
  %4407 = vmatprep.subr.mxu0 0.0
  %4408 = vmatpush1.msra.mxu0 0.0
  %4409 = vmatprep.subr.mxu0 0.0
  %4410 = vmatpush1.msra.mxu0 0.0
  %4411 = vmatprep.subr.mxu0 0.0
  %4412 = vmatpush1.msra.mxu0 0.0
  %4413 = vmatprep.subr.mxu0 0.0
  %4414 = vmatpush1.msra.mxu0 0.0
  %4415 = vmatprep.subr.mxu0 0.0
  %4416 = vmatpush1.msra.mxu0 0.0
  %4417 = vmatprep.subr.mxu0 0.0
  %4418 = vmatpush1.msra.mxu0 0.0
  %4419 = vmatprep.subr.mxu0 0.0
  %4420 = vmatpush1.msra.mxu0 0.0
  %4421 = vmatprep.subr.mxu0 0.0
  %4422 = vmatpush1.msra.mxu0 0.0
  %4423 = vmatprep.subr.mxu0 0.0
  %4424 = vmatpush1.msra.mxu0 0.0
  %4425 = vmatprep.subr.mxu0 0.0
  %4426 = vmatpush1.msra.mxu0 0.0
  %4427 = vmatprep.subr.mxu0 0.0
  %4428 = vmatpush1.msra.mxu0 0.0
  %4429 = vmatprep.subr.mxu0 0.0
  %4430 = vmatpush1.msra.mxu0 0.0
  %4431 = vmatprep.subr.mxu0 0.0
  %4432 = vmatpush1.msra.mxu0 0.0
  %4433 = vmatprep.subr.mxu0 0.0
  %4434 = vmatpush1.msra.mxu0 0.0
  %4435 = vmatprep.subr.mxu0 0.0
  %4436 = vmatpush1.msra.mxu0 0.0
  %4437 = vmatprep.subr.mxu0 0.0
  %4438 = vmatpush1.msra.mxu0 0.0
  %4439 = vmatprep.subr.mxu0 0.0
  %4440 = vmatpush1.msra.mxu0 0.0
  %4441 = vmatprep.subr.mxu0 0.0
  %4442 = vmatpush1.msra.mxu0 0.0
  %4443 = vmatprep.subr.mxu0 0.0
  %4444 = vmatpush1.msra.mxu0 0.0
  %4445 = vmatprep.subr.mxu0 0.0
  %4446 = vmatpush1.msra.mxu0 0.0
  %4447 = vmatprep.subr.mxu0 0.0
  %4448 = vmatpush1.msra.mxu0 0.0
  %4449 = vmatprep.mubr.f32.mxu0 0.0
  %4450 = vmatmul.mubr.f32.gmra.mrb[0].mxu0 %v4359
  %v4451 = vpop.f32.mrb[0].mxu0
  %v4452 = vadd.f32 %v4187, %v4451
  %v4453 = vpop.f32.mrb[0].mxu0
  %4454 = vmatprep.mubr.f32.mxu0 0.0
  %4455 = vmatmul.mubr.f32.gmra.mrb[0].mxu0 %v4362
  %v4456 = vpop.f32.mrb[0].mxu0
  %v4457 = vadd.f32 %v4192, %v4456
  %v4458 = vpop.f32.mrb[0].mxu0
  %4459 = vmatprep.mubr.f32.mxu0 0.0
  %4460 = vmatmul.mubr.f32.gmra.mrb[0].mxu0 %v4365
  %v4461 = vpop.f32.mrb[0].mxu0
  %v4462 = vadd.f32 %v4197, %v4461
  %v4463 = vpop.f32.mrb[0].mxu0
  %4464 = vmatprep.mubr.f32.mxu0 0.0
  %4465 = vmatmul.mubr.f32.gmra.mrb[0].mxu0 %v4368
  %v4466 = vpop.f32.mrb[0].mxu0
  %v4467 = vadd.f32 %v4202, %v4466
  %v4468 = vpop.f32.mrb[0].mxu0
  %4469 = vmatprep.mubr.f32.mxu0 0.0
  %4470 = vmatmul.mubr.f32.gmra.mrb[0].mxu0 %v4371
  %v4471 = vpop.f32.mrb[0].mxu0
  %v4472 = vadd.f32 %v4207, %v4471
  %v4473 = vpop.f32.mrb[0].mxu0
  %4474 = vmatprep.mubr.f32.mxu0 0.0
  %4475 = vmatmul.mubr.f32.gmra.mrb[0].mxu0 %v4374
  %v4476 = vpop.f32.mrb[0].mxu0
  %v4477 = vadd.f32 %v4212, %v4476
  %v4478 = vpop.f32.mrb[0].mxu0
  %4479 = vmatprep.mubr.f32.mxu0 0.0
  %4480 = vmatmul.mubr.f32.gmra.mrb[0].mxu0 %v4377
  %v4481 = vpop.f32.mrb[0].mxu0
  %v4482 = vadd.f32 %v4217, %v4481
  %v4483 = vpop.f32.mrb[0].mxu0
  %4484 = vmatprep.mubr.f32.mxu0 0.0
  %4485 = vmatmul.mubr.f32.gmra.mrb[0].mxu0 %v4380
  %v4486 = vpop.f32.mrb[0].mxu0
  %v4487 = vadd.f32 %v4222, %v4486
  %v4488 = vpop.f32.mrb[0].mxu0
  %4489 = vdwg.mxu0
  %v4491 = vsel %vm4224, %v4064, 0
  %v4494 = vsel %vm4224, %v4065, 0
  %v4497 = vsel %vm4224, %v4066, 0
  %v4500 = vsel %vm4224, %v4067, 0
  %v4503 = vsel %vm4224, %v4068, 0
  %v4506 = vsel %vm4224, %v4069, 0
  %v4509 = vsel %vm4224, %v4070, 0
  %v4512 = vsel %vm4224, %v4071, 0
  %v4515 = vsel %vm4249, %v4034, 0
  %4517 = vmatprep.subr.mxu0 0.0
  %4518 = vmatpush1.msra.mxu0 %v4515
  %4519 = vmatprep.subr.mxu0 0.0
  %4520 = vmatpush1.msra.mxu0 0.0
  %4521 = vmatprep.subr.mxu0 0.0
  %4522 = vmatpush1.msra.mxu0 0.0
  %4523 = vmatprep.subr.mxu0 0.0
  %4524 = vmatpush1.msra.mxu0 0.0
  %4525 = vmatprep.subr.mxu0 0.0
  %4526 = vmatpush1.msra.mxu0 0.0
  %4527 = vmatprep.subr.mxu0 0.0
  %4528 = vmatpush1.msra.mxu0 0.0
  %4529 = vmatprep.subr.mxu0 0.0
  %4530 = vmatpush1.msra.mxu0 0.0
  %4531 = vmatprep.subr.mxu0 0.0
  %4532 = vmatpush1.msra.mxu0 0.0
  %4533 = vmatprep.subr.mxu0 0.0
  %4534 = vmatpush1.msra.mxu0 0.0
  %4535 = vmatprep.subr.mxu0 0.0
  %4536 = vmatpush1.msra.mxu0 0.0
  %4537 = vmatprep.subr.mxu0 0.0
  %4538 = vmatpush1.msra.mxu0 0.0
  %4539 = vmatprep.subr.mxu0 0.0
  %4540 = vmatpush1.msra.mxu0 0.0
  %4541 = vmatprep.subr.mxu0 0.0
  %4542 = vmatpush1.msra.mxu0 0.0
  %4543 = vmatprep.subr.mxu0 0.0
  %4544 = vmatpush1.msra.mxu0 0.0
  %4545 = vmatprep.subr.mxu0 0.0
  %4546 = vmatpush1.msra.mxu0 0.0
  %4547 = vmatprep.subr.mxu0 0.0
  %4548 = vmatpush1.msra.mxu0 0.0
  %4549 = vmatprep.subr.mxu0 0.0
  %4550 = vmatpush1.msra.mxu0 0.0
  %4551 = vmatprep.subr.mxu0 0.0
  %4552 = vmatpush1.msra.mxu0 0.0
  %4553 = vmatprep.subr.mxu0 0.0
  %4554 = vmatpush1.msra.mxu0 0.0
  %4555 = vmatprep.subr.mxu0 0.0
  %4556 = vmatpush1.msra.mxu0 0.0
  %4557 = vmatprep.subr.mxu0 0.0
  %4558 = vmatpush1.msra.mxu0 0.0
  %4559 = vmatprep.subr.mxu0 0.0
  %4560 = vmatpush1.msra.mxu0 0.0
  %4561 = vmatprep.subr.mxu0 0.0
  %4562 = vmatpush1.msra.mxu0 0.0
  %4563 = vmatprep.subr.mxu0 0.0
  %4564 = vmatpush1.msra.mxu0 0.0
  %4565 = vmatprep.subr.mxu0 0.0
  %4566 = vmatpush1.msra.mxu0 0.0
  %4567 = vmatprep.subr.mxu0 0.0
  %4568 = vmatpush1.msra.mxu0 0.0
  %4569 = vmatprep.subr.mxu0 0.0
  %4570 = vmatpush1.msra.mxu0 0.0
  %4571 = vmatprep.subr.mxu0 0.0
  %4572 = vmatpush1.msra.mxu0 0.0
  %4573 = vmatprep.subr.mxu0 0.0
  %4574 = vmatpush1.msra.mxu0 0.0
  %4575 = vmatprep.subr.mxu0 0.0
  %4576 = vmatpush1.msra.mxu0 0.0
  %4577 = vmatprep.subr.mxu0 0.0
  %4578 = vmatpush1.msra.mxu0 0.0
  %4579 = vmatprep.subr.mxu0 0.0
  %4580 = vmatpush1.msra.mxu0 0.0
  %4581 = vmatprep.mubr.f32.mxu0 0.0
  %4582 = vmatmul.mubr.f32.gmra.mrb[0].mxu0 %v4491
  %v4583 = vpop.f32.mrb[0].mxu0
  %v4584 = vadd.f32 %v4187, %v4583
  %v4585 = vpop.f32.mrb[0].mxu0
  %4586 = vmatprep.mubr.f32.mxu0 0.0
  %4587 = vmatmul.mubr.f32.gmra.mrb[0].mxu0 %v4494
  %v4588 = vpop.f32.mrb[0].mxu0
  %v4589 = vadd.f32 %v4192, %v4588
  %v4590 = vpop.f32.mrb[0].mxu0
  %4591 = vmatprep.mubr.f32.mxu0 0.0
  %4592 = vmatmul.mubr.f32.gmra.mrb[0].mxu0 %v4497
  %v4593 = vpop.f32.mrb[0].mxu0
  %v4594 = vadd.f32 %v4197, %v4593
  %v4595 = vpop.f32.mrb[0].mxu0
  %4596 = vmatprep.mubr.f32.mxu0 0.0
  %4597 = vmatmul.mubr.f32.gmra.mrb[0].mxu0 %v4500
  %v4598 = vpop.f32.mrb[0].mxu0
  %v4599 = vadd.f32 %v4202, %v4598
  %v4600 = vpop.f32.mrb[0].mxu0
  %4601 = vmatprep.mubr.f32.mxu0 0.0
  %4602 = vmatmul.mubr.f32.gmra.mrb[0].mxu0 %v4503
  %v4603 = vpop.f32.mrb[0].mxu0
  %v4604 = vadd.f32 %v4207, %v4603
  %v4605 = vpop.f32.mrb[0].mxu0
  %4606 = vmatprep.mubr.f32.mxu0 0.0
  %4607 = vmatmul.mubr.f32.gmra.mrb[0].mxu0 %v4506
  %v4608 = vpop.f32.mrb[0].mxu0
  %v4609 = vadd.f32 %v4212, %v4608
  %v4610 = vpop.f32.mrb[0].mxu0
  %4611 = vmatprep.mubr.f32.mxu0 0.0
  %4612 = vmatmul.mubr.f32.gmra.mrb[0].mxu0 %v4509
  %v4613 = vpop.f32.mrb[0].mxu0
  %v4614 = vadd.f32 %v4217, %v4613
  %v4615 = vpop.f32.mrb[0].mxu0
  %4616 = vmatprep.mubr.f32.mxu0 0.0
  %4617 = vmatmul.mubr.f32.gmra.mrb[0].mxu0 %v4512
  %v4618 = vpop.f32.mrb[0].mxu0
  %v4619 = vadd.f32 %v4222, %v4618
  %v4620 = vpop.f32.mrb[0].mxu0
  %4621 = vdwg.mxu0
  %v4623 = vsel %vm4224, %v4072, 0
  %v4626 = vsel %vm4224, %v4073, 0
  %v4629 = vsel %vm4224, %v4074, 0
  %v4632 = vsel %vm4224, %v4075, 0
  %v4635 = vsel %vm4224, %v4076, 0
  %v4638 = vsel %vm4224, %v4077, 0
  %v4641 = vsel %vm4224, %v4078, 0
  %v4644 = vsel %vm4224, %v4079, 0
  %v4647 = vsel %vm4249, %v4035, 0
  %4649 = vmatprep.subr.mxu0 0.0
  %4650 = vmatpush1.msra.mxu0 %v4647
  %4651 = vmatprep.subr.mxu0 0.0
  %4652 = vmatpush1.msra.mxu0 0.0
  %4653 = vmatprep.subr.mxu0 0.0
  %4654 = vmatpush1.msra.mxu0 0.0
  %4655 = vmatprep.subr.mxu0 0.0
  %4656 = vmatpush1.msra.mxu0 0.0
  %4657 = vmatprep.subr.mxu0 0.0
  %4658 = vmatpush1.msra.mxu0 0.0
  %4659 = vmatprep.subr.mxu0 0.0
  %4660 = vmatpush1.msra.mxu0 0.0
  %4661 = vmatprep.subr.mxu0 0.0
  %4662 = vmatpush1.msra.mxu0 0.0
  %4663 = vmatprep.subr.mxu0 0.0
  %4664 = vmatpush1.msra.mxu0 0.0
  %4665 = vmatprep.subr.mxu0 0.0
  %4666 = vmatpush1.msra.mxu0 0.0
  %4667 = vmatprep.subr.mxu0 0.0
  %4668 = vmatpush1.msra.mxu0 0.0
  %4669 = vmatprep.subr.mxu0 0.0
  %4670 = vmatpush1.msra.mxu0 0.0
  %4671 = vmatprep.subr.mxu0 0.0
  %4672 = vmatpush1.msra.mxu0 0.0
  %4673 = vmatprep.subr.mxu0 0.0
  %4674 = vmatpush1.msra.mxu0 0.0
  %4675 = vmatprep.subr.mxu0 0.0
  %4676 = vmatpush1.msra.mxu0 0.0
  %4677 = vmatprep.subr.mxu0 0.0
  %4678 = vmatpush1.msra.mxu0 0.0
  %4679 = vmatprep.subr.mxu0 0.0
  %4680 = vmatpush1.msra.mxu0 0.0
  %4681 = vmatprep.subr.mxu0 0.0
  %4682 = vmatpush1.msra.mxu0 0.0
  %4683 = vmatprep.subr.mxu0 0.0
  %4684 = vmatpush1.msra.mxu0 0.0
  %4685 = vmatprep.subr.mxu0 0.0
  %4686 = vmatpush1.msra.mxu0 0.0
  %4687 = vmatprep.subr.mxu0 0.0
  %4688 = vmatpush1.msra.mxu0 0.0
  %4689 = vmatprep.subr.mxu0 0.0
  %4690 = vmatpush1.msra.mxu0 0.0
  %4691 = vmatprep.subr.mxu0 0.0
  %4692 = vmatpush1.msra.mxu0 0.0
  %4693 = vmatprep.subr.mxu0 0.0
  %4694 = vmatpush1.msra.mxu0 0.0
  %4695 = vmatprep.subr.mxu0 0.0
  %4696 = vmatpush1.msra.mxu0 0.0
  %4697 = vmatprep.subr.mxu0 0.0
  %4698 = vmatpush1.msra.mxu0 0.0
  %4699 = vmatprep.subr.mxu0 0.0
  %4700 = vmatpush1.msra.mxu0 0.0
  %4701 = vmatprep.subr.mxu0 0.0
  %4702 = vmatpush1.msra.mxu0 0.0
  %4703 = vmatprep.subr.mxu0 0.0
  %4704 = vmatpush1.msra.mxu0 0.0
  %4705 = vmatprep.subr.mxu0 0.0
  %4706 = vmatpush1.msra.mxu0 0.0
  %4707 = vmatprep.subr.mxu0 0.0
  %4708 = vmatpush1.msra.mxu0 0.0
  %4709 = vmatprep.subr.mxu0 0.0
  %4710 = vmatpush1.msra.mxu0 0.0
  %4711 = vmatprep.subr.mxu0 0.0
  %4712 = vmatpush1.msra.mxu0 0.0
  %4713 = vmatprep.mubr.f32.mxu0 0.0
  %4714 = vmatmul.mubr.f32.gmra.mrb[0].mxu0 %v4623
  %v4715 = vpop.f32.mrb[0].mxu0
  %v4716 = vadd.f32 %v4187, %v4715
  %v4717 = vpop.f32.mrb[0].mxu0
  %4718 = vmatprep.mubr.f32.mxu0 0.0
  %4719 = vmatmul.mubr.f32.gmra.mrb[0].mxu0 %v4626
  %v4720 = vpop.f32.mrb[0].mxu0
  %v4721 = vadd.f32 %v4192, %v4720
  %v4722 = vpop.f32.mrb[0].mxu0
  %4723 = vmatprep.mubr.f32.mxu0 0.0
  %4724 = vmatmul.mubr.f32.gmra.mrb[0].mxu0 %v4629
  %v4725 = vpop.f32.mrb[0].mxu0
  %v4726 = vadd.f32 %v4197, %v4725
  %v4727 = vpop.f32.mrb[0].mxu0
  %4728 = vmatprep.mubr.f32.mxu0 0.0
  %4729 = vmatmul.mubr.f32.gmra.mrb[0].mxu0 %v4632
  %v4730 = vpop.f32.mrb[0].mxu0
  %v4731 = vadd.f32 %v4202, %v4730
  %v4732 = vpop.f32.mrb[0].mxu0
  %4733 = vmatprep.mubr.f32.mxu0 0.0
  %4734 = vmatmul.mubr.f32.gmra.mrb[0].mxu0 %v4635
  %v4735 = vpop.f32.mrb[0].mxu0
  %v4736 = vadd.f32 %v4207, %v4735
  %v4737 = vpop.f32.mrb[0].mxu0
  %4738 = vmatprep.mubr.f32.mxu0 0.0
  %4739 = vmatmul.mubr.f32.gmra.mrb[0].mxu0 %v4638
  %v4740 = vpop.f32.mrb[0].mxu0
  %v4741 = vadd.f32 %v4212, %v4740
  %v4742 = vpop.f32.mrb[0].mxu0
  %4743 = vmatprep.mubr.f32.mxu0 0.0
  %4744 = vmatmul.mubr.f32.gmra.mrb[0].mxu0 %v4641
  %v4745 = vpop.f32.mrb[0].mxu0
  %v4746 = vadd.f32 %v4217, %v4745
  %v4747 = vpop.f32.mrb[0].mxu0
  %4748 = vmatprep.mubr.f32.mxu0 0.0
  %4749 = vmatmul.mubr.f32.gmra.mrb[0].mxu0 %v4644
  %v4750 = vpop.f32.mrb[0].mxu0
  %v4751 = vadd.f32 %v4222, %v4750
  %v4752 = vpop.f32.mrb[0].mxu0
  %4753 = vdwg.mxu0
  %v4755 = vsel %vm4224, %v4080, 0
  %v4758 = vsel %vm4224, %v4081, 0
  %v4761 = vsel %vm4224, %v4082, 0
  %v4764 = vsel %vm4224, %v4083, 0
  %v4767 = vsel %vm4224, %v4084, 0
  %v4770 = vsel %vm4224, %v4085, 0
  %v4773 = vsel %vm4224, %v4086, 0
  %v4776 = vsel %vm4224, %v4087, 0
  %v4779 = vsel %vm4249, %v4036, 0
  %4781 = vmatprep.subr.mxu0 0.0
  %4782 = vmatpush1.msra.mxu0 %v4779
  %4783 = vmatprep.subr.mxu0 0.0
  %4784 = vmatpush1.msra.mxu0 0.0
  %4785 = vmatprep.subr.mxu0 0.0
  %4786 = vmatpush1.msra.mxu0 0.0
  %4787 = vmatprep.subr.mxu0 0.0
  %4788 = vmatpush1.msra.mxu0 0.0
  %4789 = vmatprep.subr.mxu0 0.0
  %4790 = vmatpush1.msra.mxu0 0.0
  %4791 = vmatprep.subr.mxu0 0.0
  %4792 = vmatpush1.msra.mxu0 0.0
  %4793 = vmatprep.subr.mxu0 0.0
  %4794 = vmatpush1.msra.mxu0 0.0
  %4795 = vmatprep.subr.mxu0 0.0
  %4796 = vmatpush1.msra.mxu0 0.0
  %4797 = vmatprep.subr.mxu0 0.0
  %4798 = vmatpush1.msra.mxu0 0.0
  %4799 = vmatprep.subr.mxu0 0.0
  %4800 = vmatpush1.msra.mxu0 0.0
  %4801 = vmatprep.subr.mxu0 0.0
  %4802 = vmatpush1.msra.mxu0 0.0
  %4803 = vmatprep.subr.mxu0 0.0
  %4804 = vmatpush1.msra.mxu0 0.0
  %4805 = vmatprep.subr.mxu0 0.0
  %4806 = vmatpush1.msra.mxu0 0.0
  %4807 = vmatprep.subr.mxu0 0.0
  %4808 = vmatpush1.msra.mxu0 0.0
  %4809 = vmatprep.subr.mxu0 0.0
  %4810 = vmatpush1.msra.mxu0 0.0
  %4811 = vmatprep.subr.mxu0 0.0
  %4812 = vmatpush1.msra.mxu0 0.0
  %4813 = vmatprep.subr.mxu0 0.0
  %4814 = vmatpush1.msra.mxu0 0.0
  %4815 = vmatprep.subr.mxu0 0.0
  %4816 = vmatpush1.msra.mxu0 0.0
  %4817 = vmatprep.subr.mxu0 0.0
  %4818 = vmatpush1.msra.mxu0 0.0
  %4819 = vmatprep.subr.mxu0 0.0
  %4820 = vmatpush1.msra.mxu0 0.0
  %4821 = vmatprep.subr.mxu0 0.0
  %4822 = vmatpush1.msra.mxu0 0.0
  %4823 = vmatprep.subr.mxu0 0.0
  %4824 = vmatpush1.msra.mxu0 0.0
  %4825 = vmatprep.subr.mxu0 0.0
  %4826 = vmatpush1.msra.mxu0 0.0
  %4827 = vmatprep.subr.mxu0 0.0
  %4828 = vmatpush1.msra.mxu0 0.0
  %4829 = vmatprep.subr.mxu0 0.0
  %4830 = vmatpush1.msra.mxu0 0.0
  %4831 = vmatprep.subr.mxu0 0.0
  %4832 = vmatpush1.msra.mxu0 0.0
  %4833 = vmatprep.subr.mxu0 0.0
  %4834 = vmatpush1.msra.mxu0 0.0
  %4835 = vmatprep.subr.mxu0 0.0
  %4836 = vmatpush1.msra.mxu0 0.0
  %4837 = vmatprep.subr.mxu0 0.0
  %4838 = vmatpush1.msra.mxu0 0.0
  %4839 = vmatprep.subr.mxu0 0.0
  %4840 = vmatpush1.msra.mxu0 0.0
  %4841 = vmatprep.subr.mxu0 0.0
  %4842 = vmatpush1.msra.mxu0 0.0
  %4843 = vmatprep.subr.mxu0 0.0
  %4844 = vmatpush1.msra.mxu0 0.0
  %4845 = vmatprep.mubr.f32.mxu0 0.0
  %4846 = vmatmul.mubr.f32.gmra.mrb[0].mxu0 %v4755
  %v4847 = vpop.f32.mrb[0].mxu0
  %v4848 = vadd.f32 %v4187, %v4847
  %v4849 = vpop.f32.mrb[0].mxu0
  %4850 = vmatprep.mubr.f32.mxu0 0.0
  %4851 = vmatmul.mubr.f32.gmra.mrb[0].mxu0 %v4758
  %v4852 = vpop.f32.mrb[0].mxu0
  %v4853 = vadd.f32 %v4192, %v4852
  %v4854 = vpop.f32.mrb[0].mxu0
  %4855 = vmatprep.mubr.f32.mxu0 0.0
  %4856 = vmatmul.mubr.f32.gmra.mrb[0].mxu0 %v4761
  %v4857 = vpop.f32.mrb[0].mxu0
  %v4858 = vadd.f32 %v4197, %v4857
  %v4859 = vpop.f32.mrb[0].mxu0
  %4860 = vmatprep.mubr.f32.mxu0 0.0
  %4861 = vmatmul.mubr.f32.gmra.mrb[0].mxu0 %v4764
  %v4862 = vpop.f32.mrb[0].mxu0
  %v4863 = vadd.f32 %v4202, %v4862
  %v4864 = vpop.f32.mrb[0].mxu0
  %4865 = vmatprep.mubr.f32.mxu0 0.0
  %4866 = vmatmul.mubr.f32.gmra.mrb[0].mxu0 %v4767
  %v4867 = vpop.f32.mrb[0].mxu0
  %v4868 = vadd.f32 %v4207, %v4867
  %v4869 = vpop.f32.mrb[0].mxu0
  %4870 = vmatprep.mubr.f32.mxu0 0.0
  %4871 = vmatmul.mubr.f32.gmra.mrb[0].mxu0 %v4770
  %v4872 = vpop.f32.mrb[0].mxu0
  %v4873 = vadd.f32 %v4212, %v4872
  %v4874 = vpop.f32.mrb[0].mxu0
  %4875 = vmatprep.mubr.f32.mxu0 0.0
  %4876 = vmatmul.mubr.f32.gmra.mrb[0].mxu0 %v4773
  %v4877 = vpop.f32.mrb[0].mxu0
  %v4878 = vadd.f32 %v4217, %v4877
  %v4879 = vpop.f32.mrb[0].mxu0
  %4880 = vmatprep.mubr.f32.mxu0 0.0
  %4881 = vmatmul.mubr.f32.gmra.mrb[0].mxu0 %v4776
  %v4882 = vpop.f32.mrb[0].mxu0
  %v4883 = vadd.f32 %v4222, %v4882
  %v4884 = vpop.f32.mrb[0].mxu0
  %4885 = vdwg.mxu0
  %v4887 = vsel %vm4224, %v4088, 0
  %v4890 = vsel %vm4224, %v4089, 0
  %v4893 = vsel %vm4224, %v4090, 0
  %v4896 = vsel %vm4224, %v4091, 0
  %v4899 = vsel %vm4224, %v4092, 0
  %v4902 = vsel %vm4224, %v4093, 0
  %v4905 = vsel %vm4224, %v4094, 0
  %v4908 = vsel %vm4224, %v4095, 0
  %v4911 = vsel %vm4249, %v4037, 0
  %4913 = vmatprep.subr.mxu0 0.0
  %4914 = vmatpush1.msra.mxu0 %v4911
  %4915 = vmatprep.subr.mxu0 0.0
  %4916 = vmatpush1.msra.mxu0 0.0
  %4917 = vmatprep.subr.mxu0 0.0
  %4918 = vmatpush1.msra.mxu0 0.0
  %4919 = vmatprep.subr.mxu0 0.0
  %4920 = vmatpush1.msra.mxu0 0.0
  %4921 = vmatprep.subr.mxu0 0.0
  %4922 = vmatpush1.msra.mxu0 0.0
  %4923 = vmatprep.subr.mxu0 0.0
  %4924 = vmatpush1.msra.mxu0 0.0
  %4925 = vmatprep.subr.mxu0 0.0
  %4926 = vmatpush1.msra.mxu0 0.0
  %4927 = vmatprep.subr.mxu0 0.0
  %4928 = vmatpush1.msra.mxu0 0.0
  %4929 = vmatprep.subr.mxu0 0.0
  %4930 = vmatpush1.msra.mxu0 0.0
  %4931 = vmatprep.subr.mxu0 0.0
  %4932 = vmatpush1.msra.mxu0 0.0
  %4933 = vmatprep.subr.mxu0 0.0
  %4934 = vmatpush1.msra.mxu0 0.0
  %4935 = vmatprep.subr.mxu0 0.0
  %4936 = vmatpush1.msra.mxu0 0.0
  %4937 = vmatprep.subr.mxu0 0.0
  %4938 = vmatpush1.msra.mxu0 0.0
  %4939 = vmatprep.subr.mxu0 0.0
  %4940 = vmatpush1.msra.mxu0 0.0
  %4941 = vmatprep.subr.mxu0 0.0
  %4942 = vmatpush1.msra.mxu0 0.0
  %4943 = vmatprep.subr.mxu0 0.0
  %4944 = vmatpush1.msra.mxu0 0.0
  %4945 = vmatprep.subr.mxu0 0.0
  %4946 = vmatpush1.msra.mxu0 0.0
  %4947 = vmatprep.subr.mxu0 0.0
  %4948 = vmatpush1.msra.mxu0 0.0
  %4949 = vmatprep.subr.mxu0 0.0
  %4950 = vmatpush1.msra.mxu0 0.0
  %4951 = vmatprep.subr.mxu0 0.0
  %4952 = vmatpush1.msra.mxu0 0.0
  %4953 = vmatprep.subr.mxu0 0.0
  %4954 = vmatpush1.msra.mxu0 0.0
  %4955 = vmatprep.subr.mxu0 0.0
  %4956 = vmatpush1.msra.mxu0 0.0
  %4957 = vmatprep.subr.mxu0 0.0
  %4958 = vmatpush1.msra.mxu0 0.0
  %4959 = vmatprep.subr.mxu0 0.0
  %4960 = vmatpush1.msra.mxu0 0.0
  %4961 = vmatprep.subr.mxu0 0.0
  %4962 = vmatpush1.msra.mxu0 0.0
  %4963 = vmatprep.subr.mxu0 0.0
  %4964 = vmatpush1.msra.mxu0 0.0
  %4965 = vmatprep.subr.mxu0 0.0
  %4966 = vmatpush1.msra.mxu0 0.0
  %4967 = vmatprep.subr.mxu0 0.0
  %4968 = vmatpush1.msra.mxu0 0.0
  %4969 = vmatprep.subr.mxu0 0.0
  %4970 = vmatpush1.msra.mxu0 0.0
  %4971 = vmatprep.subr.mxu0 0.0
  %4972 = vmatpush1.msra.mxu0 0.0
  %4973 = vmatprep.subr.mxu0 0.0
  %4974 = vmatpush1.msra.mxu0 0.0
  %4975 = vmatprep.subr.mxu0 0.0
  %4976 = vmatpush1.msra.mxu0 0.0
  %4977 = vmatprep.mubr.f32.mxu0 0.0
  %4978 = vmatmul.mubr.f32.gmra.mrb[0].mxu0 %v4887
  %v4979 = vpop.f32.mrb[0].mxu0
  %v4980 = vadd.f32 %v4187, %v4979
  %v4981 = vpop.f32.mrb[0].mxu0
  %4982 = vmatprep.mubr.f32.mxu0 0.0
  %4983 = vmatmul.mubr.f32.gmra.mrb[0].mxu0 %v4890
  %v4984 = vpop.f32.mrb[0].mxu0
  %v4985 = vadd.f32 %v4192, %v4984
  %v4986 = vpop.f32.mrb[0].mxu0
  %4987 = vmatprep.mubr.f32.mxu0 0.0
  %4988 = vmatmul.mubr.f32.gmra.mrb[0].mxu0 %v4893
  %v4989 = vpop.f32.mrb[0].mxu0
  %v4990 = vadd.f32 %v4197, %v4989
  %v4991 = vpop.f32.mrb[0].mxu0
  %4992 = vmatprep.mubr.f32.mxu0 0.0
  %4993 = vmatmul.mubr.f32.gmra.mrb[0].mxu0 %v4896
  %v4994 = vpop.f32.mrb[0].mxu0
  %v4995 = vadd.f32 %v4202, %v4994
  %v4996 = vpop.f32.mrb[0].mxu0
  %4997 = vmatprep.mubr.f32.mxu0 0.0
  %4998 = vmatmul.mubr.f32.gmra.mrb[0].mxu0 %v4899
  %v4999 = vpop.f32.mrb[0].mxu0
  %v5000 = vadd.f32 %v4207, %v4999
  %v5001 = vpop.f32.mrb[0].mxu0
  %5002 = vmatprep.mubr.f32.mxu0 0.0
  %5003 = vmatmul.mubr.f32.gmra.mrb[0].mxu0 %v4902
  %v5004 = vpop.f32.mrb[0].mxu0
  %v5005 = vadd.f32 %v4212, %v5004
  %v5006 = vpop.f32.mrb[0].mxu0
  %5007 = vmatprep.mubr.f32.mxu0 0.0
  %5008 = vmatmul.mubr.f32.gmra.mrb[0].mxu0 %v4905
  %v5009 = vpop.f32.mrb[0].mxu0
  %v5010 = vadd.f32 %v4217, %v5009
  %v5011 = vpop.f32.mrb[0].mxu0
  %5012 = vmatprep.mubr.f32.mxu0 0.0
  %5013 = vmatmul.mubr.f32.gmra.mrb[0].mxu0 %v4908
  %v5014 = vpop.f32.mrb[0].mxu0
  %v5015 = vadd.f32 %v4222, %v5014
  %v5016 = vpop.f32.mrb[0].mxu0
  %5017 = vdwg.mxu0
  %v5019 = vsel %vm4224, %v4096, 0
  %v5022 = vsel %vm4224, %v4097, 0
  %v5025 = vsel %vm4224, %v4098, 0
  %v5028 = vsel %vm4224, %v4099, 0
  %v5031 = vsel %vm4224, %v4100, 0
  %v5034 = vsel %vm4224, %v4101, 0
  %v5037 = vsel %vm4224, %v4102, 0
  %v5040 = vsel %vm4224, %v4103, 0
  %v5043 = vsel %vm4249, %v4038, 0
  %5045 = vmatprep.subr.mxu0 0.0
  %5046 = vmatpush1.msra.mxu0 %v5043
  %5047 = vmatprep.subr.mxu0 0.0
  %5048 = vmatpush1.msra.mxu0 0.0
  %5049 = vmatprep.subr.mxu0 0.0
  %5050 = vmatpush1.msra.mxu0 0.0
  %5051 = vmatprep.subr.mxu0 0.0
  %5052 = vmatpush1.msra.mxu0 0.0
  %5053 = vmatprep.subr.mxu0 0.0
  %5054 = vmatpush1.msra.mxu0 0.0
  %5055 = vmatprep.subr.mxu0 0.0
  %5056 = vmatpush1.msra.mxu0 0.0
  %5057 = vmatprep.subr.mxu0 0.0
  %5058 = vmatpush1.msra.mxu0 0.0
  %5059 = vmatprep.subr.mxu0 0.0
  %5060 = vmatpush1.msra.mxu0 0.0
  %5061 = vmatprep.subr.mxu0 0.0
  %5062 = vmatpush1.msra.mxu0 0.0
  %5063 = vmatprep.subr.mxu0 0.0
  %5064 = vmatpush1.msra.mxu0 0.0
  %5065 = vmatprep.subr.mxu0 0.0
  %5066 = vmatpush1.msra.mxu0 0.0
  %5067 = vmatprep.subr.mxu0 0.0
  %5068 = vmatpush1.msra.mxu0 0.0
  %5069 = vmatprep.subr.mxu0 0.0
  %5070 = vmatpush1.msra.mxu0 0.0
  %5071 = vmatprep.subr.mxu0 0.0
  %5072 = vmatpush1.msra.mxu0 0.0
  %5073 = vmatprep.subr.mxu0 0.0
  %5074 = vmatpush1.msra.mxu0 0.0
  %5075 = vmatprep.subr.mxu0 0.0
  %5076 = vmatpush1.msra.mxu0 0.0
  %5077 = vmatprep.subr.mxu0 0.0
  %5078 = vmatpush1.msra.mxu0 0.0
  %5079 = vmatprep.subr.mxu0 0.0
  %5080 = vmatpush1.msra.mxu0 0.0
  %5081 = vmatprep.subr.mxu0 0.0
  %5082 = vmatpush1.msra.mxu0 0.0
  %5083 = vmatprep.subr.mxu0 0.0
  %5084 = vmatpush1.msra.mxu0 0.0
  %5085 = vmatprep.subr.mxu0 0.0
  %5086 = vmatpush1.msra.mxu0 0.0
  %5087 = vmatprep.subr.mxu0 0.0
  %5088 = vmatpush1.msra.mxu0 0.0
  %5089 = vmatprep.subr.mxu0 0.0
  %5090 = vmatpush1.msra.mxu0 0.0
  %5091 = vmatprep.subr.mxu0 0.0
  %5092 = vmatpush1.msra.mxu0 0.0
  %5093 = vmatprep.subr.mxu0 0.0
  %5094 = vmatpush1.msra.mxu0 0.0
  %5095 = vmatprep.subr.mxu0 0.0
  %5096 = vmatpush1.msra.mxu0 0.0
  %5097 = vmatprep.subr.mxu0 0.0
  %5098 = vmatpush1.msra.mxu0 0.0
  %5099 = vmatprep.subr.mxu0 0.0
  %5100 = vmatpush1.msra.mxu0 0.0
  %5101 = vmatprep.subr.mxu0 0.0
  %5102 = vmatpush1.msra.mxu0 0.0
  %5103 = vmatprep.subr.mxu0 0.0
  %5104 = vmatpush1.msra.mxu0 0.0
  %5105 = vmatprep.subr.mxu0 0.0
  %5106 = vmatpush1.msra.mxu0 0.0
  %5107 = vmatprep.subr.mxu0 0.0
  %5108 = vmatpush1.msra.mxu0 0.0
  %5109 = vmatprep.mubr.f32.mxu0 0.0
  %5110 = vmatmul.mubr.f32.gmra.mrb[0].mxu0 %v5019
  %v5111 = vpop.f32.mrb[0].mxu0
  %v5112 = vadd.f32 %v4187, %v5111
  %v5113 = vpop.f32.mrb[0].mxu0
  %5114 = vmatprep.mubr.f32.mxu0 0.0
  %5115 = vmatmul.mubr.f32.gmra.mrb[0].mxu0 %v5022
  %v5116 = vpop.f32.mrb[0].mxu0
  %v5117 = vadd.f32 %v4192, %v5116
  %v5118 = vpop.f32.mrb[0].mxu0
  %5119 = vmatprep.mubr.f32.mxu0 0.0
  %5120 = vmatmul.mubr.f32.gmra.mrb[0].mxu0 %v5025
  %v5121 = vpop.f32.mrb[0].mxu0
  %v5122 = vadd.f32 %v4197, %v5121
  %v5123 = vpop.f32.mrb[0].mxu0
  %5124 = vmatprep.mubr.f32.mxu0 0.0
  %5125 = vmatmul.mubr.f32.gmra.mrb[0].mxu0 %v5028
  %v5126 = vpop.f32.mrb[0].mxu0
  %v5127 = vadd.f32 %v4202, %v5126
  %v5128 = vpop.f32.mrb[0].mxu0
  %5129 = vmatprep.mubr.f32.mxu0 0.0
  %5130 = vmatmul.mubr.f32.gmra.mrb[0].mxu0 %v5031
  %v5131 = vpop.f32.mrb[0].mxu0
  %v5132 = vadd.f32 %v4207, %v5131
  %v5133 = vpop.f32.mrb[0].mxu0
  %5134 = vmatprep.mubr.f32.mxu0 0.0
  %5135 = vmatmul.mubr.f32.gmra.mrb[0].mxu0 %v5034
  %v5136 = vpop.f32.mrb[0].mxu0
  %v5137 = vadd.f32 %v4212, %v5136
  %v5138 = vpop.f32.mrb[0].mxu0
  %5139 = vmatprep.mubr.f32.mxu0 0.0
  %5140 = vmatmul.mubr.f32.gmra.mrb[0].mxu0 %v5037
  %v5141 = vpop.f32.mrb[0].mxu0
  %v5142 = vadd.f32 %v4217, %v5141
  %v5143 = vpop.f32.mrb[0].mxu0
  %5144 = vmatprep.mubr.f32.mxu0 0.0
  %5145 = vmatmul.mubr.f32.gmra.mrb[0].mxu0 %v5040
  %v5146 = vpop.f32.mrb[0].mxu0
  %v5147 = vadd.f32 %v4222, %v5146
  %v5148 = vpop.f32.mrb[0].mxu0
  %5149 = vdwg.mxu0
  %v5151 = vsel %vm4224, %v4104, 0
  %v5154 = vsel %vm4224, %v4105, 0
  %v5157 = vsel %vm4224, %v4106, 0
  %v5160 = vsel %vm4224, %v4107, 0
  %v5163 = vsel %vm4224, %v4108, 0
  %v5166 = vsel %vm4224, %v4109, 0
  %v5169 = vsel %vm4224, %v4110, 0
  %v5172 = vsel %vm4224, %v4111, 0
  %v5175 = vsel %vm4249, %v4039, 0
  %5177 = vmatprep.subr.mxu0 0.0
  %5178 = vmatpush1.msra.mxu0 %v5175
  %5179 = vmatprep.subr.mxu0 0.0
  %5180 = vmatpush1.msra.mxu0 0.0
  %5181 = vmatprep.subr.mxu0 0.0
  %5182 = vmatpush1.msra.mxu0 0.0
  %5183 = vmatprep.subr.mxu0 0.0
  %5184 = vmatpush1.msra.mxu0 0.0
  %5185 = vmatprep.subr.mxu0 0.0
  %5186 = vmatpush1.msra.mxu0 0.0
  %5187 = vmatprep.subr.mxu0 0.0
  %5188 = vmatpush1.msra.mxu0 0.0
  %5189 = vmatprep.subr.mxu0 0.0
  %5190 = vmatpush1.msra.mxu0 0.0
  %5191 = vmatprep.subr.mxu0 0.0
  %5192 = vmatpush1.msra.mxu0 0.0
  %5193 = vmatprep.subr.mxu0 0.0
  %5194 = vmatpush1.msra.mxu0 0.0
  %5195 = vmatprep.subr.mxu0 0.0
  %5196 = vmatpush1.msra.mxu0 0.0
  %5197 = vmatprep.subr.mxu0 0.0
  %5198 = vmatpush1.msra.mxu0 0.0
  %5199 = vmatprep.subr.mxu0 0.0
  %5200 = vmatpush1.msra.mxu0 0.0
  %5201 = vmatprep.subr.mxu0 0.0
  %5202 = vmatpush1.msra.mxu0 0.0
  %5203 = vmatprep.subr.mxu0 0.0
  %5204 = vmatpush1.msra.mxu0 0.0
  %5205 = vmatprep.subr.mxu0 0.0
  %5206 = vmatpush1.msra.mxu0 0.0
  %5207 = vmatprep.subr.mxu0 0.0
  %5208 = vmatpush1.msra.mxu0 0.0
  %5209 = vmatprep.subr.mxu0 0.0
  %5210 = vmatpush1.msra.mxu0 0.0
  %5211 = vmatprep.subr.mxu0 0.0
  %5212 = vmatpush1.msra.mxu0 0.0
  %5213 = vmatprep.subr.mxu0 0.0
  %5214 = vmatpush1.msra.mxu0 0.0
  %5215 = vmatprep.subr.mxu0 0.0
  %5216 = vmatpush1.msra.mxu0 0.0
  %5217 = vmatprep.subr.mxu0 0.0
  %5218 = vmatpush1.msra.mxu0 0.0
  %5219 = vmatprep.subr.mxu0 0.0
  %5220 = vmatpush1.msra.mxu0 0.0
  %5221 = vmatprep.subr.mxu0 0.0
  %5222 = vmatpush1.msra.mxu0 0.0
  %5223 = vmatprep.subr.mxu0 0.0
  %5224 = vmatpush1.msra.mxu0 0.0
  %5225 = vmatprep.subr.mxu0 0.0
  %5226 = vmatpush1.msra.mxu0 0.0
  %5227 = vmatprep.subr.mxu0 0.0
  %5228 = vmatpush1.msra.mxu0 0.0
  %5229 = vmatprep.subr.mxu0 0.0
  %5230 = vmatpush1.msra.mxu0 0.0
  %5231 = vmatprep.subr.mxu0 0.0
  %5232 = vmatpush1.msra.mxu0 0.0
  %5233 = vmatprep.subr.mxu0 0.0
  %5234 = vmatpush1.msra.mxu0 0.0
  %5235 = vmatprep.subr.mxu0 0.0
  %5236 = vmatpush1.msra.mxu0 0.0
  %5237 = vmatprep.subr.mxu0 0.0
  %5238 = vmatpush1.msra.mxu0 0.0
  %5239 = vmatprep.subr.mxu0 0.0
  %5240 = vmatpush1.msra.mxu0 0.0
  %5241 = vmatprep.mubr.f32.mxu0 0.0
  %5242 = vmatmul.mubr.f32.gmra.mrb[0].mxu0 %v5151
  %v5243 = vpop.f32.mrb[0].mxu0
  %v5244 = vadd.f32 %v4187, %v5243
  %v5245 = vpop.f32.mrb[0].mxu0
  %5246 = vmatprep.mubr.f32.mxu0 0.0
  %5247 = vmatmul.mubr.f32.gmra.mrb[0].mxu0 %v5154
  %v5248 = vpop.f32.mrb[0].mxu0
  %v5249 = vadd.f32 %v4192, %v5248
  %v5250 = vpop.f32.mrb[0].mxu0
  %5251 = vmatprep.mubr.f32.mxu0 0.0
  %5252 = vmatmul.mubr.f32.gmra.mrb[0].mxu0 %v5157
  %v5253 = vpop.f32.mrb[0].mxu0
  %v5254 = vadd.f32 %v4197, %v5253
  %v5255 = vpop.f32.mrb[0].mxu0
  %5256 = vmatprep.mubr.f32.mxu0 0.0
  %5257 = vmatmul.mubr.f32.gmra.mrb[0].mxu0 %v5160
  %v5258 = vpop.f32.mrb[0].mxu0
  %v5259 = vadd.f32 %v4202, %v5258
  %v5260 = vpop.f32.mrb[0].mxu0
  %5261 = vmatprep.mubr.f32.mxu0 0.0
  %5262 = vmatmul.mubr.f32.gmra.mrb[0].mxu0 %v5163
  %v5263 = vpop.f32.mrb[0].mxu0
  %v5264 = vadd.f32 %v4207, %v5263
  %v5265 = vpop.f32.mrb[0].mxu0
  %5266 = vmatprep.mubr.f32.mxu0 0.0
  %5267 = vmatmul.mubr.f32.gmra.mrb[0].mxu0 %v5166
  %v5268 = vpop.f32.mrb[0].mxu0
  %v5269 = vadd.f32 %v4212, %v5268
  %v5270 = vpop.f32.mrb[0].mxu0
  %5271 = vmatprep.mubr.f32.mxu0 0.0
  %5272 = vmatmul.mubr.f32.gmra.mrb[0].mxu0 %v5169
  %v5273 = vpop.f32.mrb[0].mxu0
  %v5274 = vadd.f32 %v4217, %v5273
  %v5275 = vpop.f32.mrb[0].mxu0
  %5276 = vmatprep.mubr.f32.mxu0 0.0
  %5277 = vmatmul.mubr.f32.gmra.mrb[0].mxu0 %v5172
  %v5278 = vpop.f32.mrb[0].mxu0
  %v5279 = vadd.f32 %v4222, %v5278
  %v5280 = vpop.f32.mrb[0].mxu0
  %5281 = vdwg.mxu0
  %v5283 = vsel %vm4224, %v4112, 0
  %v5286 = vsel %vm4224, %v4113, 0
  %v5289 = vsel %vm4224, %v4114, 0
  %v5292 = vsel %vm4224, %v4115, 0
  %v5295 = vsel %vm4224, %v4116, 0
  %v5298 = vsel %vm4224, %v4117, 0
  %v5301 = vsel %vm4224, %v4118, 0
  %v5304 = vsel %vm4224, %v4119, 0
  %v5307 = vsel %vm4249, %v4040, 0
  %5309 = vmatprep.subr.mxu0 0.0
  %5310 = vmatpush1.msra.mxu0 %v5307
  %5311 = vmatprep.subr.mxu0 0.0
  %5312 = vmatpush1.msra.mxu0 0.0
  %5313 = vmatprep.subr.mxu0 0.0
  %5314 = vmatpush1.msra.mxu0 0.0
  %5315 = vmatprep.subr.mxu0 0.0
  %5316 = vmatpush1.msra.mxu0 0.0
  %5317 = vmatprep.subr.mxu0 0.0
  %5318 = vmatpush1.msra.mxu0 0.0
  %5319 = vmatprep.subr.mxu0 0.0
  %5320 = vmatpush1.msra.mxu0 0.0
  %5321 = vmatprep.subr.mxu0 0.0
  %5322 = vmatpush1.msra.mxu0 0.0
  %5323 = vmatprep.subr.mxu0 0.0
  %5324 = vmatpush1.msra.mxu0 0.0
  %5325 = vmatprep.subr.mxu0 0.0
  %5326 = vmatpush1.msra.mxu0 0.0
  %5327 = vmatprep.subr.mxu0 0.0
  %5328 = vmatpush1.msra.mxu0 0.0
  %5329 = vmatprep.subr.mxu0 0.0
  %5330 = vmatpush1.msra.mxu0 0.0
  %5331 = vmatprep.subr.mxu0 0.0
  %5332 = vmatpush1.msra.mxu0 0.0
  %5333 = vmatprep.subr.mxu0 0.0
  %5334 = vmatpush1.msra.mxu0 0.0
  %5335 = vmatprep.subr.mxu0 0.0
  %5336 = vmatpush1.msra.mxu0 0.0
  %5337 = vmatprep.subr.mxu0 0.0
  %5338 = vmatpush1.msra.mxu0 0.0
  %5339 = vmatprep.subr.mxu0 0.0
  %5340 = vmatpush1.msra.mxu0 0.0
  %5341 = vmatprep.subr.mxu0 0.0
  %5342 = vmatpush1.msra.mxu0 0.0
  %5343 = vmatprep.subr.mxu0 0.0
  %5344 = vmatpush1.msra.mxu0 0.0
  %5345 = vmatprep.subr.mxu0 0.0
  %5346 = vmatpush1.msra.mxu0 0.0
  %5347 = vmatprep.subr.mxu0 0.0
  %5348 = vmatpush1.msra.mxu0 0.0
  %5349 = vmatprep.subr.mxu0 0.0
  %5350 = vmatpush1.msra.mxu0 0.0
  %5351 = vmatprep.subr.mxu0 0.0
  %5352 = vmatpush1.msra.mxu0 0.0
  %5353 = vmatprep.subr.mxu0 0.0
  %5354 = vmatpush1.msra.mxu0 0.0
  %5355 = vmatprep.subr.mxu0 0.0
  %5356 = vmatpush1.msra.mxu0 0.0
  %5357 = vmatprep.subr.mxu0 0.0
  %5358 = vmatpush1.msra.mxu0 0.0
  %5359 = vmatprep.subr.mxu0 0.0
  %5360 = vmatpush1.msra.mxu0 0.0
  %5361 = vmatprep.subr.mxu0 0.0
  %5362 = vmatpush1.msra.mxu0 0.0
  %5363 = vmatprep.subr.mxu0 0.0
  %5364 = vmatpush1.msra.mxu0 0.0
  %5365 = vmatprep.subr.mxu0 0.0
  %5366 = vmatpush1.msra.mxu0 0.0
  %5367 = vmatprep.subr.mxu0 0.0
  %5368 = vmatpush1.msra.mxu0 0.0
  %5369 = vmatprep.subr.mxu0 0.0
  %5370 = vmatpush1.msra.mxu0 0.0
  %5371 = vmatprep.subr.mxu0 0.0
  %5372 = vmatpush1.msra.mxu0 0.0
  %5373 = vmatprep.mubr.f32.mxu0 0.0
  %5374 = vmatmul.mubr.f32.gmra.mrb[0].mxu0 %v5283
  %v5375 = vpop.f32.mrb[0].mxu0
  %v5376 = vadd.f32 %v4187, %v5375
  %v5377 = vpop.f32.mrb[0].mxu0
  %5378 = vmatprep.mubr.f32.mxu0 0.0
  %5379 = vmatmul.mubr.f32.gmra.mrb[0].mxu0 %v5286
  %v5380 = vpop.f32.mrb[0].mxu0
  %v5381 = vadd.f32 %v4192, %v5380
  %v5382 = vpop.f32.mrb[0].mxu0
  %5383 = vmatprep.mubr.f32.mxu0 0.0
  %5384 = vmatmul.mubr.f32.gmra.mrb[0].mxu0 %v5289
  %v5385 = vpop.f32.mrb[0].mxu0
  %v5386 = vadd.f32 %v4197, %v5385
  %v5387 = vpop.f32.mrb[0].mxu0
  %5388 = vmatprep.mubr.f32.mxu0 0.0
  %5389 = vmatmul.mubr.f32.gmra.mrb[0].mxu0 %v5292
  %v5390 = vpop.f32.mrb[0].mxu0
  %v5391 = vadd.f32 %v4202, %v5390
  %v5392 = vpop.f32.mrb[0].mxu0
  %5393 = vmatprep.mubr.f32.mxu0 0.0
  %5394 = vmatmul.mubr.f32.gmra.mrb[0].mxu0 %v5295
  %v5395 = vpop.f32.mrb[0].mxu0
  %v5396 = vadd.f32 %v4207, %v5395
  %v5397 = vpop.f32.mrb[0].mxu0
  %5398 = vmatprep.mubr.f32.mxu0 0.0
  %5399 = vmatmul.mubr.f32.gmra.mrb[0].mxu0 %v5298
  %v5400 = vpop.f32.mrb[0].mxu0
  %v5401 = vadd.f32 %v4212, %v5400
  %v5402 = vpop.f32.mrb[0].mxu0
  %5403 = vmatprep.mubr.f32.mxu0 0.0
  %5404 = vmatmul.mubr.f32.gmra.mrb[0].mxu0 %v5301
  %v5405 = vpop.f32.mrb[0].mxu0
  %v5406 = vadd.f32 %v4217, %v5405
  %v5407 = vpop.f32.mrb[0].mxu0
  %5408 = vmatprep.mubr.f32.mxu0 0.0
  %5409 = vmatmul.mubr.f32.gmra.mrb[0].mxu0 %v5304
  %v5410 = vpop.f32.mrb[0].mxu0
  %v5411 = vadd.f32 %v4222, %v5410
  %v5412 = vpop.f32.mrb[0].mxu0
  %5413 = vdwg.mxu0
  %v5415 = vsel %vm4224, %v4120, 0
  %v5418 = vsel %vm4224, %v4121, 0
  %v5421 = vsel %vm4224, %v4122, 0
  %v5424 = vsel %vm4224, %v4123, 0
  %v5427 = vsel %vm4224, %v4124, 0
  %v5430 = vsel %vm4224, %v4125, 0
  %v5433 = vsel %vm4224, %v4126, 0
  %v5436 = vsel %vm4224, %v4127, 0
  %v5439 = vsel %vm4249, %v4041, 0
  %5441 = vmatprep.subr.mxu0 0.0
  %5442 = vmatpush1.msra.mxu0 %v5439
  %5443 = vmatprep.subr.mxu0 0.0
  %5444 = vmatpush1.msra.mxu0 0.0
  %5445 = vmatprep.subr.mxu0 0.0
  %5446 = vmatpush1.msra.mxu0 0.0
  %5447 = vmatprep.subr.mxu0 0.0
  %5448 = vmatpush1.msra.mxu0 0.0
  %5449 = vmatprep.subr.mxu0 0.0
  %5450 = vmatpush1.msra.mxu0 0.0
  %5451 = vmatprep.subr.mxu0 0.0
  %5452 = vmatpush1.msra.mxu0 0.0
  %5453 = vmatprep.subr.mxu0 0.0
  %5454 = vmatpush1.msra.mxu0 0.0
  %5455 = vmatprep.subr.mxu0 0.0
  %5456 = vmatpush1.msra.mxu0 0.0
  %5457 = vmatprep.subr.mxu0 0.0
  %5458 = vmatpush1.msra.mxu0 0.0
  %5459 = vmatprep.subr.mxu0 0.0
  %5460 = vmatpush1.msra.mxu0 0.0
  %5461 = vmatprep.subr.mxu0 0.0
  %5462 = vmatpush1.msra.mxu0 0.0
  %5463 = vmatprep.subr.mxu0 0.0
  %5464 = vmatpush1.msra.mxu0 0.0
  %5465 = vmatprep.subr.mxu0 0.0
  %5466 = vmatpush1.msra.mxu0 0.0
  %5467 = vmatprep.subr.mxu0 0.0
  %5468 = vmatpush1.msra.mxu0 0.0
  %5469 = vmatprep.subr.mxu0 0.0
  %5470 = vmatpush1.msra.mxu0 0.0
  %5471 = vmatprep.subr.mxu0 0.0
  %5472 = vmatpush1.msra.mxu0 0.0
  %5473 = vmatprep.subr.mxu0 0.0
  %5474 = vmatpush1.msra.mxu0 0.0
  %5475 = vmatprep.subr.mxu0 0.0
  %5476 = vmatpush1.msra.mxu0 0.0
  %5477 = vmatprep.subr.mxu0 0.0
  %5478 = vmatpush1.msra.mxu0 0.0
  %5479 = vmatprep.subr.mxu0 0.0
  %5480 = vmatpush1.msra.mxu0 0.0
  %5481 = vmatprep.subr.mxu0 0.0
  %5482 = vmatpush1.msra.mxu0 0.0
  %5483 = vmatprep.subr.mxu0 0.0
  %5484 = vmatpush1.msra.mxu0 0.0
  %5485 = vmatprep.subr.mxu0 0.0
  %5486 = vmatpush1.msra.mxu0 0.0
  %5487 = vmatprep.subr.mxu0 0.0
  %5488 = vmatpush1.msra.mxu0 0.0
  %5489 = vmatprep.subr.mxu0 0.0
  %5490 = vmatpush1.msra.mxu0 0.0
  %5491 = vmatprep.subr.mxu0 0.0
  %5492 = vmatpush1.msra.mxu0 0.0
  %5493 = vmatprep.subr.mxu0 0.0
  %5494 = vmatpush1.msra.mxu0 0.0
  %5495 = vmatprep.subr.mxu0 0.0
  %5496 = vmatpush1.msra.mxu0 0.0
  %5497 = vmatprep.subr.mxu0 0.0
  %5498 = vmatpush1.msra.mxu0 0.0
  %5499 = vmatprep.subr.mxu0 0.0
  %5500 = vmatpush1.msra.mxu0 0.0
  %5501 = vmatprep.subr.mxu0 0.0
  %5502 = vmatpush1.msra.mxu0 0.0
  %5503 = vmatprep.subr.mxu0 0.0
  %5504 = vmatpush1.msra.mxu0 0.0
  %5505 = vmatprep.mubr.f32.mxu0 0.0
  %5506 = vmatmul.mubr.f32.gmra.mrb[0].mxu0 %v5415
  %v5507 = vpop.f32.mrb[0].mxu0
  %v5508 = vadd.f32 %v4187, %v5507
  %v5509 = vpop.f32.mrb[0].mxu0
  %5510 = vmatprep.mubr.f32.mxu0 0.0
  %5511 = vmatmul.mubr.f32.gmra.mrb[0].mxu0 %v5418
  %v5512 = vpop.f32.mrb[0].mxu0
  %v5513 = vadd.f32 %v4192, %v5512
  %v5514 = vpop.f32.mrb[0].mxu0
  %5515 = vmatprep.mubr.f32.mxu0 0.0
  %5516 = vmatmul.mubr.f32.gmra.mrb[0].mxu0 %v5421
  %v5517 = vpop.f32.mrb[0].mxu0
  %v5518 = vadd.f32 %v4197, %v5517
  %v5519 = vpop.f32.mrb[0].mxu0
  %5520 = vmatprep.mubr.f32.mxu0 0.0
  %5521 = vmatmul.mubr.f32.gmra.mrb[0].mxu0 %v5424
  %v5522 = vpop.f32.mrb[0].mxu0
  %v5523 = vadd.f32 %v4202, %v5522
  %v5524 = vpop.f32.mrb[0].mxu0
  %5525 = vmatprep.mubr.f32.mxu0 0.0
  %5526 = vmatmul.mubr.f32.gmra.mrb[0].mxu0 %v5427
  %v5527 = vpop.f32.mrb[0].mxu0
  %v5528 = vadd.f32 %v4207, %v5527
  %v5529 = vpop.f32.mrb[0].mxu0
  %5530 = vmatprep.mubr.f32.mxu0 0.0
  %5531 = vmatmul.mubr.f32.gmra.mrb[0].mxu0 %v5430
  %v5532 = vpop.f32.mrb[0].mxu0
  %v5533 = vadd.f32 %v4212, %v5532
  %v5534 = vpop.f32.mrb[0].mxu0
  %5535 = vmatprep.mubr.f32.mxu0 0.0
  %5536 = vmatmul.mubr.f32.gmra.mrb[0].mxu0 %v5433
  %v5537 = vpop.f32.mrb[0].mxu0
  %v5538 = vadd.f32 %v4217, %v5537
  %v5539 = vpop.f32.mrb[0].mxu0
  %5540 = vmatprep.mubr.f32.mxu0 0.0
  %5541 = vmatmul.mubr.f32.gmra.mrb[0].mxu0 %v5436
  %v5542 = vpop.f32.mrb[0].mxu0
  %v5543 = vadd.f32 %v4222, %v5542
  %v5544 = vpop.f32.mrb[0].mxu0
  %5545 = vdwg.mxu0
  %v5547 = vsel %vm4224, %v4128, 0
  %v5550 = vsel %vm4224, %v4129, 0
  %v5553 = vsel %vm4224, %v4130, 0
  %v5556 = vsel %vm4224, %v4131, 0
  %v5559 = vsel %vm4224, %v4132, 0
  %v5562 = vsel %vm4224, %v4133, 0
  %v5565 = vsel %vm4224, %v4134, 0
  %v5568 = vsel %vm4224, %v4135, 0
  %v5571 = vsel %vm4249, %v4042, 0
  %5573 = vmatprep.subr.mxu0 0.0
  %5574 = vmatpush1.msra.mxu0 %v5571
  %5575 = vmatprep.subr.mxu0 0.0
  %5576 = vmatpush1.msra.mxu0 0.0
  %5577 = vmatprep.subr.mxu0 0.0
  %5578 = vmatpush1.msra.mxu0 0.0
  %5579 = vmatprep.subr.mxu0 0.0
  %5580 = vmatpush1.msra.mxu0 0.0
  %5581 = vmatprep.subr.mxu0 0.0
  %5582 = vmatpush1.msra.mxu0 0.0
  %5583 = vmatprep.subr.mxu0 0.0
  %5584 = vmatpush1.msra.mxu0 0.0
  %5585 = vmatprep.subr.mxu0 0.0
  %5586 = vmatpush1.msra.mxu0 0.0
  %5587 = vmatprep.subr.mxu0 0.0
  %5588 = vmatpush1.msra.mxu0 0.0
  %5589 = vmatprep.subr.mxu0 0.0
  %5590 = vmatpush1.msra.mxu0 0.0
  %5591 = vmatprep.subr.mxu0 0.0
  %5592 = vmatpush1.msra.mxu0 0.0
  %5593 = vmatprep.subr.mxu0 0.0
  %5594 = vmatpush1.msra.mxu0 0.0
  %5595 = vmatprep.subr.mxu0 0.0
  %5596 = vmatpush1.msra.mxu0 0.0
  %5597 = vmatprep.subr.mxu0 0.0
  %5598 = vmatpush1.msra.mxu0 0.0
  %5599 = vmatprep.subr.mxu0 0.0
  %5600 = vmatpush1.msra.mxu0 0.0
  %5601 = vmatprep.subr.mxu0 0.0
  %5602 = vmatpush1.msra.mxu0 0.0
  %5603 = vmatprep.subr.mxu0 0.0
  %5604 = vmatpush1.msra.mxu0 0.0
  %5605 = vmatprep.subr.mxu0 0.0
  %5606 = vmatpush1.msra.mxu0 0.0
  %5607 = vmatprep.subr.mxu0 0.0
  %5608 = vmatpush1.msra.mxu0 0.0
  %5609 = vmatprep.subr.mxu0 0.0
  %5610 = vmatpush1.msra.mxu0 0.0
  %5611 = vmatprep.subr.mxu0 0.0
  %5612 = vmatpush1.msra.mxu0 0.0
  %5613 = vmatprep.subr.mxu0 0.0
  %5614 = vmatpush1.msra.mxu0 0.0
  %5615 = vmatprep.subr.mxu0 0.0
  %5616 = vmatpush1.msra.mxu0 0.0
  %5617 = vmatprep.subr.mxu0 0.0
  %5618 = vmatpush1.msra.mxu0 0.0
  %5619 = vmatprep.subr.mxu0 0.0
  %5620 = vmatpush1.msra.mxu0 0.0
  %5621 = vmatprep.subr.mxu0 0.0
  %5622 = vmatpush1.msra.mxu0 0.0
  %5623 = vmatprep.subr.mxu0 0.0
  %5624 = vmatpush1.msra.mxu0 0.0
  %5625 = vmatprep.subr.mxu0 0.0
  %5626 = vmatpush1.msra.mxu0 0.0
  %5627 = vmatprep.subr.mxu0 0.0
  %5628 = vmatpush1.msra.mxu0 0.0
  %5629 = vmatprep.subr.mxu0 0.0
  %5630 = vmatpush1.msra.mxu0 0.0
  %5631 = vmatprep.subr.mxu0 0.0
  %5632 = vmatpush1.msra.mxu0 0.0
  %5633 = vmatprep.subr.mxu0 0.0
  %5634 = vmatpush1.msra.mxu0 0.0
  %5635 = vmatprep.subr.mxu0 0.0
  %5636 = vmatpush1.msra.mxu0 0.0
  %5637 = vmatprep.mubr.f32.mxu0 0.0
  %5638 = vmatmul.mubr.f32.gmra.mrb[0].mxu0 %v5547
  %v5639 = vpop.f32.mrb[0].mxu0
  %v5640 = vadd.f32 %v4187, %v5639
  %v5641 = vpop.f32.mrb[0].mxu0
  %5642 = vmatprep.mubr.f32.mxu0 0.0
  %5643 = vmatmul.mubr.f32.gmra.mrb[0].mxu0 %v5550
  %v5644 = vpop.f32.mrb[0].mxu0
  %v5645 = vadd.f32 %v4192, %v5644
  %v5646 = vpop.f32.mrb[0].mxu0
  %5647 = vmatprep.mubr.f32.mxu0 0.0
  %5648 = vmatmul.mubr.f32.gmra.mrb[0].mxu0 %v5553
  %v5649 = vpop.f32.mrb[0].mxu0
  %v5650 = vadd.f32 %v4197, %v5649
  %v5651 = vpop.f32.mrb[0].mxu0
  %5652 = vmatprep.mubr.f32.mxu0 0.0
  %5653 = vmatmul.mubr.f32.gmra.mrb[0].mxu0 %v5556
  %v5654 = vpop.f32.mrb[0].mxu0
  %v5655 = vadd.f32 %v4202, %v5654
  %v5656 = vpop.f32.mrb[0].mxu0
  %5657 = vmatprep.mubr.f32.mxu0 0.0
  %5658 = vmatmul.mubr.f32.gmra.mrb[0].mxu0 %v5559
  %v5659 = vpop.f32.mrb[0].mxu0
  %v5660 = vadd.f32 %v4207, %v5659
  %v5661 = vpop.f32.mrb[0].mxu0
  %5662 = vmatprep.mubr.f32.mxu0 0.0
  %5663 = vmatmul.mubr.f32.gmra.mrb[0].mxu0 %v5562
  %v5664 = vpop.f32.mrb[0].mxu0
  %v5665 = vadd.f32 %v4212, %v5664
  %v5666 = vpop.f32.mrb[0].mxu0
  %5667 = vmatprep.mubr.f32.mxu0 0.0
  %5668 = vmatmul.mubr.f32.gmra.mrb[0].mxu0 %v5565
  %v5669 = vpop.f32.mrb[0].mxu0
  %v5670 = vadd.f32 %v4217, %v5669
  %v5671 = vpop.f32.mrb[0].mxu0
  %5672 = vmatprep.mubr.f32.mxu0 0.0
  %5673 = vmatmul.mubr.f32.gmra.mrb[0].mxu0 %v5568
  %v5674 = vpop.f32.mrb[0].mxu0
  %v5675 = vadd.f32 %v4222, %v5674
  %v5676 = vpop.f32.mrb[0].mxu0
  %5677 = vdwg.mxu0
  %v5679 = vsel %vm4224, %v4136, 0
  %v5682 = vsel %vm4224, %v4137, 0
  %v5685 = vsel %vm4224, %v4138, 0
  %v5688 = vsel %vm4224, %v4139, 0
  %v5691 = vsel %vm4224, %v4140, 0
  %v5694 = vsel %vm4224, %v4141, 0
  %v5697 = vsel %vm4224, %v4142, 0
  %v5700 = vsel %vm4224, %v4143, 0
  %v5703 = vsel %vm4249, %v4043, 0
  %5705 = vmatprep.subr.mxu0 0.0
  %5706 = vmatpush1.msra.mxu0 %v5703
  %5707 = vmatprep.subr.mxu0 0.0
  %5708 = vmatpush1.msra.mxu0 0.0
  %5709 = vmatprep.subr.mxu0 0.0
  %5710 = vmatpush1.msra.mxu0 0.0
  %5711 = vmatprep.subr.mxu0 0.0
  %5712 = vmatpush1.msra.mxu0 0.0
  %5713 = vmatprep.subr.mxu0 0.0
  %5714 = vmatpush1.msra.mxu0 0.0
  %5715 = vmatprep.subr.mxu0 0.0
  %5716 = vmatpush1.msra.mxu0 0.0
  %5717 = vmatprep.subr.mxu0 0.0
  %5718 = vmatpush1.msra.mxu0 0.0
  %5719 = vmatprep.subr.mxu0 0.0
  %5720 = vmatpush1.msra.mxu0 0.0
  %5721 = vmatprep.subr.mxu0 0.0
  %5722 = vmatpush1.msra.mxu0 0.0
  %5723 = vmatprep.subr.mxu0 0.0
  %5724 = vmatpush1.msra.mxu0 0.0
  %5725 = vmatprep.subr.mxu0 0.0
  %5726 = vmatpush1.msra.mxu0 0.0
  %5727 = vmatprep.subr.mxu0 0.0
  %5728 = vmatpush1.msra.mxu0 0.0
  %5729 = vmatprep.subr.mxu0 0.0
  %5730 = vmatpush1.msra.mxu0 0.0
  %5731 = vmatprep.subr.mxu0 0.0
  %5732 = vmatpush1.msra.mxu0 0.0
  %5733 = vmatprep.subr.mxu0 0.0
  %5734 = vmatpush1.msra.mxu0 0.0
  %5735 = vmatprep.subr.mxu0 0.0
  %5736 = vmatpush1.msra.mxu0 0.0
  %5737 = vmatprep.subr.mxu0 0.0
  %5738 = vmatpush1.msra.mxu0 0.0
  %5739 = vmatprep.subr.mxu0 0.0
  %5740 = vmatpush1.msra.mxu0 0.0
  %5741 = vmatprep.subr.mxu0 0.0
  %5742 = vmatpush1.msra.mxu0 0.0
  %5743 = vmatprep.subr.mxu0 0.0
  %5744 = vmatpush1.msra.mxu0 0.0
  %5745 = vmatprep.subr.mxu0 0.0
  %5746 = vmatpush1.msra.mxu0 0.0
  %5747 = vmatprep.subr.mxu0 0.0
  %5748 = vmatpush1.msra.mxu0 0.0
  %5749 = vmatprep.subr.mxu0 0.0
  %5750 = vmatpush1.msra.mxu0 0.0
  %5751 = vmatprep.subr.mxu0 0.0
  %5752 = vmatpush1.msra.mxu0 0.0
  %5753 = vmatprep.subr.mxu0 0.0
  %5754 = vmatpush1.msra.mxu0 0.0
  %5755 = vmatprep.subr.mxu0 0.0
  %5756 = vmatpush1.msra.mxu0 0.0
  %5757 = vmatprep.subr.mxu0 0.0
  %5758 = vmatpush1.msra.mxu0 0.0
  %5759 = vmatprep.subr.mxu0 0.0
  %5760 = vmatpush1.msra.mxu0 0.0
  %5761 = vmatprep.subr.mxu0 0.0
  %5762 = vmatpush1.msra.mxu0 0.0
  %5763 = vmatprep.subr.mxu0 0.0
  %5764 = vmatpush1.msra.mxu0 0.0
  %5765 = vmatprep.subr.mxu0 0.0
  %5766 = vmatpush1.msra.mxu0 0.0
  %5767 = vmatprep.subr.mxu0 0.0
  %5768 = vmatpush1.msra.mxu0 0.0
  %5769 = vmatprep.mubr.f32.mxu0 0.0
  %5770 = vmatmul.mubr.f32.gmra.mrb[0].mxu0 %v5679
  %v5771 = vpop.f32.mrb[0].mxu0
  %v5772 = vadd.f32 %v4187, %v5771
  %v5773 = vpop.f32.mrb[0].mxu0
  %5774 = vmatprep.mubr.f32.mxu0 0.0
  %5775 = vmatmul.mubr.f32.gmra.mrb[0].mxu0 %v5682
  %v5776 = vpop.f32.mrb[0].mxu0
  %v5777 = vadd.f32 %v4192, %v5776
  %v5778 = vpop.f32.mrb[0].mxu0
  %5779 = vmatprep.mubr.f32.mxu0 0.0
  %5780 = vmatmul.mubr.f32.gmra.mrb[0].mxu0 %v5685
  %v5781 = vpop.f32.mrb[0].mxu0
  %v5782 = vadd.f32 %v4197, %v5781
  %v5783 = vpop.f32.mrb[0].mxu0
  %5784 = vmatprep.mubr.f32.mxu0 0.0
  %5785 = vmatmul.mubr.f32.gmra.mrb[0].mxu0 %v5688
  %v5786 = vpop.f32.mrb[0].mxu0
  %v5787 = vadd.f32 %v4202, %v5786
  %v5788 = vpop.f32.mrb[0].mxu0
  %5789 = vmatprep.mubr.f32.mxu0 0.0
  %5790 = vmatmul.mubr.f32.gmra.mrb[0].mxu0 %v5691
  %v5791 = vpop.f32.mrb[0].mxu0
  %v5792 = vadd.f32 %v4207, %v5791
  %v5793 = vpop.f32.mrb[0].mxu0
  %5794 = vmatprep.mubr.f32.mxu0 0.0
  %5795 = vmatmul.mubr.f32.gmra.mrb[0].mxu0 %v5694
  %v5796 = vpop.f32.mrb[0].mxu0
  %v5797 = vadd.f32 %v4212, %v5796
  %v5798 = vpop.f32.mrb[0].mxu0
  %5799 = vmatprep.mubr.f32.mxu0 0.0
  %5800 = vmatmul.mubr.f32.gmra.mrb[0].mxu0 %v5697
  %v5801 = vpop.f32.mrb[0].mxu0
  %v5802 = vadd.f32 %v4217, %v5801
  %v5803 = vpop.f32.mrb[0].mxu0
  %5804 = vmatprep.mubr.f32.mxu0 0.0
  %5805 = vmatmul.mubr.f32.gmra.mrb[0].mxu0 %v5700
  %v5806 = vpop.f32.mrb[0].mxu0
  %v5807 = vadd.f32 %v4222, %v5806
  %v5808 = vpop.f32.mrb[0].mxu0
  %5809 = vdwg.mxu0
  %v5811 = vsel %vm4224, %v4144, 0
  %v5814 = vsel %vm4224, %v4145, 0
  %v5817 = vsel %vm4224, %v4146, 0
  %v5820 = vsel %vm4224, %v4147, 0
  %v5823 = vsel %vm4224, %v4148, 0
  %v5826 = vsel %vm4224, %v4149, 0
  %v5829 = vsel %vm4224, %v4150, 0
  %v5832 = vsel %vm4224, %v4151, 0
  %v5835 = vsel %vm4249, %v4044, 0
  %5837 = vmatprep.subr.mxu0 0.0
  %5838 = vmatpush1.msra.mxu0 %v5835
  %5839 = vmatprep.subr.mxu0 0.0
  %5840 = vmatpush1.msra.mxu0 0.0
  %5841 = vmatprep.subr.mxu0 0.0
  %5842 = vmatpush1.msra.mxu0 0.0
  %5843 = vmatprep.subr.mxu0 0.0
  %5844 = vmatpush1.msra.mxu0 0.0
  %5845 = vmatprep.subr.mxu0 0.0
  %5846 = vmatpush1.msra.mxu0 0.0
  %5847 = vmatprep.subr.mxu0 0.0
  %5848 = vmatpush1.msra.mxu0 0.0
  %5849 = vmatprep.subr.mxu0 0.0
  %5850 = vmatpush1.msra.mxu0 0.0
  %5851 = vmatprep.subr.mxu0 0.0
  %5852 = vmatpush1.msra.mxu0 0.0
  %5853 = vmatprep.subr.mxu0 0.0
  %5854 = vmatpush1.msra.mxu0 0.0
  %5855 = vmatprep.subr.mxu0 0.0
  %5856 = vmatpush1.msra.mxu0 0.0
  %5857 = vmatprep.subr.mxu0 0.0
  %5858 = vmatpush1.msra.mxu0 0.0
  %5859 = vmatprep.subr.mxu0 0.0
  %5860 = vmatpush1.msra.mxu0 0.0
  %5861 = vmatprep.subr.mxu0 0.0
  %5862 = vmatpush1.msra.mxu0 0.0
  %5863 = vmatprep.subr.mxu0 0.0
  %5864 = vmatpush1.msra.mxu0 0.0
  %5865 = vmatprep.subr.mxu0 0.0
  %5866 = vmatpush1.msra.mxu0 0.0
  %5867 = vmatprep.subr.mxu0 0.0
  %5868 = vmatpush1.msra.mxu0 0.0
  %5869 = vmatprep.subr.mxu0 0.0
  %5870 = vmatpush1.msra.mxu0 0.0
  %5871 = vmatprep.subr.mxu0 0.0
  %5872 = vmatpush1.msra.mxu0 0.0
  %5873 = vmatprep.subr.mxu0 0.0
  %5874 = vmatpush1.msra.mxu0 0.0
  %5875 = vmatprep.subr.mxu0 0.0
  %5876 = vmatpush1.msra.mxu0 0.0
  %5877 = vmatprep.subr.mxu0 0.0
  %5878 = vmatpush1.msra.mxu0 0.0
  %5879 = vmatprep.subr.mxu0 0.0
  %5880 = vmatpush1.msra.mxu0 0.0
  %5881 = vmatprep.subr.mxu0 0.0
  %5882 = vmatpush1.msra.mxu0 0.0
  %5883 = vmatprep.subr.mxu0 0.0
  %5884 = vmatpush1.msra.mxu0 0.0
  %5885 = vmatprep.subr.mxu0 0.0
  %5886 = vmatpush1.msra.mxu0 0.0
  %5887 = vmatprep.subr.mxu0 0.0
  %5888 = vmatpush1.msra.mxu0 0.0
  %5889 = vmatprep.subr.mxu0 0.0
  %5890 = vmatpush1.msra.mxu0 0.0
  %5891 = vmatprep.subr.mxu0 0.0
  %5892 = vmatpush1.msra.mxu0 0.0
  %5893 = vmatprep.subr.mxu0 0.0
  %5894 = vmatpush1.msra.mxu0 0.0
  %5895 = vmatprep.subr.mxu0 0.0
  %5896 = vmatpush1.msra.mxu0 0.0
  %5897 = vmatprep.subr.mxu0 0.0
  %5898 = vmatpush1.msra.mxu0 0.0
  %5899 = vmatprep.subr.mxu0 0.0
  %5900 = vmatpush1.msra.mxu0 0.0
  %5901 = vmatprep.mubr.f32.mxu0 0.0
  %5902 = vmatmul.mubr.f32.gmra.mrb[0].mxu0 %v5811
  %v5903 = vpop.f32.mrb[0].mxu0
  %v5904 = vadd.f32 %v4187, %v5903
  %v5905 = vpop.f32.mrb[0].mxu0
  %5906 = vmatprep.mubr.f32.mxu0 0.0
  %5907 = vmatmul.mubr.f32.gmra.mrb[0].mxu0 %v5814
  %v5908 = vpop.f32.mrb[0].mxu0
  %v5909 = vadd.f32 %v4192, %v5908
  %v5910 = vpop.f32.mrb[0].mxu0
  %5911 = vmatprep.mubr.f32.mxu0 0.0
  %5912 = vmatmul.mubr.f32.gmra.mrb[0].mxu0 %v5817
  %v5913 = vpop.f32.mrb[0].mxu0
  %v5914 = vadd.f32 %v4197, %v5913
  %v5915 = vpop.f32.mrb[0].mxu0
  %5916 = vmatprep.mubr.f32.mxu0 0.0
  %5917 = vmatmul.mubr.f32.gmra.mrb[0].mxu0 %v5820
  %v5918 = vpop.f32.mrb[0].mxu0
  %v5919 = vadd.f32 %v4202, %v5918
  %v5920 = vpop.f32.mrb[0].mxu0
  %5921 = vmatprep.mubr.f32.mxu0 0.0
  %5922 = vmatmul.mubr.f32.gmra.mrb[0].mxu0 %v5823
  %v5923 = vpop.f32.mrb[0].mxu0
  %v5924 = vadd.f32 %v4207, %v5923
  %v5925 = vpop.f32.mrb[0].mxu0
  %5926 = vmatprep.mubr.f32.mxu0 0.0
  %5927 = vmatmul.mubr.f32.gmra.mrb[0].mxu0 %v5826
  %v5928 = vpop.f32.mrb[0].mxu0
  %v5929 = vadd.f32 %v4212, %v5928
  %v5930 = vpop.f32.mrb[0].mxu0
  %5931 = vmatprep.mubr.f32.mxu0 0.0
  %5932 = vmatmul.mubr.f32.gmra.mrb[0].mxu0 %v5829
  %v5933 = vpop.f32.mrb[0].mxu0
  %v5934 = vadd.f32 %v4217, %v5933
  %v5935 = vpop.f32.mrb[0].mxu0
  %5936 = vmatprep.mubr.f32.mxu0 0.0
  %5937 = vmatmul.mubr.f32.gmra.mrb[0].mxu0 %v5832
  %v5938 = vpop.f32.mrb[0].mxu0
  %v5939 = vadd.f32 %v4222, %v5938
  %v5940 = vpop.f32.mrb[0].mxu0
  %5941 = vdwg.mxu0
  %v5943 = vsel %vm4224, %v4152, 0
  %v5946 = vsel %vm4224, %v4153, 0
  %v5949 = vsel %vm4224, %v4154, 0
  %v5952 = vsel %vm4224, %v4155, 0
  %v5955 = vsel %vm4224, %v4156, 0
  %v5958 = vsel %vm4224, %v4157, 0
  %v5961 = vsel %vm4224, %v4158, 0
  %v5964 = vsel %vm4224, %v4159, 0
  %v5967 = vsel %vm4249, %v4045, 0
  %5969 = vmatprep.subr.mxu0 0.0
  %5970 = vmatpush1.msra.mxu0 %v5967
  %5971 = vmatprep.subr.mxu0 0.0
  %5972 = vmatpush1.msra.mxu0 0.0
  %5973 = vmatprep.subr.mxu0 0.0
  %5974 = vmatpush1.msra.mxu0 0.0
  %5975 = vmatprep.subr.mxu0 0.0
  %5976 = vmatpush1.msra.mxu0 0.0
  %5977 = vmatprep.subr.mxu0 0.0
  %5978 = vmatpush1.msra.mxu0 0.0
  %5979 = vmatprep.subr.mxu0 0.0
  %5980 = vmatpush1.msra.mxu0 0.0
  %5981 = vmatprep.subr.mxu0 0.0
  %5982 = vmatpush1.msra.mxu0 0.0
  %5983 = vmatprep.subr.mxu0 0.0
  %5984 = vmatpush1.msra.mxu0 0.0
  %5985 = vmatprep.subr.mxu0 0.0
  %5986 = vmatpush1.msra.mxu0 0.0
  %5987 = vmatprep.subr.mxu0 0.0
  %5988 = vmatpush1.msra.mxu0 0.0
  %5989 = vmatprep.subr.mxu0 0.0
  %5990 = vmatpush1.msra.mxu0 0.0
  %5991 = vmatprep.subr.mxu0 0.0
  %5992 = vmatpush1.msra.mxu0 0.0
  %5993 = vmatprep.subr.mxu0 0.0
  %5994 = vmatpush1.msra.mxu0 0.0
  %5995 = vmatprep.subr.mxu0 0.0
  %5996 = vmatpush1.msra.mxu0 0.0
  %5997 = vmatprep.subr.mxu0 0.0
  %5998 = vmatpush1.msra.mxu0 0.0
  %5999 = vmatprep.subr.mxu0 0.0
  %6000 = vmatpush1.msra.mxu0 0.0
  %6001 = vmatprep.subr.mxu0 0.0
  %6002 = vmatpush1.msra.mxu0 0.0
  %6003 = vmatprep.subr.mxu0 0.0
  %6004 = vmatpush1.msra.mxu0 0.0
  %6005 = vmatprep.subr.mxu0 0.0
  %6006 = vmatpush1.msra.mxu0 0.0
  %6007 = vmatprep.subr.mxu0 0.0
  %6008 = vmatpush1.msra.mxu0 0.0
  %6009 = vmatprep.subr.mxu0 0.0
  %6010 = vmatpush1.msra.mxu0 0.0
  %6011 = vmatprep.subr.mxu0 0.0
  %6012 = vmatpush1.msra.mxu0 0.0
  %6013 = vmatprep.subr.mxu0 0.0
  %6014 = vmatpush1.msra.mxu0 0.0
  %6015 = vmatprep.subr.mxu0 0.0
  %6016 = vmatpush1.msra.mxu0 0.0
  %6017 = vmatprep.subr.mxu0 0.0
  %6018 = vmatpush1.msra.mxu0 0.0
  %6019 = vmatprep.subr.mxu0 0.0
  %6020 = vmatpush1.msra.mxu0 0.0
  %6021 = vmatprep.subr.mxu0 0.0
  %6022 = vmatpush1.msra.mxu0 0.0
  %6023 = vmatprep.subr.mxu0 0.0
  %6024 = vmatpush1.msra.mxu0 0.0
  %6025 = vmatprep.subr.mxu0 0.0
  %6026 = vmatpush1.msra.mxu0 0.0
  %6027 = vmatprep.subr.mxu0 0.0
  %6028 = vmatpush1.msra.mxu0 0.0
  %6029 = vmatprep.subr.mxu0 0.0
  %6030 = vmatpush1.msra.mxu0 0.0
  %6031 = vmatprep.subr.mxu0 0.0
  %6032 = vmatpush1.msra.mxu0 0.0
  %6033 = vmatprep.mubr.f32.mxu0 0.0
  %6034 = vmatmul.mubr.f32.gmra.mrb[0].mxu0 %v5943
  %v6035 = vpop.f32.mrb[0].mxu0
  %v6036 = vadd.f32 %v4187, %v6035
  %v6037 = vpop.f32.mrb[0].mxu0
  %6038 = vmatprep.mubr.f32.mxu0 0.0
  %6039 = vmatmul.mubr.f32.gmra.mrb[0].mxu0 %v5946
  %v6040 = vpop.f32.mrb[0].mxu0
  %v6041 = vadd.f32 %v4192, %v6040
  %v6042 = vpop.f32.mrb[0].mxu0
  %6043 = vmatprep.mubr.f32.mxu0 0.0
  %6044 = vmatmul.mubr.f32.gmra.mrb[0].mxu0 %v5949
  %v6045 = vpop.f32.mrb[0].mxu0
  %v6046 = vadd.f32 %v4197, %v6045
  %v6047 = vpop.f32.mrb[0].mxu0
  %6048 = vmatprep.mubr.f32.mxu0 0.0
  %6049 = vmatmul.mubr.f32.gmra.mrb[0].mxu0 %v5952
  %v6050 = vpop.f32.mrb[0].mxu0
  %v6051 = vadd.f32 %v4202, %v6050
  %v6052 = vpop.f32.mrb[0].mxu0
  %6053 = vmatprep.mubr.f32.mxu0 0.0
  %6054 = vmatmul.mubr.f32.gmra.mrb[0].mxu0 %v5955
  %v6055 = vpop.f32.mrb[0].mxu0
  %v6056 = vadd.f32 %v4207, %v6055
  %v6057 = vpop.f32.mrb[0].mxu0
  %6058 = vmatprep.mubr.f32.mxu0 0.0
  %6059 = vmatmul.mubr.f32.gmra.mrb[0].mxu0 %v5958
  %v6060 = vpop.f32.mrb[0].mxu0
  %v6061 = vadd.f32 %v4212, %v6060
  %v6062 = vpop.f32.mrb[0].mxu0
  %6063 = vmatprep.mubr.f32.mxu0 0.0
  %6064 = vmatmul.mubr.f32.gmra.mrb[0].mxu0 %v5961
  %v6065 = vpop.f32.mrb[0].mxu0
  %v6066 = vadd.f32 %v4217, %v6065
  %v6067 = vpop.f32.mrb[0].mxu0
  %6068 = vmatprep.mubr.f32.mxu0 0.0
  %6069 = vmatmul.mubr.f32.gmra.mrb[0].mxu0 %v5964
  %v6070 = vpop.f32.mrb[0].mxu0
  %v6071 = vadd.f32 %v4222, %v6070
  %v6072 = vpop.f32.mrb[0].mxu0
  %6073 = vdwg.mxu0
  %v6075 = vsel %vm4224, %v4160, 0
  %v6078 = vsel %vm4224, %v4161, 0
  %v6081 = vsel %vm4224, %v4162, 0
  %v6084 = vsel %vm4224, %v4163, 0
  %v6087 = vsel %vm4224, %v4164, 0
  %v6090 = vsel %vm4224, %v4165, 0
  %v6093 = vsel %vm4224, %v4166, 0
  %v6096 = vsel %vm4224, %v4167, 0
  %v6099 = vsel %vm4249, %v4046, 0
  %6101 = vmatprep.subr.mxu0 0.0
  %6102 = vmatpush1.msra.mxu0 %v6099
  %6103 = vmatprep.subr.mxu0 0.0
  %6104 = vmatpush1.msra.mxu0 0.0
  %6105 = vmatprep.subr.mxu0 0.0
  %6106 = vmatpush1.msra.mxu0 0.0
  %6107 = vmatprep.subr.mxu0 0.0
  %6108 = vmatpush1.msra.mxu0 0.0
  %6109 = vmatprep.subr.mxu0 0.0
  %6110 = vmatpush1.msra.mxu0 0.0
  %6111 = vmatprep.subr.mxu0 0.0
  %6112 = vmatpush1.msra.mxu0 0.0
  %6113 = vmatprep.subr.mxu0 0.0
  %6114 = vmatpush1.msra.mxu0 0.0
  %6115 = vmatprep.subr.mxu0 0.0
  %6116 = vmatpush1.msra.mxu0 0.0
  %6117 = vmatprep.subr.mxu0 0.0
  %6118 = vmatpush1.msra.mxu0 0.0
  %6119 = vmatprep.subr.mxu0 0.0
  %6120 = vmatpush1.msra.mxu0 0.0
  %6121 = vmatprep.subr.mxu0 0.0
  %6122 = vmatpush1.msra.mxu0 0.0
  %6123 = vmatprep.subr.mxu0 0.0
  %6124 = vmatpush1.msra.mxu0 0.0
  %6125 = vmatprep.subr.mxu0 0.0
  %6126 = vmatpush1.msra.mxu0 0.0
  %6127 = vmatprep.subr.mxu0 0.0
  %6128 = vmatpush1.msra.mxu0 0.0
  %6129 = vmatprep.subr.mxu0 0.0
  %6130 = vmatpush1.msra.mxu0 0.0
  %6131 = vmatprep.subr.mxu0 0.0
  %6132 = vmatpush1.msra.mxu0 0.0
  %6133 = vmatprep.subr.mxu0 0.0
  %6134 = vmatpush1.msra.mxu0 0.0
  %6135 = vmatprep.subr.mxu0 0.0
  %6136 = vmatpush1.msra.mxu0 0.0
  %6137 = vmatprep.subr.mxu0 0.0
  %6138 = vmatpush1.msra.mxu0 0.0
  %6139 = vmatprep.subr.mxu0 0.0
  %6140 = vmatpush1.msra.mxu0 0.0
  %6141 = vmatprep.subr.mxu0 0.0
  %6142 = vmatpush1.msra.mxu0 0.0
  %6143 = vmatprep.subr.mxu0 0.0
  %6144 = vmatpush1.msra.mxu0 0.0
  %6145 = vmatprep.subr.mxu0 0.0
  %6146 = vmatpush1.msra.mxu0 0.0
  %6147 = vmatprep.subr.mxu0 0.0
  %6148 = vmatpush1.msra.mxu0 0.0
  %6149 = vmatprep.subr.mxu0 0.0
  %6150 = vmatpush1.msra.mxu0 0.0
  %6151 = vmatprep.subr.mxu0 0.0
  %6152 = vmatpush1.msra.mxu0 0.0
  %6153 = vmatprep.subr.mxu0 0.0
  %6154 = vmatpush1.msra.mxu0 0.0
  %6155 = vmatprep.subr.mxu0 0.0
  %6156 = vmatpush1.msra.mxu0 0.0
  %6157 = vmatprep.subr.mxu0 0.0
  %6158 = vmatpush1.msra.mxu0 0.0
  %6159 = vmatprep.subr.mxu0 0.0
  %6160 = vmatpush1.msra.mxu0 0.0
  %6161 = vmatprep.subr.mxu0 0.0
  %6162 = vmatpush1.msra.mxu0 0.0
  %6163 = vmatprep.subr.mxu0 0.0
  %6164 = vmatpush1.msra.mxu0 0.0
  %6165 = vmatprep.mubr.f32.mxu0 0.0
  %6166 = vmatmul.mubr.f32.gmra.mrb[0].mxu0 %v6075
  %v6167 = vpop.f32.mrb[0].mxu0
  %v6168 = vadd.f32 %v4187, %v6167
  %v6169 = vpop.f32.mrb[0].mxu0
  %6170 = vmatprep.mubr.f32.mxu0 0.0
  %6171 = vmatmul.mubr.f32.gmra.mrb[0].mxu0 %v6078
  %v6172 = vpop.f32.mrb[0].mxu0
  %v6173 = vadd.f32 %v4192, %v6172
  %v6174 = vpop.f32.mrb[0].mxu0
  %6175 = vmatprep.mubr.f32.mxu0 0.0
  %6176 = vmatmul.mubr.f32.gmra.mrb[0].mxu0 %v6081
  %v6177 = vpop.f32.mrb[0].mxu0
  %v6178 = vadd.f32 %v4197, %v6177
  %v6179 = vpop.f32.mrb[0].mxu0
  %6180 = vmatprep.mubr.f32.mxu0 0.0
  %6181 = vmatmul.mubr.f32.gmra.mrb[0].mxu0 %v6084
  %v6182 = vpop.f32.mrb[0].mxu0
  %v6183 = vadd.f32 %v4202, %v6182
  %v6184 = vpop.f32.mrb[0].mxu0
  %6185 = vmatprep.mubr.f32.mxu0 0.0
  %6186 = vmatmul.mubr.f32.gmra.mrb[0].mxu0 %v6087
  %v6187 = vpop.f32.mrb[0].mxu0
  %v6188 = vadd.f32 %v4207, %v6187
  %v6189 = vpop.f32.mrb[0].mxu0
  %6190 = vmatprep.mubr.f32.mxu0 0.0
  %6191 = vmatmul.mubr.f32.gmra.mrb[0].mxu0 %v6090
  %v6192 = vpop.f32.mrb[0].mxu0
  %v6193 = vadd.f32 %v4212, %v6192
  %v6194 = vpop.f32.mrb[0].mxu0
  %6195 = vmatprep.mubr.f32.mxu0 0.0
  %6196 = vmatmul.mubr.f32.gmra.mrb[0].mxu0 %v6093
  %v6197 = vpop.f32.mrb[0].mxu0
  %v6198 = vadd.f32 %v4217, %v6197
  %v6199 = vpop.f32.mrb[0].mxu0
  %6200 = vmatprep.mubr.f32.mxu0 0.0
  %6201 = vmatmul.mubr.f32.gmra.mrb[0].mxu0 %v6096
  %v6202 = vpop.f32.mrb[0].mxu0
  %v6203 = vadd.f32 %v4222, %v6202
  %v6204 = vpop.f32.mrb[0].mxu0
  %6205 = vdwg.mxu0
  %v6207 = vsel %vm4224, %v4168, 0
  %v6210 = vsel %vm4224, %v4169, 0
  %v6213 = vsel %vm4224, %v4170, 0
  %v6216 = vsel %vm4224, %v4171, 0
  %v6219 = vsel %vm4224, %v4172, 0
  %v6222 = vsel %vm4224, %v4173, 0
  %v6225 = vsel %vm4224, %v4174, 0
  %v6228 = vsel %vm4224, %v4175, 0
  %v6231 = vsel %vm4249, %v4047, 0
  %6233 = vmatprep.subr.mxu0 0.0
  %6234 = vmatpush1.msra.mxu0 %v6231
  %6235 = vmatprep.subr.mxu0 0.0
  %6236 = vmatpush1.msra.mxu0 0.0
  %6237 = vmatprep.subr.mxu0 0.0
  %6238 = vmatpush1.msra.mxu0 0.0
  %6239 = vmatprep.subr.mxu0 0.0
  %6240 = vmatpush1.msra.mxu0 0.0
  %6241 = vmatprep.subr.mxu0 0.0
  %6242 = vmatpush1.msra.mxu0 0.0
  %6243 = vmatprep.subr.mxu0 0.0
  %6244 = vmatpush1.msra.mxu0 0.0
  %6245 = vmatprep.subr.mxu0 0.0
  %6246 = vmatpush1.msra.mxu0 0.0
  %6247 = vmatprep.subr.mxu0 0.0
  %6248 = vmatpush1.msra.mxu0 0.0
  %6249 = vmatprep.subr.mxu0 0.0
  %6250 = vmatpush1.msra.mxu0 0.0
  %6251 = vmatprep.subr.mxu0 0.0
  %6252 = vmatpush1.msra.mxu0 0.0
  %6253 = vmatprep.subr.mxu0 0.0
  %6254 = vmatpush1.msra.mxu0 0.0
  %6255 = vmatprep.subr.mxu0 0.0
  %6256 = vmatpush1.msra.mxu0 0.0
  %6257 = vmatprep.subr.mxu0 0.0
  %6258 = vmatpush1.msra.mxu0 0.0
  %6259 = vmatprep.subr.mxu0 0.0
  %6260 = vmatpush1.msra.mxu0 0.0
  %6261 = vmatprep.subr.mxu0 0.0
  %6262 = vmatpush1.msra.mxu0 0.0
  %6263 = vmatprep.subr.mxu0 0.0
  %6264 = vmatpush1.msra.mxu0 0.0
  %6265 = vmatprep.subr.mxu0 0.0
  %6266 = vmatpush1.msra.mxu0 0.0
  %6267 = vmatprep.subr.mxu0 0.0
  %6268 = vmatpush1.msra.mxu0 0.0
  %6269 = vmatprep.subr.mxu0 0.0
  %6270 = vmatpush1.msra.mxu0 0.0
  %6271 = vmatprep.subr.mxu0 0.0
  %6272 = vmatpush1.msra.mxu0 0.0
  %6273 = vmatprep.subr.mxu0 0.0
  %6274 = vmatpush1.msra.mxu0 0.0
  %6275 = vmatprep.subr.mxu0 0.0
  %6276 = vmatpush1.msra.mxu0 0.0
  %6277 = vmatprep.subr.mxu0 0.0
  %6278 = vmatpush1.msra.mxu0 0.0
  %6279 = vmatprep.subr.mxu0 0.0
  %6280 = vmatpush1.msra.mxu0 0.0
  %6281 = vmatprep.subr.mxu0 0.0
  %6282 = vmatpush1.msra.mxu0 0.0
  %6283 = vmatprep.subr.mxu0 0.0
  %6284 = vmatpush1.msra.mxu0 0.0
  %6285 = vmatprep.subr.mxu0 0.0
  %6286 = vmatpush1.msra.mxu0 0.0
  %6287 = vmatprep.subr.mxu0 0.0
  %6288 = vmatpush1.msra.mxu0 0.0
  %6289 = vmatprep.subr.mxu0 0.0
  %6290 = vmatpush1.msra.mxu0 0.0
  %6291 = vmatprep.subr.mxu0 0.0
  %6292 = vmatpush1.msra.mxu0 0.0
  %6293 = vmatprep.subr.mxu0 0.0
  %6294 = vmatpush1.msra.mxu0 0.0
  %6295 = vmatprep.subr.mxu0 0.0
  %6296 = vmatpush1.msra.mxu0 0.0
  %6297 = vmatprep.mubr.f32.mxu0 0.0
  %6298 = vmatmul.mubr.f32.gmra.mrb[0].mxu0 %v6207
  %v6299 = vpop.f32.mrb[0].mxu0
  %v6300 = vadd.f32 %v4187, %v6299
  %v6301 = vpop.f32.mrb[0].mxu0
  %6302 = vmatprep.mubr.f32.mxu0 0.0
  %6303 = vmatmul.mubr.f32.gmra.mrb[0].mxu0 %v6210
  %v6304 = vpop.f32.mrb[0].mxu0
  %v6305 = vadd.f32 %v4192, %v6304
  %v6306 = vpop.f32.mrb[0].mxu0
  %6307 = vmatprep.mubr.f32.mxu0 0.0
  %6308 = vmatmul.mubr.f32.gmra.mrb[0].mxu0 %v6213
  %v6309 = vpop.f32.mrb[0].mxu0
  %v6310 = vadd.f32 %v4197, %v6309
  %v6311 = vpop.f32.mrb[0].mxu0
  %6312 = vmatprep.mubr.f32.mxu0 0.0
  %6313 = vmatmul.mubr.f32.gmra.mrb[0].mxu0 %v6216
  %v6314 = vpop.f32.mrb[0].mxu0
  %v6315 = vadd.f32 %v4202, %v6314
  %v6316 = vpop.f32.mrb[0].mxu0
  %6317 = vmatprep.mubr.f32.mxu0 0.0
  %6318 = vmatmul.mubr.f32.gmra.mrb[0].mxu0 %v6219
  %v6319 = vpop.f32.mrb[0].mxu0
  %v6320 = vadd.f32 %v4207, %v6319
  %v6321 = vpop.f32.mrb[0].mxu0
  %6322 = vmatprep.mubr.f32.mxu0 0.0
  %6323 = vmatmul.mubr.f32.gmra.mrb[0].mxu0 %v6222
  %v6324 = vpop.f32.mrb[0].mxu0
  %v6325 = vadd.f32 %v4212, %v6324
  %v6326 = vpop.f32.mrb[0].mxu0
  %6327 = vmatprep.mubr.f32.mxu0 0.0
  %6328 = vmatmul.mubr.f32.gmra.mrb[0].mxu0 %v6225
  %v6329 = vpop.f32.mrb[0].mxu0
  %v6330 = vadd.f32 %v4217, %v6329
  %v6331 = vpop.f32.mrb[0].mxu0
  %6332 = vmatprep.mubr.f32.mxu0 0.0
  %6333 = vmatmul.mubr.f32.gmra.mrb[0].mxu0 %v6228
  %v6334 = vpop.f32.mrb[0].mxu0
  %v6335 = vadd.f32 %v4222, %v6334
  %v6336 = vpop.f32.mrb[0].mxu0
  %6337 = vdwg.mxu0
  %6338 = vst.msk [vmem:[%s5] sm:$0xff] %vm1976, %v4320
  %6339 = vst.msk [vmem:[%s5 + $0x8] sm:$0xff] %vm1976, %v4325
  %6340 = vst.msk [vmem:[%s5 + $0x10] sm:$0xff] %vm1976, %v4330
  %6341 = vst.msk [vmem:[%s5 + $0x18] sm:$0xff] %vm1976, %v4335
  %6342 = vst.msk [vmem:[%s5 + $0x20] sm:$0xff] %vm1976, %v4340
  %6343 = vst.msk [vmem:[%s5 + $0x28] sm:$0xff] %vm1976, %v4345
  %6344 = vst.msk [vmem:[%s5 + $0x30] sm:$0xff] %vm1976, %v4350
  %6345 = vst.msk [vmem:[%s5 + $0x38] sm:$0xff] %vm1976, %v4355
  %6346 = vst.msk [vmem:[%s5 + $0x40] sm:$0xff] %vm1976, %v4452
  %6347 = vst.msk [vmem:[%s5 + $0x48] sm:$0xff] %vm1976, %v4457
  %6348 = vst.msk [vmem:[%s5 + $0x50] sm:$0xff] %vm1976, %v4462
  %6349 = vst.msk [vmem:[%s5 + $0x58] sm:$0xff] %vm1976, %v4467
  %6350 = vst.msk [vmem:[%s5 + $0x60] sm:$0xff] %vm1976, %v4472
  %6351 = vst.msk [vmem:[%s5 + $0x68] sm:$0xff] %vm1976, %v4477
  %6352 = vst.msk [vmem:[%s5 + $0x70] sm:$0xff] %vm1976, %v4482
  %6353 = vst.msk [vmem:[%s5 + $0x78] sm:$0xff] %vm1976, %v4487
  %6354 = vst.msk [vmem:[%s5 + $0x80] sm:$0xff] %vm1976, %v4584
  %6355 = vst.msk [vmem:[%s5 + $0x88] sm:$0xff] %vm1976, %v4589
  %6356 = vst.msk [vmem:[%s5 + $0x90] sm:$0xff] %vm1976, %v4594
  %6357 = vst.msk [vmem:[%s5 + $0x98] sm:$0xff] %vm1976, %v4599
  %6358 = vst.msk [vmem:[%s5 + $0xa0] sm:$0xff] %vm1976, %v4604
  %6359 = vst.msk [vmem:[%s5 + $0xa8] sm:$0xff] %vm1976, %v4609
  %6360 = vst.msk [vmem:[%s5 + $0xb0] sm:$0xff] %vm1976, %v4614
  %6361 = vst.msk [vmem:[%s5 + $0xb8] sm:$0xff] %vm1976, %v4619
  %6362 = vst.msk [vmem:[%s5 + $0xc0] sm:$0xff] %vm1976, %v4716
  %6363 = vst.msk [vmem:[%s5 + $0xc8] sm:$0xff] %vm1976, %v4721
  %6364 = vst.msk [vmem:[%s5 + $0xd0] sm:$0xff] %vm1976, %v4726
  %6365 = vst.msk [vmem:[%s5 + $0xd8] sm:$0xff] %vm1976, %v4731
  %6366 = vst.msk [vmem:[%s5 + $0xe0] sm:$0xff] %vm1976, %v4736
  %6367 = vst.msk [vmem:[%s5 + $0xe8] sm:$0xff] %vm1976, %v4741
  %6368 = vst.msk [vmem:[%s5 + $0xf0] sm:$0xff] %vm1976, %v4746
  %6369 = vst.msk [vmem:[%s5 + $0xf8] sm:$0xff] %vm1976, %v4751
  %6370 = vst.msk [vmem:[%s5 + $0x100] sm:$0xff] %vm1976, %v4848
  %6371 = vst.msk [vmem:[%s5 + $0x108] sm:$0xff] %vm1976, %v4853
  %6372 = vst.msk [vmem:[%s5 + $0x110] sm:$0xff] %vm1976, %v4858
  %6373 = vst.msk [vmem:[%s5 + $0x118] sm:$0xff] %vm1976, %v4863
  %6374 = vst.msk [vmem:[%s5 + $0x120] sm:$0xff] %vm1976, %v4868
  %6375 = vst.msk [vmem:[%s5 + $0x128] sm:$0xff] %vm1976, %v4873
  %6376 = vst.msk [vmem:[%s5 + $0x130] sm:$0xff] %vm1976, %v4878
  %6377 = vst.msk [vmem:[%s5 + $0x138] sm:$0xff] %vm1976, %v4883
  %6378 = vst.msk [vmem:[%s5 + $0x140] sm:$0xff] %vm1976, %v4980
  %6379 = vst.msk [vmem:[%s5 + $0x148] sm:$0xff] %vm1976, %v4985
  %6380 = vst.msk [vmem:[%s5 + $0x150] sm:$0xff] %vm1976, %v4990
  %6381 = vst.msk [vmem:[%s5 + $0x158] sm:$0xff] %vm1976, %v4995
  %6382 = vst.msk [vmem:[%s5 + $0x160] sm:$0xff] %vm1976, %v5000
  %6383 = vst.msk [vmem:[%s5 + $0x168] sm:$0xff] %vm1976, %v5005
  %6384 = vst.msk [vmem:[%s5 + $0x170] sm:$0xff] %vm1976, %v5010
  %6385 = vst.msk [vmem:[%s5 + $0x178] sm:$0xff] %vm1976, %v5015
  %6386 = vst.msk [vmem:[%s5 + $0x180] sm:$0xff] %vm1976, %v5112
  %6387 = vst.msk [vmem:[%s5 + $0x188] sm:$0xff] %vm1976, %v5117
  %6388 = vst.msk [vmem:[%s5 + $0x190] sm:$0xff] %vm1976, %v5122
  %6389 = vst.msk [vmem:[%s5 + $0x198] sm:$0xff] %vm1976, %v5127
  %6390 = vst.msk [vmem:[%s5 + $0x1a0] sm:$0xff] %vm1976, %v5132
  %6391 = vst.msk [vmem:[%s5 + $0x1a8] sm:$0xff] %vm1976, %v5137
  %6392 = vst.msk [vmem:[%s5 + $0x1b0] sm:$0xff] %vm1976, %v5142
  %6393 = vst.msk [vmem:[%s5 + $0x1b8] sm:$0xff] %vm1976, %v5147
  %6394 = vst.msk [vmem:[%s5 + $0x1c0] sm:$0xff] %vm1976, %v5244
  %6395 = vst.msk [vmem:[%s5 + $0x1c8] sm:$0xff] %vm1976, %v5249
  %6396 = vst.msk [vmem:[%s5 + $0x1d0] sm:$0xff] %vm1976, %v5254
  %6397 = vst.msk [vmem:[%s5 + $0x1d8] sm:$0xff] %vm1976, %v5259
  %6398 = vst.msk [vmem:[%s5 + $0x1e0] sm:$0xff] %vm1976, %v5264
  %6399 = vst.msk [vmem:[%s5 + $0x1e8] sm:$0xff] %vm1976, %v5269
  %6400 = vst.msk [vmem:[%s5 + $0x1f0] sm:$0xff] %vm1976, %v5274
  %6401 = vst.msk [vmem:[%s5 + $0x1f8] sm:$0xff] %vm1976, %v5279
  %6402 = vst.msk [vmem:[%s5 + $0x200] sm:$0xff] %vm1976, %v5376
  %6403 = vst.msk [vmem:[%s5 + $0x208] sm:$0xff] %vm1976, %v5381
  %6404 = vst.msk [vmem:[%s5 + $0x210] sm:$0xff] %vm1976, %v5386
  %6405 = vst.msk [vmem:[%s5 + $0x218] sm:$0xff] %vm1976, %v5391
  %6406 = vst.msk [vmem:[%s5 + $0x220] sm:$0xff] %vm1976, %v5396
  %6407 = vst.msk [vmem:[%s5 + $0x228] sm:$0xff] %vm1976, %v5401
  %6408 = vst.msk [vmem:[%s5 + $0x230] sm:$0xff] %vm1976, %v5406
  %6409 = vst.msk [vmem:[%s5 + $0x238] sm:$0xff] %vm1976, %v5411
  %6410 = vst.msk [vmem:[%s5 + $0x240] sm:$0xff] %vm1976, %v5508
  %6411 = vst.msk [vmem:[%s5 + $0x248] sm:$0xff] %vm1976, %v5513
  %6412 = vst.msk [vmem:[%s5 + $0x250] sm:$0xff] %vm1976, %v5518
  %6413 = vst.msk [vmem:[%s5 + $0x258] sm:$0xff] %vm1976, %v5523
  %6414 = vst.msk [vmem:[%s5 + $0x260] sm:$0xff] %vm1976, %v5528
  %6415 = vst.msk [vmem:[%s5 + $0x268] sm:$0xff] %vm1976, %v5533
  %6416 = vst.msk [vmem:[%s5 + $0x270] sm:$0xff] %vm1976, %v5538
  %6417 = vst.msk [vmem:[%s5 + $0x278] sm:$0xff] %vm1976, %v5543
  %6418 = vst.msk [vmem:[%s5 + $0x280] sm:$0xff] %vm1976, %v5640
  %6419 = vst.msk [vmem:[%s5 + $0x288] sm:$0xff] %vm1976, %v5645
  %6420 = vst.msk [vmem:[%s5 + $0x290] sm:$0xff] %vm1976, %v5650
  %6421 = vst.msk [vmem:[%s5 + $0x298] sm:$0xff] %vm1976, %v5655
  %6422 = vst.msk [vmem:[%s5 + $0x2a0] sm:$0xff] %vm1976, %v5660
  %6423 = vst.msk [vmem:[%s5 + $0x2a8] sm:$0xff] %vm1976, %v5665
  %6424 = vst.msk [vmem:[%s5 + $0x2b0] sm:$0xff] %vm1976, %v5670
  %6425 = vst.msk [vmem:[%s5 + $0x2b8] sm:$0xff] %vm1976, %v5675
  %6426 = vst.msk [vmem:[%s5 + $0x2c0] sm:$0xff] %vm1976, %v5772
  %6427 = vst.msk [vmem:[%s5 + $0x2c8] sm:$0xff] %vm1976, %v5777
  %6428 = vst.msk [vmem:[%s5 + $0x2d0] sm:$0xff] %vm1976, %v5782
  %6429 = vst.msk [vmem:[%s5 + $0x2d8] sm:$0xff] %vm1976, %v5787
  %6430 = vst.msk [vmem:[%s5 + $0x2e0] sm:$0xff] %vm1976, %v5792
  %6431 = vst.msk [vmem:[%s5 + $0x2e8] sm:$0xff] %vm1976, %v5797
  %6432 = vst.msk [vmem:[%s5 + $0x2f0] sm:$0xff] %vm1976, %v5802
  %6433 = vst.msk [vmem:[%s5 + $0x2f8] sm:$0xff] %vm1976, %v5807
  %6434 = vst.msk [vmem:[%s5 + $0x300] sm:$0xff] %vm1976, %v5904
  %6435 = vst.msk [vmem:[%s5 + $0x308] sm:$0xff] %vm1976, %v5909
  %6436 = vst.msk [vmem:[%s5 + $0x310] sm:$0xff] %vm1976, %v5914
  %6437 = vst.msk [vmem:[%s5 + $0x318] sm:$0xff] %vm1976, %v5919
  %6438 = vst.msk [vmem:[%s5 + $0x320] sm:$0xff] %vm1976, %v5924
  %6439 = vst.msk [vmem:[%s5 + $0x328] sm:$0xff] %vm1976, %v5929
  %6440 = vst.msk [vmem:[%s5 + $0x330] sm:$0xff] %vm1976, %v5934
  %6441 = vst.msk [vmem:[%s5 + $0x338] sm:$0xff] %vm1976, %v5939
  %6442 = vst.msk [vmem:[%s5 + $0x340] sm:$0xff] %vm1976, %v6036
  %6443 = vst.msk [vmem:[%s5 + $0x348] sm:$0xff] %vm1976, %v6041
  %6444 = vst.msk [vmem:[%s5 + $0x350] sm:$0xff] %vm1976, %v6046
  %6445 = vst.msk [vmem:[%s5 + $0x358] sm:$0xff] %vm1976, %v6051
  %6446 = vst.msk [vmem:[%s5 + $0x360] sm:$0xff] %vm1976, %v6056
  %6447 = vst.msk [vmem:[%s5 + $0x368] sm:$0xff] %vm1976, %v6061
  %6448 = vst.msk [vmem:[%s5 + $0x370] sm:$0xff] %vm1976, %v6066
  %6449 = vst.msk [vmem:[%s5 + $0x378] sm:$0xff] %vm1976, %v6071
  %6450 = vst.msk [vmem:[%s5 + $0x380] sm:$0xff] %vm1976, %v6168
  %6451 = vst.msk [vmem:[%s5 + $0x388] sm:$0xff] %vm1976, %v6173
  %6452 = vst.msk [vmem:[%s5 + $0x390] sm:$0xff] %vm1976, %v6178
  %6453 = vst.msk [vmem:[%s5 + $0x398] sm:$0xff] %vm1976, %v6183
  %6454 = vst.msk [vmem:[%s5 + $0x3a0] sm:$0xff] %vm1976, %v6188
  %6455 = vst.msk [vmem:[%s5 + $0x3a8] sm:$0xff] %vm1976, %v6193
  %6456 = vst.msk [vmem:[%s5 + $0x3b0] sm:$0xff] %vm1976, %v6198
  %6457 = vst.msk [vmem:[%s5 + $0x3b8] sm:$0xff] %vm1976, %v6203
  %6458 = vst.msk [vmem:[%s5 + $0x3c0] sm:$0xff] %vm1976, %v6300
  %6459 = vst.msk [vmem:[%s5 + $0x3c8] sm:$0xff] %vm1976, %v6305
  %6460 = vst.msk [vmem:[%s5 + $0x3d0] sm:$0xff] %vm1976, %v6310
  %6461 = vst.msk [vmem:[%s5 + $0x3d8] sm:$0xff] %vm1976, %v6315
  %6462 = vst.msk [vmem:[%s5 + $0x3e0] sm:$0xff] %vm1976, %v6320
  %6463 = vst.msk [vmem:[%s5 + $0x3e8] sm:$0xff] %vm1976, %v6325
  %6464 = vst.msk [vmem:[%s5 + $0x3f0] sm:$0xff] %vm1976, %v6330
  %6465 = vst.msk [vmem:[%s5 + $0x3f8] sm:$0xff] %vm1976, %v6335
  // Predicated region
  $region22: #{vit_spatial_forward.1} parent=0 // pred_check
    _
  $region23: #{vit_spatial_forward.1} parent=0 // pred_check_branch
    %6467 = sbr.rel (0) target = $region25
  $region24: #{vit_spatial_forward.1} parent=0 // pred_region
    _
  $region25: #{vit_spatial_forward.1} parent=0 // pred_fallthru
    _
  // Predicated region
  $region26: #{vit_spatial_forward.1} parent=0 // pred_check
    _
  $region27: #{vit_spatial_forward.1} parent=0 // pred_check_branch
    %6469 = sbr.rel (0) target = $region29
  $region28: #{vit_spatial_forward.1} parent=0 // pred_region
    _
  $region29: #{vit_spatial_forward.1} parent=0 // pred_fallthru
    _

</llo_original>
